<compile_context>
chip_gen: v5e
topology: v5e:2x2
jax: 0.10.0
libtpu: 0.0.40
codegen_flags: <defaults>
</compile_context>

<pallas_src>
import functools

import jax
import jax.numpy as jnp
from jax import lax
from jax.experimental import pallas as pl
from jax.experimental.pallas import tpu as pltpu


def _round_up(v, m):
    return (v + m - 1) // m * m


# --------------------------------------------------------------------------
# Fused kernel: attention map + rescale for one image (grid = (N,))
# --------------------------------------------------------------------------
def _sa_kernel(x_ref, rmask_ref, cmask_ref,
               w1_ref, b1_ref, w2_ref, b2_ref, w3_ref, b3_ref,
               v1_ref, v2_ref, v3_ref, beff_ref,
               o_ref,
               xpad_sc,
               *, C, H, W, Wp, P_ext, L2, base, q0):
    # x_ref    : (C, H*W)       one image, channels on sublanes
    # masks    : (1, P_ext)     1.0 inside the true image (rows / cols)
    # w*_ref   : (Crp, K*Cp)    im2col first-conv weights (tap-major)
    # b*_ref   : (Crp, 1)       first-conv biases
    # v*_ref   : (1, K*Crp)     second-conv weights pre-scaled by the 1x1 conv
    # beff_ref : (1, 1)         folded bias (second convs + 1x1 conv)
    # o_ref    : (C, H*W)       fused output  x * sigmoid(att)
    # xpad_sc  : (Cp, B1)       zero-padded, flattened image (rows of width Wp)

    # ---- assemble the padded, flattened image in VMEM (no HBM pad) --------
    xpad_sc[...] = jnp.zeros_like(xpad_sc)
    for h in range(H):
        dst = (h + 6) * Wp + 3
        xpad_sc[:C, dst:dst + W] = x_ref[:, h * W:(h + 1) * W]

    rmask = rmask_ref[...]
    cmask = cmask_ref[...]

    # static tap offsets in the flattened padded layout
    offs_w = [dw - 3 for dw in range(7)]                        # (1,7) taps
    offs_h = [(dh - 3) * Wp for dh in range(7)]                 # (7,1) taps
    offs_33 = [(kh - 1) * Wp + (kw - 1)                         # 3x3 taps
               for kh in range(3) for kw in range(3)]
    offs_d33 = [2 * (kh - 1) * Wp + 2 * (kw - 1)                # 3x3, dil 2
                for kh in range(3) for kw in range(3)]

    def first_conv(w_ref, b_ref, offsets):
        # im2col slab (K*Cp, P_ext): tap accumulation happens inside the MXU.
        slab = jnp.concatenate(
            [xpad_sc[:, base + off: base + off + P_ext] for off in offsets],
            axis=0)
        acc = jnp.dot(w_ref[...], slab, preferred_element_type=jnp.float32)
        return jnp.maximum(acc + b_ref[...], 0.0)               # (Crp, P_ext)

    def second_conv(t, v_ref, offsets):
        # stacked taps (K*Crp, L2) -> one lane-dense (1, L2) MXU matmul.
        slab = jnp.concatenate(
            [t[:, q0 + off: q0 + off + L2] for off in offsets], axis=0)
        return jnp.dot(v_ref[...], slab, preferred_element_type=jnp.float32)

    # branch 1: (1,7) conv -> ReLU -> (7,1) conv   (mask == its zero padding)
    t = first_conv(w1_ref, b1_ref, offs_w) * rmask
    att = second_conv(t, v1_ref, offs_h)
    # branch 2: (7,1) conv -> ReLU -> (1,7) conv
    t = first_conv(w2_ref, b2_ref, offs_h) * cmask
    att = att + second_conv(t, v2_ref, offs_w)
    # branch 3: 3x3 conv -> ReLU -> dilated 3x3 conv
    t = first_conv(w3_ref, b3_ref, offs_33) * (rmask * cmask)
    att = att + second_conv(t, v3_ref, offs_d33)

    sa = jax.nn.sigmoid(att + beff_ref[...])                    # (1, L2)

    # ---- fused rescale: out = x * sa (skip the Wp - W garbage lanes) ------
    for h in range(H):
        src = h * Wp
        o_ref[:, h * W:(h + 1) * W] = (
            x_ref[:, h * W:(h + 1) * W] * sa[:, src:src + W]
        ).astype(o_ref.dtype)


# --------------------------------------------------------------------------
# Wrapper
# --------------------------------------------------------------------------
def sa_layer(x, w11, b11, w12, b12, w21, b21, w22, b22,
             w31, b31, w32, b32, wA, bA):
    """Forward pass of SALayer.  x: (N, C, H, W) float32."""
    N, C, H, W = x.shape
    Cr = w11.shape[0]                     # channels // 2
    Wp = W + 6                            # width padded by 3 on each side
    P_ext = (H + 7) * Wp                  # rows [-3, H+4) of the padded grid
    B1 = (H + 13) * Wp                    # rows [-6, H+7) (margin for taps)
    L2 = H * Wp                           # attention strip length
    base = 3 * Wp                         # flat offset of padded row -3
    q0 = 3 * Wp + 3                       # flat offset of true pixel (0, 0)
    HW = H * W

    # pad channel counts to sublane multiples so all concats are tile-aligned
    Cp = _round_up(C, 8)
    Crp = _round_up(Cr, 8)

    # masks selecting true-image rows / columns inside the P_ext strip
    pos = jnp.arange(P_ext, dtype=jnp.int32)
    rows = pos // Wp
    cols = pos % Wp
    rmask = ((rows >= 3) & (rows < 3 + H)).astype(jnp.float32).reshape(1, P_ext)
    cmask = ((cols >= 3) & (cols < 3 + W)).astype(jnp.float32).reshape(1, P_ext)

    def first_w(w, k):                    # (Cr, C, kh, kw) -> (Crp, k*Cp)
        w = w.reshape(Cr, C, k)           # taps flattened row-major
        w = jnp.transpose(w, (0, 2, 1))   # (Cr, k, C)
        w = jnp.pad(w, ((0, Crp - Cr), (0, 0), (0, Cp - C)))
        return w.reshape(Crp, k * Cp)

    W1f = first_w(w11, 7)                 # (1,7) taps
    W2f = first_w(w21, 7)                 # (7,1) taps
    W3f = first_w(w31, 9)                 # 3x3 taps
    b1c = jnp.pad(b11, (0, Crp - Cr)).reshape(Crp, 1)
    b2c = jnp.pad(b21, (0, Crp - Cr)).reshape(Crp, 1)
    b3c = jnp.pad(b31, (0, Crp - Cr)).reshape(Crp, 1)

    # second convs folded with the 1x1 conv:  att = sum_i wa_i * a_i + bA
    wa = wA.reshape(3)

    def second_v(w, scale, k):            # (1, Cr, kh, kw) -> (1, k*Crp)
        v = scale * jnp.transpose(w.reshape(Cr, k))   # (k, Cr)
        v = jnp.pad(v, ((0, 0), (0, Crp - Cr)))
        return v.reshape(1, k * Crp)

    V1f = second_v(w12, wa[0], 7)
    V2f = second_v(w22, wa[1], 7)
    V3f = second_v(w32, wa[2], 9)
    beff = (wa[0] * b12[0] + wa[1] * b22[0] + wa[2] * b32[0]
            + bA[0]).reshape(1, 1)

    x_flat = x.reshape(N, C, HW)          # contiguous -> free bitcast

    kernel = functools.partial(_sa_kernel, C=C, H=H, W=W, Wp=Wp,
                               P_ext=P_ext, L2=L2, base=base, q0=q0)

    itemsize = jnp.dtype(x.dtype).itemsize
    cost = pl.CostEstimate(
        flops=2 * N * Crp * P_ext * 23 * Cp + 2 * N * L2 * 23 * Crp + N * C * HW,
        transcendentals=N * L2,
        bytes_accessed=2 * N * C * HW * itemsize)

    out_flat = pl.pallas_call(
        kernel,
        out_shape=jax.ShapeDtypeStruct((N, C, HW), x.dtype),
        grid_spec=pltpu.PrefetchScalarGridSpec(
            num_scalar_prefetch=0,
            grid=(N,),
            in_specs=[
                pl.BlockSpec((None, C, HW), lambda n: (n, 0, 0)),   # x
                pl.BlockSpec((1, P_ext), lambda n: (0, 0)),         # rmask
                pl.BlockSpec((1, P_ext), lambda n: (0, 0)),         # cmask
                pl.BlockSpec((Crp, 7 * Cp), lambda n: (0, 0)),      # W1
                pl.BlockSpec((Crp, 1), lambda n: (0, 0)),           # b1
                pl.BlockSpec((Crp, 7 * Cp), lambda n: (0, 0)),      # W2
                pl.BlockSpec((Crp, 1), lambda n: (0, 0)),           # b2
                pl.BlockSpec((Crp, 9 * Cp), lambda n: (0, 0)),      # W3
                pl.BlockSpec((Crp, 1), lambda n: (0, 0)),           # b3
                pl.BlockSpec((1, 7 * Crp), lambda n: (0, 0)),       # V1
                pl.BlockSpec((1, 7 * Crp), lambda n: (0, 0)),       # V2
                pl.BlockSpec((1, 9 * Crp), lambda n: (0, 0)),       # V3
                pl.BlockSpec((1, 1), lambda n: (0, 0)),             # beff
            ],
            out_specs=pl.BlockSpec((None, C, HW), lambda n: (n, 0, 0)),
            scratch_shapes=[pltpu.VMEM((Cp, B1), jnp.float32)],
        ),
        compiler_params=pltpu.CompilerParams(
            dimension_semantics=("parallel",),
            vmem_limit_bytes=64 * 1024 * 1024),
        cost_estimate=cost,
    )(x_flat, rmask, cmask, W1f, b1c, W2f, b2c, W3f, b3c, V1f, V2f, V3f, beff)

    return out_flat.reshape(N, C, H, W)


# --------------------------------------------------------------------------
# Pure-JAX reference (matches the PyTorch forward)
# --------------------------------------------------------------------------
def sa_layer_ref(x, w11, b11, w12, b12, w21, b21, w22, b22,
                 w31, b31, w32, b32, wA, bA):
    def conv(inp, w, b, pad, dil=(1, 1)):
        out = lax.conv_general_dilated(
            inp, w, window_strides=(1, 1), padding=pad, rhs_dilation=dil,
            dimension_numbers=('NCHW', 'OIHW', 'NCHW'))
        return out + b.reshape(1, -1, 1, 1)

    relu = lambda v: jnp.maximum(v, 0.0)
    a1 = conv(relu(conv(x, w11, b11, ((0, 0), (3, 3)))), w12, b12, ((3, 3), (0, 0)))
    a2 = conv(relu(conv(x, w21, b21, ((3, 3), (0, 0)))), w22, b22, ((0, 0), (3, 3)))
    a3 = conv(relu(conv(x, w31, b31, ((1, 1), (1, 1)))), w32, b32,
              ((2, 2), (2, 2)), dil=(2, 2))
    att = conv(jnp.concatenate([a1, a2, a3], axis=1), wA, bA, ((0, 0), (0, 0)))
    return x * jax.nn.sigmoid(att)


if __name__ == "__main__":
    N, C, H, W = 2, 8, 16, 16
    Cr = C // 2

    key = jax.random.PRNGKey(0)
    keys = jax.random.split(key, 15)

    def rnd(k, shape, scale=0.1):
        return jax.random.normal(k, shape, dtype=jnp.float32) * scale

    x = jax.random.normal(keys[0], (N, C, H, W), dtype=jnp.float32)
    w11 = rnd(keys[1], (Cr, C, 1, 7)); b11 = rnd(keys[2], (Cr,))
    w12 = rnd(keys[3], (1, Cr, 7, 1)); b12 = rnd(keys[4], (1,))
    w21 = rnd(keys[5], (Cr, C, 7, 1)); b21 = rnd(keys[6], (Cr,))
    w22 = rnd(keys[7], (1, Cr, 1, 7)); b22 = rnd(keys[8], (1,))
    w31 = rnd(keys[9], (Cr, C, 3, 3)); b31 = rnd(keys[10], (Cr,))
    w32 = rnd(keys[11], (1, Cr, 3, 3)); b32 = rnd(keys[12], (1,))
    wA = rnd(keys[13], (1, 3, 1, 1));  bA = rnd(keys[14], (1,))
    params = (w11, b11, w12, b12, w21, b21, w22, b22,
              w31, b31, w32, b32, wA, bA)

    sa_fn = jax.jit(sa_layer)
    out = jax.block_until_ready(sa_fn(x, *params))
    ref = sa_layer_ref(x, *params)

    assert out.shape == (N, C, H, W)
    err = float(jnp.max(jnp.abs(out - ref)))
    assert jnp.allclose(out, ref, atol=1e-4, rtol=1e-4), f"max abs err = {err}"
    print("KERNEL_OK")
</pallas_src>

<mosaic_0001>
module attributes {stable_mosaic.version = 11 : i64} {
  func.func @_sa_kernel(%arg0: i32, %arg1: memref<1x8x256xf32, #tpu.memory_space<vmem>>, %arg2: memref<1x506xf32, #tpu.memory_space<vmem>>, %arg3: memref<1x506xf32, #tpu.memory_space<vmem>>, %arg4: memref<8x56xf32, #tpu.memory_space<vmem>>, %arg5: memref<8x1xf32, #tpu.memory_space<vmem>>, %arg6: memref<8x56xf32, #tpu.memory_space<vmem>>, %arg7: memref<8x1xf32, #tpu.memory_space<vmem>>, %arg8: memref<8x72xf32, #tpu.memory_space<vmem>>, %arg9: memref<8x1xf32, #tpu.memory_space<vmem>>, %arg10: memref<1x56xf32, #tpu.memory_space<vmem>>, %arg11: memref<1x56xf32, #tpu.memory_space<vmem>>, %arg12: memref<1x72xf32, #tpu.memory_space<vmem>>, %arg13: memref<1x1xf32, #tpu.memory_space<vmem>>, %arg14: memref<1x8x256xf32, #tpu.memory_space<vmem>>, %arg15: memref<8x638xf32, #tpu.memory_space<vmem>>) attributes {dimension_semantics = [#tpu.dimension_semantics<parallel>], iteration_bounds = array<i64: 2>, scalar_prefetch = 0 : i64, scratch_operands = 1 : i64, tpu.core_type = #tpu.core_type<tc>, window_params = [{transform_indices = @transform_0, window_bounds = array<i64: 1, 8, 256>}, {pipeline_mode = #tpu.pipeline_mode<synchronous>, transform_indices = @transform_1, window_bounds = array<i64: 1, 506>}, {pipeline_mode = #tpu.pipeline_mode<synchronous>, transform_indices = @transform_2, window_bounds = array<i64: 1, 506>}, {pipeline_mode = #tpu.pipeline_mode<synchronous>, transform_indices = @transform_3, window_bounds = array<i64: 8, 56>}, {pipeline_mode = #tpu.pipeline_mode<synchronous>, transform_indices = @transform_4, window_bounds = array<i64: 8, 1>}, {pipeline_mode = #tpu.pipeline_mode<synchronous>, transform_indices = @transform_5, window_bounds = array<i64: 8, 56>}, {pipeline_mode = #tpu.pipeline_mode<synchronous>, transform_indices = @transform_6, window_bounds = array<i64: 8, 1>}, {pipeline_mode = #tpu.pipeline_mode<synchronous>, transform_indices = @transform_7, window_bounds = array<i64: 8, 72>}, {pipeline_mode = #tpu.pipeline_mode<synchronous>, transform_indices = @transform_8, window_bounds = array<i64: 8, 1>}, {pipeline_mode = #tpu.pipeline_mode<synchronous>, transform_indices = @transform_9, window_bounds = array<i64: 1, 56>}, {pipeline_mode = #tpu.pipeline_mode<synchronous>, transform_indices = @transform_10, window_bounds = array<i64: 1, 56>}, {pipeline_mode = #tpu.pipeline_mode<synchronous>, transform_indices = @transform_11, window_bounds = array<i64: 1, 72>}, {pipeline_mode = #tpu.pipeline_mode<synchronous>, transform_indices = @transform_12, window_bounds = array<i64: 1, 1>}, {transform_indices = @transform_13, window_bounds = array<i64: 1, 8, 256>}]} {
    %cst = arith.constant 0.000000e+00 : f32
    %0 = vector.broadcast %cst : f32 to vector<8x638xf32>
    %c0 = arith.constant 0 : index
    %c0_0 = arith.constant 0 : index
    %1 = vector.load %arg15[%c0, %c0_0] : memref<8x638xf32, #tpu.memory_space<vmem>>, vector<8x638xf32>
    tpu.vector_store %arg15[%c0, %c0_0], %0 {strides = array<i32>} : memref<8x638xf32, #tpu.memory_space<vmem>>, vector<8x638xf32>,
    %c0_1 = arith.constant 0 : index
    %c0_2 = arith.constant 0 : index
    %c0_3 = arith.constant 0 : index
    %2 = vector.load %arg1[%c0_1, %c0_2, %c0_3] : memref<1x8x256xf32, #tpu.memory_space<vmem>>, vector<1x8x16xf32>
    %3 = vector.shape_cast %2 : vector<1x8x16xf32> to vector<8x16xf32>
    %c0_4 = arith.constant 0 : index
    %c135 = arith.constant 135 : index
    %4 = vector.load %arg15[%c0_4, %c135] : memref<8x638xf32, #tpu.memory_space<vmem>>, vector<8x16xf32>
    tpu.vector_store %arg15[%c0_4, %c135], %3 {strides = array<i32>} : memref<8x638xf32, #tpu.memory_space<vmem>>, vector<8x16xf32>,
    %c0_5 = arith.constant 0 : index
    %c0_6 = arith.constant 0 : index
    %c16 = arith.constant 16 : index
    %5 = vector.load %arg1[%c0_5, %c0_6, %c16] : memref<1x8x256xf32, #tpu.memory_space<vmem>>, vector<1x8x16xf32>
    %6 = vector.shape_cast %5 : vector<1x8x16xf32> to vector<8x16xf32>
    %c0_7 = arith.constant 0 : index
    %c157 = arith.constant 157 : index
    %7 = vector.load %arg15[%c0_7, %c157] : memref<8x638xf32, #tpu.memory_space<vmem>>, vector<8x16xf32>
    tpu.vector_store %arg15[%c0_7, %c157], %6 {strides = array<i32>} : memref<8x638xf32, #tpu.memory_space<vmem>>, vector<8x16xf32>,
    %c0_8 = arith.constant 0 : index
    %c0_9 = arith.constant 0 : index
    %c32 = arith.constant 32 : index
    %8 = vector.load %arg1[%c0_8, %c0_9, %c32] : memref<1x8x256xf32, #tpu.memory_space<vmem>>, vector<1x8x16xf32>
    %9 = vector.shape_cast %8 : vector<1x8x16xf32> to vector<8x16xf32>
    %c0_10 = arith.constant 0 : index
    %c179 = arith.constant 179 : index
    %10 = vector.load %arg15[%c0_10, %c179] : memref<8x638xf32, #tpu.memory_space<vmem>>, vector<8x16xf32>
    tpu.vector_store %arg15[%c0_10, %c179], %9 {strides = array<i32>} : memref<8x638xf32, #tpu.memory_space<vmem>>, vector<8x16xf32>,
    %c0_11 = arith.constant 0 : index
    %c0_12 = arith.constant 0 : index
    %c48 = arith.constant 48 : index
    %11 = vector.load %arg1[%c0_11, %c0_12, %c48] : memref<1x8x256xf32, #tpu.memory_space<vmem>>, vector<1x8x16xf32>
    %12 = vector.shape_cast %11 : vector<1x8x16xf32> to vector<8x16xf32>
    %c0_13 = arith.constant 0 : index
    %c201 = arith.constant 201 : index
    %13 = vector.load %arg15[%c0_13, %c201] : memref<8x638xf32, #tpu.memory_space<vmem>>, vector<8x16xf32>
    tpu.vector_store %arg15[%c0_13, %c201], %12 {strides = array<i32>} : memref<8x638xf32, #tpu.memory_space<vmem>>, vector<8x16xf32>,
    %c0_14 = arith.constant 0 : index
    %c0_15 = arith.constant 0 : index
    %c64 = arith.constant 64 : index
    %14 = vector.load %arg1[%c0_14, %c0_15, %c64] : memref<1x8x256xf32, #tpu.memory_space<vmem>>, vector<1x8x16xf32>
    %15 = vector.shape_cast %14 : vector<1x8x16xf32> to vector<8x16xf32>
    %c0_16 = arith.constant 0 : index
    %c223 = arith.constant 223 : index
    %16 = vector.load %arg15[%c0_16, %c223] : memref<8x638xf32, #tpu.memory_space<vmem>>, vector<8x16xf32>
    tpu.vector_store %arg15[%c0_16, %c223], %15 {strides = array<i32>} : memref<8x638xf32, #tpu.memory_space<vmem>>, vector<8x16xf32>,
    %c0_17 = arith.constant 0 : index
    %c0_18 = arith.constant 0 : index
    %c80 = arith.constant 80 : index
    %17 = vector.load %arg1[%c0_17, %c0_18, %c80] : memref<1x8x256xf32, #tpu.memory_space<vmem>>, vector<1x8x16xf32>
    %18 = vector.shape_cast %17 : vector<1x8x16xf32> to vector<8x16xf32>
    %c0_19 = arith.constant 0 : index
    %c245 = arith.constant 245 : index
    %19 = vector.load %arg15[%c0_19, %c245] : memref<8x638xf32, #tpu.memory_space<vmem>>, vector<8x16xf32>
    tpu.vector_store %arg15[%c0_19, %c245], %18 {strides = array<i32>} : memref<8x638xf32, #tpu.memory_space<vmem>>, vector<8x16xf32>,
    %c0_20 = arith.constant 0 : index
    %c0_21 = arith.constant 0 : index
    %c96 = arith.constant 96 : index
    %20 = vector.load %arg1[%c0_20, %c0_21, %c96] : memref<1x8x256xf32, #tpu.memory_space<vmem>>, vector<1x8x16xf32>
    %21 = vector.shape_cast %20 : vector<1x8x16xf32> to vector<8x16xf32>
    %c0_22 = arith.constant 0 : index
    %c267 = arith.constant 267 : index
    %22 = vector.load %arg15[%c0_22, %c267] : memref<8x638xf32, #tpu.memory_space<vmem>>, vector<8x16xf32>
    tpu.vector_store %arg15[%c0_22, %c267], %21 {strides = array<i32>} : memref<8x638xf32, #tpu.memory_space<vmem>>, vector<8x16xf32>,
    %c0_23 = arith.constant 0 : index
    %c0_24 = arith.constant 0 : index
    %c112 = arith.constant 112 : index
    %23 = vector.load %arg1[%c0_23, %c0_24, %c112] : memref<1x8x256xf32, #tpu.memory_space<vmem>>, vector<1x8x16xf32>
    %24 = vector.shape_cast %23 : vector<1x8x16xf32> to vector<8x16xf32>
    %c0_25 = arith.constant 0 : index
    %c289 = arith.constant 289 : index
    %25 = vector.load %arg15[%c0_25, %c289] : memref<8x638xf32, #tpu.memory_space<vmem>>, vector<8x16xf32>
    tpu.vector_store %arg15[%c0_25, %c289], %24 {strides = array<i32>} : memref<8x638xf32, #tpu.memory_space<vmem>>, vector<8x16xf32>,
    %c0_26 = arith.constant 0 : index
    %c0_27 = arith.constant 0 : index
    %c128 = arith.constant 128 : index
    %26 = vector.load %arg1[%c0_26, %c0_27, %c128] : memref<1x8x256xf32, #tpu.memory_space<vmem>>, vector<1x8x16xf32>
    %27 = vector.shape_cast %26 : vector<1x8x16xf32> to vector<8x16xf32>
    %c0_28 = arith.constant 0 : index
    %c311 = arith.constant 311 : index
    %28 = vector.load %arg15[%c0_28, %c311] : memref<8x638xf32, #tpu.memory_space<vmem>>, vector<8x16xf32>
    tpu.vector_store %arg15[%c0_28, %c311], %27 {strides = array<i32>} : memref<8x638xf32, #tpu.memory_space<vmem>>, vector<8x16xf32>,
    %c0_29 = arith.constant 0 : index
    %c0_30 = arith.constant 0 : index
    %c144 = arith.constant 144 : index
    %29 = vector.load %arg1[%c0_29, %c0_30, %c144] : memref<1x8x256xf32, #tpu.memory_space<vmem>>, vector<1x8x16xf32>
    %30 = vector.shape_cast %29 : vector<1x8x16xf32> to vector<8x16xf32>
    %c0_31 = arith.constant 0 : index
    %c333 = arith.constant 333 : index
    %31 = vector.load %arg15[%c0_31, %c333] : memref<8x638xf32, #tpu.memory_space<vmem>>, vector<8x16xf32>
    tpu.vector_store %arg15[%c0_31, %c333], %30 {strides = array<i32>} : memref<8x638xf32, #tpu.memory_space<vmem>>, vector<8x16xf32>,
    %c0_32 = arith.constant 0 : index
    %c0_33 = arith.constant 0 : index
    %c160 = arith.constant 160 : index
    %32 = vector.load %arg1[%c0_32, %c0_33, %c160] : memref<1x8x256xf32, #tpu.memory_space<vmem>>, vector<1x8x16xf32>
    %33 = vector.shape_cast %32 : vector<1x8x16xf32> to vector<8x16xf32>
    %c0_34 = arith.constant 0 : index
    %c355 = arith.constant 355 : index
    %34 = vector.load %arg15[%c0_34, %c355] : memref<8x638xf32, #tpu.memory_space<vmem>>, vector<8x16xf32>
    tpu.vector_store %arg15[%c0_34, %c355], %33 {strides = array<i32>} : memref<8x638xf32, #tpu.memory_space<vmem>>, vector<8x16xf32>,
    %c0_35 = arith.constant 0 : index
    %c0_36 = arith.constant 0 : index
    %c176 = arith.constant 176 : index
    %35 = vector.load %arg1[%c0_35, %c0_36, %c176] : memref<1x8x256xf32, #tpu.memory_space<vmem>>, vector<1x8x16xf32>
    %36 = vector.shape_cast %35 : vector<1x8x16xf32> to vector<8x16xf32>
    %c0_37 = arith.constant 0 : index
    %c377 = arith.constant 377 : index
    %37 = vector.load %arg15[%c0_37, %c377] : memref<8x638xf32, #tpu.memory_space<vmem>>, vector<8x16xf32>
    tpu.vector_store %arg15[%c0_37, %c377], %36 {strides = array<i32>} : memref<8x638xf32, #tpu.memory_space<vmem>>, vector<8x16xf32>,
    %c0_38 = arith.constant 0 : index
    %c0_39 = arith.constant 0 : index
    %c192 = arith.constant 192 : index
    %38 = vector.load %arg1[%c0_38, %c0_39, %c192] : memref<1x8x256xf32, #tpu.memory_space<vmem>>, vector<1x8x16xf32>
    %39 = vector.shape_cast %38 : vector<1x8x16xf32> to vector<8x16xf32>
    %c0_40 = arith.constant 0 : index
    %c399 = arith.constant 399 : index
    %40 = vector.load %arg15[%c0_40, %c399] : memref<8x638xf32, #tpu.memory_space<vmem>>, vector<8x16xf32>
    tpu.vector_store %arg15[%c0_40, %c399], %39 {strides = array<i32>} : memref<8x638xf32, #tpu.memory_space<vmem>>, vector<8x16xf32>,
    %c0_41 = arith.constant 0 : index
    %c0_42 = arith.constant 0 : index
    %c208 = arith.constant 208 : index
    %41 = vector.load %arg1[%c0_41, %c0_42, %c208] : memref<1x8x256xf32, #tpu.memory_space<vmem>>, vector<1x8x16xf32>
    %42 = vector.shape_cast %41 : vector<1x8x16xf32> to vector<8x16xf32>
    %c0_43 = arith.constant 0 : index
    %c421 = arith.constant 421 : index
    %43 = vector.load %arg15[%c0_43, %c421] : memref<8x638xf32, #tpu.memory_space<vmem>>, vector<8x16xf32>
    tpu.vector_store %arg15[%c0_43, %c421], %42 {strides = array<i32>} : memref<8x638xf32, #tpu.memory_space<vmem>>, vector<8x16xf32>,
    %c0_44 = arith.constant 0 : index
    %c0_45 = arith.constant 0 : index
    %c224 = arith.constant 224 : index
    %44 = vector.load %arg1[%c0_44, %c0_45, %c224] : memref<1x8x256xf32, #tpu.memory_space<vmem>>, vector<1x8x16xf32>
    %45 = vector.shape_cast %44 : vector<1x8x16xf32> to vector<8x16xf32>
    %c0_46 = arith.constant 0 : index
    %c443 = arith.constant 443 : index
    %46 = vector.load %arg15[%c0_46, %c443] : memref<8x638xf32, #tpu.memory_space<vmem>>, vector<8x16xf32>
    tpu.vector_store %arg15[%c0_46, %c443], %45 {strides = array<i32>} : memref<8x638xf32, #tpu.memory_space<vmem>>, vector<8x16xf32>,
    %c0_47 = arith.constant 0 : index
    %c0_48 = arith.constant 0 : index
    %c240 = arith.constant 240 : index
    %47 = vector.load %arg1[%c0_47, %c0_48, %c240] : memref<1x8x256xf32, #tpu.memory_space<vmem>>, vector<1x8x16xf32>
    %48 = vector.shape_cast %47 : vector<1x8x16xf32> to vector<8x16xf32>
    %c0_49 = arith.constant 0 : index
    %c465 = arith.constant 465 : index
    %49 = vector.load %arg15[%c0_49, %c465] : memref<8x638xf32, #tpu.memory_space<vmem>>, vector<8x16xf32>
    tpu.vector_store %arg15[%c0_49, %c465], %48 {strides = array<i32>} : memref<8x638xf32, #tpu.memory_space<vmem>>, vector<8x16xf32>,
    %c0_50 = arith.constant 0 : index
    %c0_51 = arith.constant 0 : index
    %50 = vector.load %arg2[%c0_50, %c0_51] : memref<1x506xf32, #tpu.memory_space<vmem>>, vector<1x506xf32>
    %c0_52 = arith.constant 0 : index
    %c0_53 = arith.constant 0 : index
    %51 = vector.load %arg3[%c0_52, %c0_53] : memref<1x506xf32, #tpu.memory_space<vmem>>, vector<1x506xf32>
    %c0_54 = arith.constant 0 : index
    %c63 = arith.constant 63 : index
    %52 = vector.load %arg15[%c0_54, %c63] : memref<8x638xf32, #tpu.memory_space<vmem>>, vector<8x506xf32>
    %c0_55 = arith.constant 0 : index
    %c64_56 = arith.constant 64 : index
    %53 = vector.load %arg15[%c0_55, %c64_56] : memref<8x638xf32, #tpu.memory_space<vmem>>, vector<8x506xf32>
    %c0_57 = arith.constant 0 : index
    %c65 = arith.constant 65 : index
    %54 = vector.load %arg15[%c0_57, %c65] : memref<8x638xf32, #tpu.memory_space<vmem>>, vector<8x506xf32>
    %c0_58 = arith.constant 0 : index
    %c66 = arith.constant 66 : index
    %55 = vector.load %arg15[%c0_58, %c66] : memref<8x638xf32, #tpu.memory_space<vmem>>, vector<8x506xf32>
    %c0_59 = arith.constant 0 : index
    %c67 = arith.constant 67 : index
    %56 = vector.load %arg15[%c0_59, %c67] : memref<8x638xf32, #tpu.memory_space<vmem>>, vector<8x506xf32>
    %c0_60 = arith.constant 0 : index
    %c68 = arith.constant 68 : index
    %57 = vector.load %arg15[%c0_60, %c68] : memref<8x638xf32, #tpu.memory_space<vmem>>, vector<8x506xf32>
    %c0_61 = arith.constant 0 : index
    %c69 = arith.constant 69 : index
    %58 = vector.load %arg15[%c0_61, %c69] : memref<8x638xf32, #tpu.memory_space<vmem>>, vector<8x506xf32>
    %59 = tpu.concatenate %52, %53, %54, %55, %56, %57, %58 in 0 : vector<8x506xf32>, vector<8x506xf32>, vector<8x506xf32>, vector<8x506xf32>, vector<8x506xf32>, vector<8x506xf32>, vector<8x506xf32> -> vector<56x506xf32>
    %c0_62 = arith.constant 0 : index
    %c0_63 = arith.constant 0 : index
    %60 = vector.load %arg4[%c0_62, %c0_63] : memref<8x56xf32, #tpu.memory_space<vmem>>, vector<8x56xf32>
    %cst_64 = arith.constant dense<0.000000e+00> : vector<8x506xf32>
    %61 = tpu.matmul %60, %59, %cst_64 {dimension_numbers = #tpu.dot_dimension_numbers<[1], [0], [0], [1], [0, 0, 1, 1], [], []>} : vector<8x56xf32>, vector<56x506xf32>, vector<8x506xf32> -> vector<8x506xf32>
    %c0_65 = arith.constant 0 : index
    %c0_66 = arith.constant 0 : index
    %62 = vector.load %arg5[%c0_65, %c0_66] : memref<8x1xf32, #tpu.memory_space<vmem>>, vector<8x1xf32>
    %63 = vector.broadcast %62 : vector<8x1xf32> to vector<8x506xf32>
    %64 = arith.addf %61, %63 : vector<8x506xf32>
    %cst_67 = arith.constant 0.000000e+00 : f32
    %65 = vector.broadcast %cst_67 : f32 to vector<8x506xf32>
    %66 = arith.maximumf %64, %65 : vector<8x506xf32>
    %67 = vector.broadcast %50 : vector<1x506xf32> to vector<8x506xf32>
    %68 = arith.mulf %66, %67 : vector<8x506xf32>
    %69 = vector.extract_strided_slice %68 {offsets = [0, 3], sizes = [8, 352], strides = [1, 1]} : vector<8x506xf32> to vector<8x352xf32>
    %70 = vector.extract_strided_slice %68 {offsets = [0, 25], sizes = [8, 352], strides = [1, 1]} : vector<8x506xf32> to vector<8x352xf32>
    %71 = vector.extract_strided_slice %68 {offsets = [0, 47], sizes = [8, 352], strides = [1, 1]} : vector<8x506xf32> to vector<8x352xf32>
    %72 = vector.extract_strided_slice %68 {offsets = [0, 69], sizes = [8, 352], strides = [1, 1]} : vector<8x506xf32> to vector<8x352xf32>
    %73 = vector.extract_strided_slice %68 {offsets = [0, 91], sizes = [8, 352], strides = [1, 1]} : vector<8x506xf32> to vector<8x352xf32>
    %74 = vector.extract_strided_slice %68 {offsets = [0, 113], sizes = [8, 352], strides = [1, 1]} : vector<8x506xf32> to vector<8x352xf32>
    %75 = vector.extract_strided_slice %68 {offsets = [0, 135], sizes = [8, 352], strides = [1, 1]} : vector<8x506xf32> to vector<8x352xf32>
    %76 = tpu.concatenate %69, %70, %71, %72, %73, %74, %75 in 0 : vector<8x352xf32>, vector<8x352xf32>, vector<8x352xf32>, vector<8x352xf32>, vector<8x352xf32>, vector<8x352xf32>, vector<8x352xf32> -> vector<56x352xf32>
    %c0_68 = arith.constant 0 : index
    %c0_69 = arith.constant 0 : index
    %77 = vector.load %arg10[%c0_68, %c0_69] : memref<1x56xf32, #tpu.memory_space<vmem>>, vector<1x56xf32>
    %cst_70 = arith.constant dense<0.000000e+00> : vector<1x352xf32>
    %78 = tpu.matmul %77, %76, %cst_70 {dimension_numbers = #tpu.dot_dimension_numbers<[1], [0], [0], [1], [0, 0, 1, 1], [], []>} : vector<1x56xf32>, vector<56x352xf32>, vector<1x352xf32> -> vector<1x352xf32>
    %c0_71 = arith.constant 0 : index
    %c0_72 = arith.constant 0 : index
    %79 = vector.load %arg15[%c0_71, %c0_72] : memref<8x638xf32, #tpu.memory_space<vmem>>, vector<8x506xf32>
    %c0_73 = arith.constant 0 : index
    %c22 = arith.constant 22 : index
    %80 = vector.load %arg15[%c0_73, %c22] : memref<8x638xf32, #tpu.memory_space<vmem>>, vector<8x506xf32>
    %c0_74 = arith.constant 0 : index
    %c44 = arith.constant 44 : index
    %81 = vector.load %arg15[%c0_74, %c44] : memref<8x638xf32, #tpu.memory_space<vmem>>, vector<8x506xf32>
    %c0_75 = arith.constant 0 : index
    %c66_76 = arith.constant 66 : index
    %82 = vector.load %arg15[%c0_75, %c66_76] : memref<8x638xf32, #tpu.memory_space<vmem>>, vector<8x506xf32>
    %c0_77 = arith.constant 0 : index
    %c88 = arith.constant 88 : index
    %83 = vector.load %arg15[%c0_77, %c88] : memref<8x638xf32, #tpu.memory_space<vmem>>, vector<8x506xf32>
    %c0_78 = arith.constant 0 : index
    %c110 = arith.constant 110 : index
    %84 = vector.load %arg15[%c0_78, %c110] : memref<8x638xf32, #tpu.memory_space<vmem>>, vector<8x506xf32>
    %c0_79 = arith.constant 0 : index
    %c132 = arith.constant 132 : index
    %85 = vector.load %arg15[%c0_79, %c132] : memref<8x638xf32, #tpu.memory_space<vmem>>, vector<8x506xf32>
    %86 = tpu.concatenate %79, %80, %81, %82, %83, %84, %85 in 0 : vector<8x506xf32>, vector<8x506xf32>, vector<8x506xf32>, vector<8x506xf32>, vector<8x506xf32>, vector<8x506xf32>, vector<8x506xf32> -> vector<56x506xf32>
    %c0_80 = arith.constant 0 : index
    %c0_81 = arith.constant 0 : index
    %87 = vector.load %arg6[%c0_80, %c0_81] : memref<8x56xf32, #tpu.memory_space<vmem>>, vector<8x56xf32>
    %cst_82 = arith.constant dense<0.000000e+00> : vector<8x506xf32>
    %88 = tpu.matmul %87, %86, %cst_82 {dimension_numbers = #tpu.dot_dimension_numbers<[1], [0], [0], [1], [0, 0, 1, 1], [], []>} : vector<8x56xf32>, vector<56x506xf32>, vector<8x506xf32> -> vector<8x506xf32>
    %c0_83 = arith.constant 0 : index
    %c0_84 = arith.constant 0 : index
    %89 = vector.load %arg7[%c0_83, %c0_84] : memref<8x1xf32, #tpu.memory_space<vmem>>, vector<8x1xf32>
    %90 = vector.broadcast %89 : vector<8x1xf32> to vector<8x506xf32>
    %91 = arith.addf %88, %90 : vector<8x506xf32>
    %cst_85 = arith.constant 0.000000e+00 : f32
    %92 = vector.broadcast %cst_85 : f32 to vector<8x506xf32>
    %93 = arith.maximumf %91, %92 : vector<8x506xf32>
    %94 = vector.broadcast %51 : vector<1x506xf32> to vector<8x506xf32>
    %95 = arith.mulf %93, %94 : vector<8x506xf32>
    %96 = vector.extract_strided_slice %95 {offsets = [0, 66], sizes = [8, 352], strides = [1, 1]} : vector<8x506xf32> to vector<8x352xf32>
    %97 = vector.extract_strided_slice %95 {offsets = [0, 67], sizes = [8, 352], strides = [1, 1]} : vector<8x506xf32> to vector<8x352xf32>
    %98 = vector.extract_strided_slice %95 {offsets = [0, 68], sizes = [8, 352], strides = [1, 1]} : vector<8x506xf32> to vector<8x352xf32>
    %99 = vector.extract_strided_slice %95 {offsets = [0, 69], sizes = [8, 352], strides = [1, 1]} : vector<8x506xf32> to vector<8x352xf32>
    %100 = vector.extract_strided_slice %95 {offsets = [0, 70], sizes = [8, 352], strides = [1, 1]} : vector<8x506xf32> to vector<8x352xf32>
    %101 = vector.extract_strided_slice %95 {offsets = [0, 71], sizes = [8, 352], strides = [1, 1]} : vector<8x506xf32> to vector<8x352xf32>
    %102 = vector.extract_strided_slice %95 {offsets = [0, 72], sizes = [8, 352], strides = [1, 1]} : vector<8x506xf32> to vector<8x352xf32>
    %103 = tpu.concatenate %96, %97, %98, %99, %100, %101, %102 in 0 : vector<8x352xf32>, vector<8x352xf32>, vector<8x352xf32>, vector<8x352xf32>, vector<8x352xf32>, vector<8x352xf32>, vector<8x352xf32> -> vector<56x352xf32>
    %c0_86 = arith.constant 0 : index
    %c0_87 = arith.constant 0 : index
    %104 = vector.load %arg11[%c0_86, %c0_87] : memref<1x56xf32, #tpu.memory_space<vmem>>, vector<1x56xf32>
    %cst_88 = arith.constant dense<0.000000e+00> : vector<1x352xf32>
    %105 = tpu.matmul %104, %103, %cst_88 {dimension_numbers = #tpu.dot_dimension_numbers<[1], [0], [0], [1], [0, 0, 1, 1], [], []>} : vector<1x56xf32>, vector<56x352xf32>, vector<1x352xf32> -> vector<1x352xf32>
    %106 = arith.addf %78, %105 : vector<1x352xf32>
    %c0_89 = arith.constant 0 : index
    %c43 = arith.constant 43 : index
    %107 = vector.load %arg15[%c0_89, %c43] : memref<8x638xf32, #tpu.memory_space<vmem>>, vector<8x506xf32>
    %c0_90 = arith.constant 0 : index
    %c44_91 = arith.constant 44 : index
    %108 = vector.load %arg15[%c0_90, %c44_91] : memref<8x638xf32, #tpu.memory_space<vmem>>, vector<8x506xf32>
    %c0_92 = arith.constant 0 : index
    %c45 = arith.constant 45 : index
    %109 = vector.load %arg15[%c0_92, %c45] : memref<8x638xf32, #tpu.memory_space<vmem>>, vector<8x506xf32>
    %c0_93 = arith.constant 0 : index
    %c65_94 = arith.constant 65 : index
    %110 = vector.load %arg15[%c0_93, %c65_94] : memref<8x638xf32, #tpu.memory_space<vmem>>, vector<8x506xf32>
    %c0_95 = arith.constant 0 : index
    %c66_96 = arith.constant 66 : index
    %111 = vector.load %arg15[%c0_95, %c66_96] : memref<8x638xf32, #tpu.memory_space<vmem>>, vector<8x506xf32>
    %c0_97 = arith.constant 0 : index
    %c67_98 = arith.constant 67 : index
    %112 = vector.load %arg15[%c0_97, %c67_98] : memref<8x638xf32, #tpu.memory_space<vmem>>, vector<8x506xf32>
    %c0_99 = arith.constant 0 : index
    %c87 = arith.constant 87 : index
    %113 = vector.load %arg15[%c0_99, %c87] : memref<8x638xf32, #tpu.memory_space<vmem>>, vector<8x506xf32>
    %c0_100 = arith.constant 0 : index
    %c88_101 = arith.constant 88 : index
    %114 = vector.load %arg15[%c0_100, %c88_101] : memref<8x638xf32, #tpu.memory_space<vmem>>, vector<8x506xf32>
    %c0_102 = arith.constant 0 : index
    %c89 = arith.constant 89 : index
    %115 = vector.load %arg15[%c0_102, %c89] : memref<8x638xf32, #tpu.memory_space<vmem>>, vector<8x506xf32>
    %116 = tpu.concatenate %107, %108, %109, %110, %111, %112, %113, %114, %115 in 0 : vector<8x506xf32>, vector<8x506xf32>, vector<8x506xf32>, vector<8x506xf32>, vector<8x506xf32>, vector<8x506xf32>, vector<8x506xf32>, vector<8x506xf32>, vector<8x506xf32> -> vector<72x506xf32>
    %c0_103 = arith.constant 0 : index
    %c0_104 = arith.constant 0 : index
    %117 = vector.load %arg8[%c0_103, %c0_104] : memref<8x72xf32, #tpu.memory_space<vmem>>, vector<8x72xf32>
    %cst_105 = arith.constant dense<0.000000e+00> : vector<8x506xf32>
    %118 = tpu.matmul %117, %116, %cst_105 {dimension_numbers = #tpu.dot_dimension_numbers<[1], [0], [0], [1], [0, 0, 1, 1], [], []>} : vector<8x72xf32>, vector<72x506xf32>, vector<8x506xf32> -> vector<8x506xf32>
    %c0_106 = arith.constant 0 : index
    %c0_107 = arith.constant 0 : index
    %119 = vector.load %arg9[%c0_106, %c0_107] : memref<8x1xf32, #tpu.memory_space<vmem>>, vector<8x1xf32>
    %120 = vector.broadcast %119 : vector<8x1xf32> to vector<8x506xf32>
    %121 = arith.addf %118, %120 : vector<8x506xf32>
    %cst_108 = arith.constant 0.000000e+00 : f32
    %122 = vector.broadcast %cst_108 : f32 to vector<8x506xf32>
    %123 = arith.maximumf %121, %122 : vector<8x506xf32>
    %124 = arith.mulf %50, %51 : vector<1x506xf32>
    %125 = vector.broadcast %124 : vector<1x506xf32> to vector<8x506xf32>
    %126 = arith.mulf %123, %125 : vector<8x506xf32>
    %127 = vector.extract_strided_slice %126 {offsets = [0, 23], sizes = [8, 352], strides = [1, 1]} : vector<8x506xf32> to vector<8x352xf32>
    %128 = vector.extract_strided_slice %126 {offsets = [0, 25], sizes = [8, 352], strides = [1, 1]} : vector<8x506xf32> to vector<8x352xf32>
    %129 = vector.extract_strided_slice %126 {offsets = [0, 27], sizes = [8, 352], strides = [1, 1]} : vector<8x506xf32> to vector<8x352xf32>
    %130 = vector.extract_strided_slice %126 {offsets = [0, 67], sizes = [8, 352], strides = [1, 1]} : vector<8x506xf32> to vector<8x352xf32>
    %131 = vector.extract_strided_slice %126 {offsets = [0, 69], sizes = [8, 352], strides = [1, 1]} : vector<8x506xf32> to vector<8x352xf32>
    %132 = vector.extract_strided_slice %126 {offsets = [0, 71], sizes = [8, 352], strides = [1, 1]} : vector<8x506xf32> to vector<8x352xf32>
    %133 = vector.extract_strided_slice %126 {offsets = [0, 111], sizes = [8, 352], strides = [1, 1]} : vector<8x506xf32> to vector<8x352xf32>
    %134 = vector.extract_strided_slice %126 {offsets = [0, 113], sizes = [8, 352], strides = [1, 1]} : vector<8x506xf32> to vector<8x352xf32>
    %135 = vector.extract_strided_slice %126 {offsets = [0, 115], sizes = [8, 352], strides = [1, 1]} : vector<8x506xf32> to vector<8x352xf32>
    %136 = tpu.concatenate %127, %128, %129, %130, %131, %132, %133, %134, %135 in 0 : vector<8x352xf32>, vector<8x352xf32>, vector<8x352xf32>, vector<8x352xf32>, vector<8x352xf32>, vector<8x352xf32>, vector<8x352xf32>, vector<8x352xf32>, vector<8x352xf32> -> vector<72x352xf32>
    %c0_109 = arith.constant 0 : index
    %c0_110 = arith.constant 0 : index
    %137 = vector.load %arg12[%c0_109, %c0_110] : memref<1x72xf32, #tpu.memory_space<vmem>>, vector<1x72xf32>
    %cst_111 = arith.constant dense<0.000000e+00> : vector<1x352xf32>
    %138 = tpu.matmul %137, %136, %cst_111 {dimension_numbers = #tpu.dot_dimension_numbers<[1], [0], [0], [1], [0, 0, 1, 1], [], []>} : vector<1x72xf32>, vector<72x352xf32>, vector<1x352xf32> -> vector<1x352xf32>
    %139 = arith.addf %106, %138 : vector<1x352xf32>
    %c0_112 = arith.constant 0 : index
    %c0_113 = arith.constant 0 : index
    %140 = vector.load %arg13[%c0_112, %c0_113] : memref<1x1xf32, #tpu.memory_space<vmem>>, vector<1x1xf32>
    %141 = vector.broadcast %140 : vector<1x1xf32> to vector<1x352xf32>
    %142 = arith.addf %139, %141 : vector<1x352xf32>
    %143 = arith.negf %142 : vector<1x352xf32>
    %144 = math.exp %143 : vector<1x352xf32>
    %cst_114 = arith.constant 1.000000e+00 : f32
    %145 = vector.broadcast %cst_114 : f32 to vector<1x352xf32>
    %146 = arith.addf %145, %144 : vector<1x352xf32>
    %147 = arith.divf %145, %146 : vector<1x352xf32>
    %c0_115 = arith.constant 0 : index
    %c0_116 = arith.constant 0 : index
    %c0_117 = arith.constant 0 : index
    %148 = vector.load %arg1[%c0_115, %c0_116, %c0_117] : memref<1x8x256xf32, #tpu.memory_space<vmem>>, vector<1x8x16xf32>
    %149 = vector.shape_cast %148 : vector<1x8x16xf32> to vector<8x16xf32>
    %150 = vector.extract_strided_slice %147 {offsets = [0, 0], sizes = [1, 16], strides = [1, 1]} : vector<1x352xf32> to vector<1x16xf32>
    %151 = vector.broadcast %150 : vector<1x16xf32> to vector<8x16xf32>
    %152 = arith.mulf %149, %151 : vector<8x16xf32>
    %c0_118 = arith.constant 0 : index
    %c0_119 = arith.constant 0 : index
    %c0_120 = arith.constant 0 : index
    %153 = vector.load %arg14[%c0_118, %c0_119, %c0_120] : memref<1x8x256xf32, #tpu.memory_space<vmem>>, vector<1x8x16xf32>
    %154 = vector.shape_cast %153 : vector<1x8x16xf32> to vector<8x16xf32>
    %155 = vector.shape_cast %152 : vector<8x16xf32> to vector<1x8x16xf32>
    tpu.vector_store %arg14[%c0_118, %c0_119, %c0_120], %155 {strides = array<i32>} : memref<1x8x256xf32, #tpu.memory_space<vmem>>, vector<1x8x16xf32>,
    %c0_121 = arith.constant 0 : index
    %c0_122 = arith.constant 0 : index
    %c16_123 = arith.constant 16 : index
    %156 = vector.load %arg1[%c0_121, %c0_122, %c16_123] : memref<1x8x256xf32, #tpu.memory_space<vmem>>, vector<1x8x16xf32>
    %157 = vector.shape_cast %156 : vector<1x8x16xf32> to vector<8x16xf32>
    %158 = vector.extract_strided_slice %147 {offsets = [0, 22], sizes = [1, 16], strides = [1, 1]} : vector<1x352xf32> to vector<1x16xf32>
    %159 = vector.broadcast %158 : vector<1x16xf32> to vector<8x16xf32>
    %160 = arith.mulf %157, %159 : vector<8x16xf32>
    %c0_124 = arith.constant 0 : index
    %c0_125 = arith.constant 0 : index
    %c16_126 = arith.constant 16 : index
    %161 = vector.load %arg14[%c0_124, %c0_125, %c16_126] : memref<1x8x256xf32, #tpu.memory_space<vmem>>, vector<1x8x16xf32>
    %162 = vector.shape_cast %161 : vector<1x8x16xf32> to vector<8x16xf32>
    %163 = vector.shape_cast %160 : vector<8x16xf32> to vector<1x8x16xf32>
    tpu.vector_store %arg14[%c0_124, %c0_125, %c16_126], %163 {strides = array<i32>} : memref<1x8x256xf32, #tpu.memory_space<vmem>>, vector<1x8x16xf32>,
    %c0_127 = arith.constant 0 : index
    %c0_128 = arith.constant 0 : index
    %c32_129 = arith.constant 32 : index
    %164 = vector.load %arg1[%c0_127, %c0_128, %c32_129] : memref<1x8x256xf32, #tpu.memory_space<vmem>>, vector<1x8x16xf32>
    %165 = vector.shape_cast %164 : vector<1x8x16xf32> to vector<8x16xf32>
    %166 = vector.extract_strided_slice %147 {offsets = [0, 44], sizes = [1, 16], strides = [1, 1]} : vector<1x352xf32> to vector<1x16xf32>
    %167 = vector.broadcast %166 : vector<1x16xf32> to vector<8x16xf32>
    %168 = arith.mulf %165, %167 : vector<8x16xf32>
    %c0_130 = arith.constant 0 : index
    %c0_131 = arith.constant 0 : index
    %c32_132 = arith.constant 32 : index
    %169 = vector.load %arg14[%c0_130, %c0_131, %c32_132] : memref<1x8x256xf32, #tpu.memory_space<vmem>>, vector<1x8x16xf32>
    %170 = vector.shape_cast %169 : vector<1x8x16xf32> to vector<8x16xf32>
    %171 = vector.shape_cast %168 : vector<8x16xf32> to vector<1x8x16xf32>
    tpu.vector_store %arg14[%c0_130, %c0_131, %c32_132], %171 {strides = array<i32>} : memref<1x8x256xf32, #tpu.memory_space<vmem>>, vector<1x8x16xf32>,
    %c0_133 = arith.constant 0 : index
    %c0_134 = arith.constant 0 : index
    %c48_135 = arith.constant 48 : index
    %172 = vector.load %arg1[%c0_133, %c0_134, %c48_135] : memref<1x8x256xf32, #tpu.memory_space<vmem>>, vector<1x8x16xf32>
    %173 = vector.shape_cast %172 : vector<1x8x16xf32> to vector<8x16xf32>
    %174 = vector.extract_strided_slice %147 {offsets = [0, 66], sizes = [1, 16], strides = [1, 1]} : vector<1x352xf32> to vector<1x16xf32>
    %175 = vector.broadcast %174 : vector<1x16xf32> to vector<8x16xf32>
    %176 = arith.mulf %173, %175 : vector<8x16xf32>
    %c0_136 = arith.constant 0 : index
    %c0_137 = arith.constant 0 : index
    %c48_138 = arith.constant 48 : index
    %177 = vector.load %arg14[%c0_136, %c0_137, %c48_138] : memref<1x8x256xf32, #tpu.memory_space<vmem>>, vector<1x8x16xf32>
    %178 = vector.shape_cast %177 : vector<1x8x16xf32> to vector<8x16xf32>
    %179 = vector.shape_cast %176 : vector<8x16xf32> to vector<1x8x16xf32>
    tpu.vector_store %arg14[%c0_136, %c0_137, %c48_138], %179 {strides = array<i32>} : memref<1x8x256xf32, #tpu.memory_space<vmem>>, vector<1x8x16xf32>,
    %c0_139 = arith.constant 0 : index
    %c0_140 = arith.constant 0 : index
    %c64_141 = arith.constant 64 : index
    %180 = vector.load %arg1[%c0_139, %c0_140, %c64_141] : memref<1x8x256xf32, #tpu.memory_space<vmem>>, vector<1x8x16xf32>
    %181 = vector.shape_cast %180 : vector<1x8x16xf32> to vector<8x16xf32>
    %182 = vector.extract_strided_slice %147 {offsets = [0, 88], sizes = [1, 16], strides = [1, 1]} : vector<1x352xf32> to vector<1x16xf32>
    %183 = vector.broadcast %182 : vector<1x16xf32> to vector<8x16xf32>
    %184 = arith.mulf %181, %183 : vector<8x16xf32>
    %c0_142 = arith.constant 0 : index
    %c0_143 = arith.constant 0 : index
    %c64_144 = arith.constant 64 : index
    %185 = vector.load %arg14[%c0_142, %c0_143, %c64_144] : memref<1x8x256xf32, #tpu.memory_space<vmem>>, vector<1x8x16xf32>
    %186 = vector.shape_cast %185 : vector<1x8x16xf32> to vector<8x16xf32>
    %187 = vector.shape_cast %184 : vector<8x16xf32> to vector<1x8x16xf32>
    tpu.vector_store %arg14[%c0_142, %c0_143, %c64_144], %187 {strides = array<i32>} : memref<1x8x256xf32, #tpu.memory_space<vmem>>, vector<1x8x16xf32>,
    %c0_145 = arith.constant 0 : index
    %c0_146 = arith.constant 0 : index
    %c80_147 = arith.constant 80 : index
    %188 = vector.load %arg1[%c0_145, %c0_146, %c80_147] : memref<1x8x256xf32, #tpu.memory_space<vmem>>, vector<1x8x16xf32>
    %189 = vector.shape_cast %188 : vector<1x8x16xf32> to vector<8x16xf32>
    %190 = vector.extract_strided_slice %147 {offsets = [0, 110], sizes = [1, 16], strides = [1, 1]} : vector<1x352xf32> to vector<1x16xf32>
    %191 = vector.broadcast %190 : vector<1x16xf32> to vector<8x16xf32>
    %192 = arith.mulf %189, %191 : vector<8x16xf32>
    %c0_148 = arith.constant 0 : index
    %c0_149 = arith.constant 0 : index
    %c80_150 = arith.constant 80 : index
    %193 = vector.load %arg14[%c0_148, %c0_149, %c80_150] : memref<1x8x256xf32, #tpu.memory_space<vmem>>, vector<1x8x16xf32>
    %194 = vector.shape_cast %193 : vector<1x8x16xf32> to vector<8x16xf32>
    %195 = vector.shape_cast %192 : vector<8x16xf32> to vector<1x8x16xf32>
    tpu.vector_store %arg14[%c0_148, %c0_149, %c80_150], %195 {strides = array<i32>} : memref<1x8x256xf32, #tpu.memory_space<vmem>>, vector<1x8x16xf32>,
    %c0_151 = arith.constant 0 : index
    %c0_152 = arith.constant 0 : index
    %c96_153 = arith.constant 96 : index
    %196 = vector.load %arg1[%c0_151, %c0_152, %c96_153] : memref<1x8x256xf32, #tpu.memory_space<vmem>>, vector<1x8x16xf32>
    %197 = vector.shape_cast %196 : vector<1x8x16xf32> to vector<8x16xf32>
    %198 = vector.extract_strided_slice %147 {offsets = [0, 132], sizes = [1, 16], strides = [1, 1]} : vector<1x352xf32> to vector<1x16xf32>
    %199 = vector.broadcast %198 : vector<1x16xf32> to vector<8x16xf32>
    %200 = arith.mulf %197, %199 : vector<8x16xf32>
    %c0_154 = arith.constant 0 : index
    %c0_155 = arith.constant 0 : index
    %c96_156 = arith.constant 96 : index
    %201 = vector.load %arg14[%c0_154, %c0_155, %c96_156] : memref<1x8x256xf32, #tpu.memory_space<vmem>>, vector<1x8x16xf32>
    %202 = vector.shape_cast %201 : vector<1x8x16xf32> to vector<8x16xf32>
    %203 = vector.shape_cast %200 : vector<8x16xf32> to vector<1x8x16xf32>
    tpu.vector_store %arg14[%c0_154, %c0_155, %c96_156], %203 {strides = array<i32>} : memref<1x8x256xf32, #tpu.memory_space<vmem>>, vector<1x8x16xf32>,
    %c0_157 = arith.constant 0 : index
    %c0_158 = arith.constant 0 : index
    %c112_159 = arith.constant 112 : index
    %204 = vector.load %arg1[%c0_157, %c0_158, %c112_159] : memref<1x8x256xf32, #tpu.memory_space<vmem>>, vector<1x8x16xf32>
    %205 = vector.shape_cast %204 : vector<1x8x16xf32> to vector<8x16xf32>
    %206 = vector.extract_strided_slice %147 {offsets = [0, 154], sizes = [1, 16], strides = [1, 1]} : vector<1x352xf32> to vector<1x16xf32>
    %207 = vector.broadcast %206 : vector<1x16xf32> to vector<8x16xf32>
    %208 = arith.mulf %205, %207 : vector<8x16xf32>
    %c0_160 = arith.constant 0 : index
    %c0_161 = arith.constant 0 : index
    %c112_162 = arith.constant 112 : index
    %209 = vector.load %arg14[%c0_160, %c0_161, %c112_162] : memref<1x8x256xf32, #tpu.memory_space<vmem>>, vector<1x8x16xf32>
    %210 = vector.shape_cast %209 : vector<1x8x16xf32> to vector<8x16xf32>
    %211 = vector.shape_cast %208 : vector<8x16xf32> to vector<1x8x16xf32>
    tpu.vector_store %arg14[%c0_160, %c0_161, %c112_162], %211 {strides = array<i32>} : memref<1x8x256xf32, #tpu.memory_space<vmem>>, vector<1x8x16xf32>,
    %c0_163 = arith.constant 0 : index
    %c0_164 = arith.constant 0 : index
    %c128_165 = arith.constant 128 : index
    %212 = vector.load %arg1[%c0_163, %c0_164, %c128_165] : memref<1x8x256xf32, #tpu.memory_space<vmem>>, vector<1x8x16xf32>
    %213 = vector.shape_cast %212 : vector<1x8x16xf32> to vector<8x16xf32>
    %214 = vector.extract_strided_slice %147 {offsets = [0, 176], sizes = [1, 16], strides = [1, 1]} : vector<1x352xf32> to vector<1x16xf32>
    %215 = vector.broadcast %214 : vector<1x16xf32> to vector<8x16xf32>
    %216 = arith.mulf %213, %215 : vector<8x16xf32>
    %c0_166 = arith.constant 0 : index
    %c0_167 = arith.constant 0 : index
    %c128_168 = arith.constant 128 : index
    %217 = vector.load %arg14[%c0_166, %c0_167, %c128_168] : memref<1x8x256xf32, #tpu.memory_space<vmem>>, vector<1x8x16xf32>
    %218 = vector.shape_cast %217 : vector<1x8x16xf32> to vector<8x16xf32>
    %219 = vector.shape_cast %216 : vector<8x16xf32> to vector<1x8x16xf32>
    tpu.vector_store %arg14[%c0_166, %c0_167, %c128_168], %219 {strides = array<i32>} : memref<1x8x256xf32, #tpu.memory_space<vmem>>, vector<1x8x16xf32>,
    %c0_169 = arith.constant 0 : index
    %c0_170 = arith.constant 0 : index
    %c144_171 = arith.constant 144 : index
    %220 = vector.load %arg1[%c0_169, %c0_170, %c144_171] : memref<1x8x256xf32, #tpu.memory_space<vmem>>, vector<1x8x16xf32>
    %221 = vector.shape_cast %220 : vector<1x8x16xf32> to vector<8x16xf32>
    %222 = vector.extract_strided_slice %147 {offsets = [0, 198], sizes = [1, 16], strides = [1, 1]} : vector<1x352xf32> to vector<1x16xf32>
    %223 = vector.broadcast %222 : vector<1x16xf32> to vector<8x16xf32>
    %224 = arith.mulf %221, %223 : vector<8x16xf32>
    %c0_172 = arith.constant 0 : index
    %c0_173 = arith.constant 0 : index
    %c144_174 = arith.constant 144 : index
    %225 = vector.load %arg14[%c0_172, %c0_173, %c144_174] : memref<1x8x256xf32, #tpu.memory_space<vmem>>, vector<1x8x16xf32>
    %226 = vector.shape_cast %225 : vector<1x8x16xf32> to vector<8x16xf32>
    %227 = vector.shape_cast %224 : vector<8x16xf32> to vector<1x8x16xf32>
    tpu.vector_store %arg14[%c0_172, %c0_173, %c144_174], %227 {strides = array<i32>} : memref<1x8x256xf32, #tpu.memory_space<vmem>>, vector<1x8x16xf32>,
    %c0_175 = arith.constant 0 : index
    %c0_176 = arith.constant 0 : index
    %c160_177 = arith.constant 160 : index
    %228 = vector.load %arg1[%c0_175, %c0_176, %c160_177] : memref<1x8x256xf32, #tpu.memory_space<vmem>>, vector<1x8x16xf32>
    %229 = vector.shape_cast %228 : vector<1x8x16xf32> to vector<8x16xf32>
    %230 = vector.extract_strided_slice %147 {offsets = [0, 220], sizes = [1, 16], strides = [1, 1]} : vector<1x352xf32> to vector<1x16xf32>
    %231 = vector.broadcast %230 : vector<1x16xf32> to vector<8x16xf32>
    %232 = arith.mulf %229, %231 : vector<8x16xf32>
    %c0_178 = arith.constant 0 : index
    %c0_179 = arith.constant 0 : index
    %c160_180 = arith.constant 160 : index
    %233 = vector.load %arg14[%c0_178, %c0_179, %c160_180] : memref<1x8x256xf32, #tpu.memory_space<vmem>>, vector<1x8x16xf32>
    %234 = vector.shape_cast %233 : vector<1x8x16xf32> to vector<8x16xf32>
    %235 = vector.shape_cast %232 : vector<8x16xf32> to vector<1x8x16xf32>
    tpu.vector_store %arg14[%c0_178, %c0_179, %c160_180], %235 {strides = array<i32>} : memref<1x8x256xf32, #tpu.memory_space<vmem>>, vector<1x8x16xf32>,
    %c0_181 = arith.constant 0 : index
    %c0_182 = arith.constant 0 : index
    %c176_183 = arith.constant 176 : index
    %236 = vector.load %arg1[%c0_181, %c0_182, %c176_183] : memref<1x8x256xf32, #tpu.memory_space<vmem>>, vector<1x8x16xf32>
    %237 = vector.shape_cast %236 : vector<1x8x16xf32> to vector<8x16xf32>
    %238 = vector.extract_strided_slice %147 {offsets = [0, 242], sizes = [1, 16], strides = [1, 1]} : vector<1x352xf32> to vector<1x16xf32>
    %239 = vector.broadcast %238 : vector<1x16xf32> to vector<8x16xf32>
    %240 = arith.mulf %237, %239 : vector<8x16xf32>
    %c0_184 = arith.constant 0 : index
    %c0_185 = arith.constant 0 : index
    %c176_186 = arith.constant 176 : index
    %241 = vector.load %arg14[%c0_184, %c0_185, %c176_186] : memref<1x8x256xf32, #tpu.memory_space<vmem>>, vector<1x8x16xf32>
    %242 = vector.shape_cast %241 : vector<1x8x16xf32> to vector<8x16xf32>
    %243 = vector.shape_cast %240 : vector<8x16xf32> to vector<1x8x16xf32>
    tpu.vector_store %arg14[%c0_184, %c0_185, %c176_186], %243 {strides = array<i32>} : memref<1x8x256xf32, #tpu.memory_space<vmem>>, vector<1x8x16xf32>,
    %c0_187 = arith.constant 0 : index
    %c0_188 = arith.constant 0 : index
    %c192_189 = arith.constant 192 : index
    %244 = vector.load %arg1[%c0_187, %c0_188, %c192_189] : memref<1x8x256xf32, #tpu.memory_space<vmem>>, vector<1x8x16xf32>
    %245 = vector.shape_cast %244 : vector<1x8x16xf32> to vector<8x16xf32>
    %246 = vector.extract_strided_slice %147 {offsets = [0, 264], sizes = [1, 16], strides = [1, 1]} : vector<1x352xf32> to vector<1x16xf32>
    %247 = vector.broadcast %246 : vector<1x16xf32> to vector<8x16xf32>
    %248 = arith.mulf %245, %247 : vector<8x16xf32>
    %c0_190 = arith.constant 0 : index
    %c0_191 = arith.constant 0 : index
    %c192_192 = arith.constant 192 : index
    %249 = vector.load %arg14[%c0_190, %c0_191, %c192_192] : memref<1x8x256xf32, #tpu.memory_space<vmem>>, vector<1x8x16xf32>
    %250 = vector.shape_cast %249 : vector<1x8x16xf32> to vector<8x16xf32>
    %251 = vector.shape_cast %248 : vector<8x16xf32> to vector<1x8x16xf32>
    tpu.vector_store %arg14[%c0_190, %c0_191, %c192_192], %251 {strides = array<i32>} : memref<1x8x256xf32, #tpu.memory_space<vmem>>, vector<1x8x16xf32>,
    %c0_193 = arith.constant 0 : index
    %c0_194 = arith.constant 0 : index
    %c208_195 = arith.constant 208 : index
    %252 = vector.load %arg1[%c0_193, %c0_194, %c208_195] : memref<1x8x256xf32, #tpu.memory_space<vmem>>, vector<1x8x16xf32>
    %253 = vector.shape_cast %252 : vector<1x8x16xf32> to vector<8x16xf32>
    %254 = vector.extract_strided_slice %147 {offsets = [0, 286], sizes = [1, 16], strides = [1, 1]} : vector<1x352xf32> to vector<1x16xf32>
    %255 = vector.broadcast %254 : vector<1x16xf32> to vector<8x16xf32>
    %256 = arith.mulf %253, %255 : vector<8x16xf32>
    %c0_196 = arith.constant 0 : index
    %c0_197 = arith.constant 0 : index
    %c208_198 = arith.constant 208 : index
    %257 = vector.load %arg14[%c0_196, %c0_197, %c208_198] : memref<1x8x256xf32, #tpu.memory_space<vmem>>, vector<1x8x16xf32>
    %258 = vector.shape_cast %257 : vector<1x8x16xf32> to vector<8x16xf32>
    %259 = vector.shape_cast %256 : vector<8x16xf32> to vector<1x8x16xf32>
    tpu.vector_store %arg14[%c0_196, %c0_197, %c208_198], %259 {strides = array<i32>} : memref<1x8x256xf32, #tpu.memory_space<vmem>>, vector<1x8x16xf32>,
    %c0_199 = arith.constant 0 : index
    %c0_200 = arith.constant 0 : index
    %c224_201 = arith.constant 224 : index
    %260 = vector.load %arg1[%c0_199, %c0_200, %c224_201] : memref<1x8x256xf32, #tpu.memory_space<vmem>>, vector<1x8x16xf32>
    %261 = vector.shape_cast %260 : vector<1x8x16xf32> to vector<8x16xf32>
    %262 = vector.extract_strided_slice %147 {offsets = [0, 308], sizes = [1, 16], strides = [1, 1]} : vector<1x352xf32> to vector<1x16xf32>
    %263 = vector.broadcast %262 : vector<1x16xf32> to vector<8x16xf32>
    %264 = arith.mulf %261, %263 : vector<8x16xf32>
    %c0_202 = arith.constant 0 : index
    %c0_203 = arith.constant 0 : index
    %c224_204 = arith.constant 224 : index
    %265 = vector.load %arg14[%c0_202, %c0_203, %c224_204] : memref<1x8x256xf32, #tpu.memory_space<vmem>>, vector<1x8x16xf32>
    %266 = vector.shape_cast %265 : vector<1x8x16xf32> to vector<8x16xf32>
    %267 = vector.shape_cast %264 : vector<8x16xf32> to vector<1x8x16xf32>
    tpu.vector_store %arg14[%c0_202, %c0_203, %c224_204], %267 {strides = array<i32>} : memref<1x8x256xf32, #tpu.memory_space<vmem>>, vector<1x8x16xf32>,
    %c0_205 = arith.constant 0 : index
    %c0_206 = arith.constant 0 : index
    %c240_207 = arith.constant 240 : index
    %268 = vector.load %arg1[%c0_205, %c0_206, %c240_207] : memref<1x8x256xf32, #tpu.memory_space<vmem>>, vector<1x8x16xf32>
    %269 = vector.shape_cast %268 : vector<1x8x16xf32> to vector<8x16xf32>
    %270 = vector.extract_strided_slice %147 {offsets = [0, 330], sizes = [1, 16], strides = [1, 1]} : vector<1x352xf32> to vector<1x16xf32>
    %271 = vector.broadcast %270 : vector<1x16xf32> to vector<8x16xf32>
    %272 = arith.mulf %269, %271 : vector<8x16xf32>
    %c0_208 = arith.constant 0 : index
    %c0_209 = arith.constant 0 : index
    %c240_210 = arith.constant 240 : index
    %273 = vector.load %arg14[%c0_208, %c0_209, %c240_210] : memref<1x8x256xf32, #tpu.memory_space<vmem>>, vector<1x8x16xf32>
    %274 = vector.shape_cast %273 : vector<1x8x16xf32> to vector<8x16xf32>
    %275 = vector.shape_cast %272 : vector<8x16xf32> to vector<1x8x16xf32>
    tpu.vector_store %arg14[%c0_208, %c0_209, %c240_210], %275 {strides = array<i32>} : memref<1x8x256xf32, #tpu.memory_space<vmem>>, vector<1x8x16xf32>,
    return
  }
  func.func @transform_0(%arg0: i32) -> (i32, i32, i32) {
    %c0_i32 = arith.constant 0 : i32
    %c0_i32_0 = arith.constant 0 : i32
    %c0_i32_1 = arith.constant 0 : i32
    return %arg0, %c0_i32, %c0_i32_0 : i32, i32, i32
  }
  func.func @transform_1(%arg0: i32) -> (i32, i32) {
    %c0_i32 = arith.constant 0 : i32
    %c0_i32_0 = arith.constant 0 : i32
    %c0_i32_1 = arith.constant 0 : i32
    return %c0_i32, %c0_i32_0 : i32, i32
  }
  func.func @transform_2(%arg0: i32) -> (i32, i32) {
    %c0_i32 = arith.constant 0 : i32
    %c0_i32_0 = arith.constant 0 : i32
    %c0_i32_1 = arith.constant 0 : i32
    return %c0_i32, %c0_i32_0 : i32, i32
  }
  func.func @transform_3(%arg0: i32) -> (i32, i32) {
    %c0_i32 = arith.constant 0 : i32
    %c0_i32_0 = arith.constant 0 : i32
    %c0_i32_1 = arith.constant 0 : i32
    return %c0_i32, %c0_i32_0 : i32, i32
  }
  func.func @transform_4(%arg0: i32) -> (i32, i32) {
    %c0_i32 = arith.constant 0 : i32
    %c0_i32_0 = arith.constant 0 : i32
    %c0_i32_1 = arith.constant 0 : i32
    return %c0_i32, %c0_i32_0 : i32, i32
  }
  func.func @transform_5(%arg0: i32) -> (i32, i32) {
    %c0_i32 = arith.constant 0 : i32
    %c0_i32_0 = arith.constant 0 : i32
    %c0_i32_1 = arith.constant 0 : i32
    return %c0_i32, %c0_i32_0 : i32, i32
  }
  func.func @transform_6(%arg0: i32) -> (i32, i32) {
    %c0_i32 = arith.constant 0 : i32
    %c0_i32_0 = arith.constant 0 : i32
    %c0_i32_1 = arith.constant 0 : i32
    return %c0_i32, %c0_i32_0 : i32, i32
  }
  func.func @transform_7(%arg0: i32) -> (i32, i32) {
    %c0_i32 = arith.constant 0 : i32
    %c0_i32_0 = arith.constant 0 : i32
    %c0_i32_1 = arith.constant 0 : i32
    return %c0_i32, %c0_i32_0 : i32, i32
  }
  func.func @transform_8(%arg0: i32) -> (i32, i32) {
    %c0_i32 = arith.constant 0 : i32
    %c0_i32_0 = arith.constant 0 : i32
    %c0_i32_1 = arith.constant 0 : i32
    return %c0_i32, %c0_i32_0 : i32, i32
  }
  func.func @transform_9(%arg0: i32) -> (i32, i32) {
    %c0_i32 = arith.constant 0 : i32
    %c0_i32_0 = arith.constant 0 : i32
    %c0_i32_1 = arith.constant 0 : i32
    return %c0_i32, %c0_i32_0 : i32, i32
  }
  func.func @transform_10(%arg0: i32) -> (i32, i32) {
    %c0_i32 = arith.constant 0 : i32
    %c0_i32_0 = arith.constant 0 : i32
    %c0_i32_1 = arith.constant 0 : i32
    return %c0_i32, %c0_i32_0 : i32, i32
  }
  func.func @transform_11(%arg0: i32) -> (i32, i32) {
    %c0_i32 = arith.constant 0 : i32
    %c0_i32_0 = arith.constant 0 : i32
    %c0_i32_1 = arith.constant 0 : i32
    return %c0_i32, %c0_i32_0 : i32, i32
  }
  func.func @transform_12(%arg0: i32) -> (i32, i32) {
    %c0_i32 = arith.constant 0 : i32
    %c0_i32_0 = arith.constant 0 : i32
    %c0_i32_1 = arith.constant 0 : i32
    return %c0_i32, %c0_i32_0 : i32, i32
  }
  func.func @transform_13(%arg0: i32) -> (i32, i32, i32) {
    %c0_i32 = arith.constant 0 : i32
    %c0_i32_0 = arith.constant 0 : i32
    %c0_i32_1 = arith.constant 0 : i32
    return %arg0, %c0_i32, %c0_i32_0 : i32, i32, i32
  }
}

</mosaic_0001>

<llo_original>
// kernel: sa_layer.1
$region0: #{sa_layer.1}
  #allocation0 [shape = 'u32[]', space=smem, size = 0x4, offset = 0x4, fixed_abs, tag = 'smem constant byte address 0x4 - core index']
  #allocation1 [shape = 'u32[72,128]{1,0:T(1,128)}', space=vmem, size = 0x9000, scoped, tag = 'internal scratch']
  #allocation2 [shape = 'f32[8,638]{1,0:T(8,128)}', space=vmem, size = 0x5000, scoped, tag = 'scratch operand']
  #allocation3 [shape = 'f32[1,1]{1,0:T(1,128)S(1)}', space=vmem, size = 0x200, scoped, tag = 'scoped memory for sa_layer.1']
  %s0 = inlined_call_operand.vmem [shape: f32[2,8,256], index: 0, kind: input, shape index: {}]
  %s1 = inlined_call_operand.vmem [shape: f32[1,506], index: 1, kind: input, shape index: {}]
  %s2 = inlined_call_operand.vmem [shape: f32[1,506], index: 2, kind: input, shape index: {}]
  %s3 = inlined_call_operand.vmem [shape: f32[8,56], index: 3, kind: input, shape index: {}]
  %s4 = inlined_call_operand.vmem [shape: f32[8,1], index: 4, kind: input, shape index: {}]
  %s5 = inlined_call_operand.vmem [shape: f32[8,56], index: 5, kind: input, shape index: {}]
  %s6 = inlined_call_operand.vmem [shape: f32[8,1], index: 6, kind: input, shape index: {}]
  %s7 = inlined_call_operand.vmem [shape: f32[8,72], index: 7, kind: input, shape index: {}]
  %s8 = inlined_call_operand.vmem [shape: f32[8,1], index: 8, kind: input, shape index: {}]
  %s9 = inlined_call_operand.vmem [shape: f32[1,56], index: 9, kind: input, shape index: {}]
  %s10 = inlined_call_operand.vmem [shape: f32[1,56], index: 10, kind: input, shape index: {}]
  %s11 = inlined_call_operand.vmem [shape: f32[1,72], index: 11, kind: input, shape index: {}]
  %s12 = inlined_call_operand.<no memory space> [shape: f32[1,1], index: 12, kind: input, shape index: {}]
  %s13 = inlined_call_operand.vmem [shape: f32[2,8,256], index: 13, kind: output, shape index: {}]
  %s14 = sld [smem:[#allocation0]]
  $region85: #{sa_layer.1} parent=0
    _
  %s16 = ssub.s32 1, %s14
  %s17 = scalar_select 0, %s16, %s14
  %v18 = vstv %s12
  %19 = vst [vmem:[#allocation3] sm:$0x1] %v18
  loop: start=0, step=1, limit=4
  $region2: #{sa_layer.1} parent=0 // loop_pre_header
    _
  $region3: #{sa_layer.1} parent=0 // loop_header
    %s21 = sphi 0, %s25
    %p22 = scmp.ge.s32.totalorder %s21, 4
    %s31 = sphi 0, %s33
    %s34 = sphi 0, %s31
    %s35 = sphi 0, %s34
    %s51 = sphi 0, %s35
    %s55 = sphi 0, %s55
    %s57 = sphi 0, %s55
    %s58 = sphi 0, %s57
    %s72 = sphi 0, %s58
    %s76 = sphi 0, %s76
    %s78 = sphi 0, %s76
    %s79 = sphi 0, %s78
    %s93 = sphi 0, %s79
    %s97 = sphi 0, %s97
    %s99 = sphi 0, %s97
    %s100 = sphi 0, %s99
    %s114 = sphi 0, %s100
    %s118 = sphi 0, %s118
    %s120 = sphi 0, %s118
    %s121 = sphi 0, %s120
    %s135 = sphi 0, %s121
    %s139 = sphi 0, %s139
    %s141 = sphi 0, %s139
    %s142 = sphi 0, %s141
    %s156 = sphi 0, %s142
    %s160 = sphi 0, %s160
    %s162 = sphi 0, %s160
    %s163 = sphi 0, %s162
    %s177 = sphi 0, %s163
    %s181 = sphi 0, %s181
    %s183 = sphi 0, %s181
    %s184 = sphi 0, %s183
    %s198 = sphi 0, %s184
    %s202 = sphi 0, %s202
    %s204 = sphi 0, %s202
    %s205 = sphi 0, %s204
    %s219 = sphi 0, %s205
    %s223 = sphi 0, %s223
    %s225 = sphi 0, %s223
    %s226 = sphi 0, %s225
    %s240 = sphi 0, %s226
    %s244 = sphi 0, %s244
    %s246 = sphi 0, %s244
    %s247 = sphi 0, %s246
    %s261 = sphi 0, %s247
    %s265 = sphi 0, %s265
    %s267 = sphi 0, %s265
    %s268 = sphi 0, %s267
    %s282 = sphi 0, %s268
    %s286 = sphi 0, %s286
    %s288 = sphi 0, %s286
    %s289 = sphi 0, %s288
    %s303 = sphi 0, %s289
    %s309 = sphi 0, %s311
    %s312 = sphi 0, %s309
    %s313 = sphi 0, %s312
    %s329 = sphi 0, %s313
  $region4: #{sa_layer.1} parent=0 // loop_header_branch
    %24 = sbr.rel (%p22) target = $region8
  $region5: #{sa_layer.1} parent=0 // loop_body
    %s26 = ssub.s32 %s21, 1
    %s27 = ssub.s32 %s21, 2
    %s28 = sadd.s32 %s21, 1
    %s29 = ssub.s32 %s21, %s28
    %p30 = scmp.eq.s32.totalorder %s29, 0
    %s32 = sadd.s32 %s31, 1
    %s33 = scalar_select %p30, %s31, %s32
    %p36 = pneg %p30
    %p37 = scmp.eq.s32.totalorder %s21, 1
    %p38 = por %p36, %p37
    %p39 = scmp.ne.s32.totalorder %s31, %s34
    %p40 = scmp.eq.s32.totalorder %s21, 0
    %p41 = por %p39, %p40
    %p42 = scmp.ne.s32.totalorder %s31, %s34
    %p43 = scmp.eq.s32.totalorder %s26, 1
    %p44 = por %p42, %p43
    %p45 = scmp.ne.s32.totalorder %s34, %s35
    %p46 = scmp.eq.s32.totalorder %s26, 0
    %p47 = por %p45, %p46
    %p48 = scmp.ne.s32.totalorder %s34, %s35
    %p49 = scmp.eq.s32.totalorder %s27, 1
    %p50 = por %p48, %p49
    %p52 = scmp.ne.s32.totalorder %s35, %s51
    %p53 = scmp.eq.s32.totalorder %s27, 0
    %p54 = por %p52, %p53
    %s56 = sadd.s32 %s55, 1
    %p59 = scmp.eq.s32.totalorder %s21, 1
    %p60 = scmp.ne.s32.totalorder %s55, %s57
    %p61 = scmp.eq.s32.totalorder %s21, 0
    %p62 = por %p60, %p61
    %p63 = scmp.ne.s32.totalorder %s55, %s57
    %p64 = scmp.eq.s32.totalorder %s26, 1
    %p65 = por %p63, %p64
    %p66 = scmp.ne.s32.totalorder %s57, %s58
    %p67 = scmp.eq.s32.totalorder %s26, 0
    %p68 = por %p66, %p67
    %p69 = scmp.ne.s32.totalorder %s57, %s58
    %p70 = scmp.eq.s32.totalorder %s27, 1
    %p71 = por %p69, %p70
    %p73 = scmp.ne.s32.totalorder %s58, %s72
    %p74 = scmp.eq.s32.totalorder %s27, 0
    %p75 = por %p73, %p74
    %s77 = sadd.s32 %s76, 1
    %p80 = scmp.eq.s32.totalorder %s21, 1
    %p81 = scmp.ne.s32.totalorder %s76, %s78
    %p82 = scmp.eq.s32.totalorder %s21, 0
    %p83 = por %p81, %p82
    %p84 = scmp.ne.s32.totalorder %s76, %s78
    %p85 = scmp.eq.s32.totalorder %s26, 1
    %p86 = por %p84, %p85
    %p87 = scmp.ne.s32.totalorder %s78, %s79
    %p88 = scmp.eq.s32.totalorder %s26, 0
    %p89 = por %p87, %p88
    %p90 = scmp.ne.s32.totalorder %s78, %s79
    %p91 = scmp.eq.s32.totalorder %s27, 1
    %p92 = por %p90, %p91
    %p94 = scmp.ne.s32.totalorder %s79, %s93
    %p95 = scmp.eq.s32.totalorder %s27, 0
    %p96 = por %p94, %p95
    %s98 = sadd.s32 %s97, 1
    %p101 = scmp.eq.s32.totalorder %s21, 1
    %p102 = scmp.ne.s32.totalorder %s97, %s99
    %p103 = scmp.eq.s32.totalorder %s21, 0
    %p104 = por %p102, %p103
    %p105 = scmp.ne.s32.totalorder %s97, %s99
    %p106 = scmp.eq.s32.totalorder %s26, 1
    %p107 = por %p105, %p106
    %p108 = scmp.ne.s32.totalorder %s99, %s100
    %p109 = scmp.eq.s32.totalorder %s26, 0
    %p110 = por %p108, %p109
    %p111 = scmp.ne.s32.totalorder %s99, %s100
    %p112 = scmp.eq.s32.totalorder %s27, 1
    %p113 = por %p111, %p112
    %p115 = scmp.ne.s32.totalorder %s100, %s114
    %p116 = scmp.eq.s32.totalorder %s27, 0
    %p117 = por %p115, %p116
    %s119 = sadd.s32 %s118, 1
    %p122 = scmp.eq.s32.totalorder %s21, 1
    %p123 = scmp.ne.s32.totalorder %s118, %s120
    %p124 = scmp.eq.s32.totalorder %s21, 0
    %p125 = por %p123, %p124
    %p126 = scmp.ne.s32.totalorder %s118, %s120
    %p127 = scmp.eq.s32.totalorder %s26, 1
    %p128 = por %p126, %p127
    %p129 = scmp.ne.s32.totalorder %s120, %s121
    %p130 = scmp.eq.s32.totalorder %s26, 0
    %p131 = por %p129, %p130
    %p132 = scmp.ne.s32.totalorder %s120, %s121
    %p133 = scmp.eq.s32.totalorder %s27, 1
    %p134 = por %p132, %p133
    %p136 = scmp.ne.s32.totalorder %s121, %s135
    %p137 = scmp.eq.s32.totalorder %s27, 0
    %p138 = por %p136, %p137
    %s140 = sadd.s32 %s139, 1
    %p143 = scmp.eq.s32.totalorder %s21, 1
    %p144 = scmp.ne.s32.totalorder %s139, %s141
    %p145 = scmp.eq.s32.totalorder %s21, 0
    %p146 = por %p144, %p145
    %p147 = scmp.ne.s32.totalorder %s139, %s141
    %p148 = scmp.eq.s32.totalorder %s26, 1
    %p149 = por %p147, %p148
    %p150 = scmp.ne.s32.totalorder %s141, %s142
    %p151 = scmp.eq.s32.totalorder %s26, 0
    %p152 = por %p150, %p151
    %p153 = scmp.ne.s32.totalorder %s141, %s142
    %p154 = scmp.eq.s32.totalorder %s27, 1
    %p155 = por %p153, %p154
    %p157 = scmp.ne.s32.totalorder %s142, %s156
    %p158 = scmp.eq.s32.totalorder %s27, 0
    %p159 = por %p157, %p158
    %s161 = sadd.s32 %s160, 1
    %p164 = scmp.eq.s32.totalorder %s21, 1
    %p165 = scmp.ne.s32.totalorder %s160, %s162
    %p166 = scmp.eq.s32.totalorder %s21, 0
    %p167 = por %p165, %p166
    %p168 = scmp.ne.s32.totalorder %s160, %s162
    %p169 = scmp.eq.s32.totalorder %s26, 1
    %p170 = por %p168, %p169
    %p171 = scmp.ne.s32.totalorder %s162, %s163
    %p172 = scmp.eq.s32.totalorder %s26, 0
    %p173 = por %p171, %p172
    %p174 = scmp.ne.s32.totalorder %s162, %s163
    %p175 = scmp.eq.s32.totalorder %s27, 1
    %p176 = por %p174, %p175
    %p178 = scmp.ne.s32.totalorder %s163, %s177
    %p179 = scmp.eq.s32.totalorder %s27, 0
    %p180 = por %p178, %p179
    %s182 = sadd.s32 %s181, 1
    %p185 = scmp.eq.s32.totalorder %s21, 1
    %p186 = scmp.ne.s32.totalorder %s181, %s183
    %p187 = scmp.eq.s32.totalorder %s21, 0
    %p188 = por %p186, %p187
    %p189 = scmp.ne.s32.totalorder %s181, %s183
    %p190 = scmp.eq.s32.totalorder %s26, 1
    %p191 = por %p189, %p190
    %p192 = scmp.ne.s32.totalorder %s183, %s184
    %p193 = scmp.eq.s32.totalorder %s26, 0
    %p194 = por %p192, %p193
    %p195 = scmp.ne.s32.totalorder %s183, %s184
    %p196 = scmp.eq.s32.totalorder %s27, 1
    %p197 = por %p195, %p196
    %p199 = scmp.ne.s32.totalorder %s184, %s198
    %p200 = scmp.eq.s32.totalorder %s27, 0
    %p201 = por %p199, %p200
    %s203 = sadd.s32 %s202, 1
    %p206 = scmp.eq.s32.totalorder %s21, 1
    %p207 = scmp.ne.s32.totalorder %s202, %s204
    %p208 = scmp.eq.s32.totalorder %s21, 0
    %p209 = por %p207, %p208
    %p210 = scmp.ne.s32.totalorder %s202, %s204
    %p211 = scmp.eq.s32.totalorder %s26, 1
    %p212 = por %p210, %p211
    %p213 = scmp.ne.s32.totalorder %s204, %s205
    %p214 = scmp.eq.s32.totalorder %s26, 0
    %p215 = por %p213, %p214
    %p216 = scmp.ne.s32.totalorder %s204, %s205
    %p217 = scmp.eq.s32.totalorder %s27, 1
    %p218 = por %p216, %p217
    %p220 = scmp.ne.s32.totalorder %s205, %s219
    %p221 = scmp.eq.s32.totalorder %s27, 0
    %p222 = por %p220, %p221
    %s224 = sadd.s32 %s223, 1
    %p227 = scmp.eq.s32.totalorder %s21, 1
    %p228 = scmp.ne.s32.totalorder %s223, %s225
    %p229 = scmp.eq.s32.totalorder %s21, 0
    %p230 = por %p228, %p229
    %p231 = scmp.ne.s32.totalorder %s223, %s225
    %p232 = scmp.eq.s32.totalorder %s26, 1
    %p233 = por %p231, %p232
    %p234 = scmp.ne.s32.totalorder %s225, %s226
    %p235 = scmp.eq.s32.totalorder %s26, 0
    %p236 = por %p234, %p235
    %p237 = scmp.ne.s32.totalorder %s225, %s226
    %p238 = scmp.eq.s32.totalorder %s27, 1
    %p239 = por %p237, %p238
    %p241 = scmp.ne.s32.totalorder %s226, %s240
    %p242 = scmp.eq.s32.totalorder %s27, 0
    %p243 = por %p241, %p242
    %s245 = sadd.s32 %s244, 1
    %p248 = scmp.eq.s32.totalorder %s21, 1
    %p249 = scmp.ne.s32.totalorder %s244, %s246
    %p250 = scmp.eq.s32.totalorder %s21, 0
    %p251 = por %p249, %p250
    %p252 = scmp.ne.s32.totalorder %s244, %s246
    %p253 = scmp.eq.s32.totalorder %s26, 1
    %p254 = por %p252, %p253
    %p255 = scmp.ne.s32.totalorder %s246, %s247
    %p256 = scmp.eq.s32.totalorder %s26, 0
    %p257 = por %p255, %p256
    %p258 = scmp.ne.s32.totalorder %s246, %s247
    %p259 = scmp.eq.s32.totalorder %s27, 1
    %p260 = por %p258, %p259
    %p262 = scmp.ne.s32.totalorder %s247, %s261
    %p263 = scmp.eq.s32.totalorder %s27, 0
    %p264 = por %p262, %p263
    %s266 = sadd.s32 %s265, 1
    %p269 = scmp.eq.s32.totalorder %s21, 1
    %p270 = scmp.ne.s32.totalorder %s265, %s267
    %p271 = scmp.eq.s32.totalorder %s21, 0
    %p272 = por %p270, %p271
    %p273 = scmp.ne.s32.totalorder %s265, %s267
    %p274 = scmp.eq.s32.totalorder %s26, 1
    %p275 = por %p273, %p274
    %p276 = scmp.ne.s32.totalorder %s267, %s268
    %p277 = scmp.eq.s32.totalorder %s26, 0
    %p278 = por %p276, %p277
    %p279 = scmp.ne.s32.totalorder %s267, %s268
    %p280 = scmp.eq.s32.totalorder %s27, 1
    %p281 = por %p279, %p280
    %p283 = scmp.ne.s32.totalorder %s268, %s282
    %p284 = scmp.eq.s32.totalorder %s27, 0
    %p285 = por %p283, %p284
    %s287 = sadd.s32 %s286, 1
    %p290 = scmp.eq.s32.totalorder %s21, 1
    %p291 = scmp.ne.s32.totalorder %s286, %s288
    %p292 = scmp.eq.s32.totalorder %s21, 0
    %p293 = por %p291, %p292
    %p294 = scmp.ne.s32.totalorder %s286, %s288
    %p295 = scmp.eq.s32.totalorder %s26, 1
    %p296 = por %p294, %p295
    %p297 = scmp.ne.s32.totalorder %s288, %s289
    %p298 = scmp.eq.s32.totalorder %s26, 0
    %p299 = por %p297, %p298
    %p300 = scmp.ne.s32.totalorder %s288, %s289
    %p301 = scmp.eq.s32.totalorder %s27, 1
    %p302 = por %p300, %p301
    %p304 = scmp.ne.s32.totalorder %s289, %s303
    %p305 = scmp.eq.s32.totalorder %s27, 0
    %p306 = por %p304, %p305
    %s307 = ssub.s32 %s21, %s28
    %p308 = scmp.eq.s32.totalorder %s307, 0
    %s310 = sadd.s32 %s309, 1
    %s311 = scalar_select %p308, %s309, %s310
    %p314 = pneg %p308
    %p315 = scmp.eq.s32.totalorder %s21, 1
    %p316 = por %p314, %p315
    %p317 = scmp.ne.s32.totalorder %s309, %s312
    %p318 = scmp.eq.s32.totalorder %s21, 0
    %p319 = por %p317, %p318
    %p320 = scmp.ne.s32.totalorder %s309, %s312
    %p321 = scmp.eq.s32.totalorder %s26, 1
    %p322 = por %p320, %p321
    %p323 = scmp.ne.s32.totalorder %s312, %s313
    %p324 = scmp.eq.s32.totalorder %s26, 0
    %p325 = por %p323, %p324
    %p326 = scmp.ne.s32.totalorder %s312, %s313
    %p327 = scmp.eq.s32.totalorder %s27, 1
    %p328 = por %p326, %p327
    %p330 = scmp.ne.s32.totalorder %s313, %s329
    %p331 = scmp.eq.s32.totalorder %s27, 0
    %p332 = por %p330, %p331
    %p333 = scmp.le.s32.totalorder 1, %s21
    %p334 = scmp.lt.s32.totalorder %s21, 3
    %p335 = pnand %p333, %p334
    %p336 = pneg %p335
    // Predicated region
    $region9: #{sa_layer.1} parent=5 // pred_check
      _
    $region10: #{sa_layer.1} parent=5 // pred_check_branch
      %338 = sbr.rel (%p335) target = $region12
    $region11: #{sa_layer.1} parent=5 // pred_region
      %s339 = ssub.s32 %s21, 1
      // Predicated region
      $region13: #{sa_layer.1} parent=11 // pred_check
        %p340 = pneg %p68
      $region14: #{sa_layer.1} parent=11 // pred_check_branch
        %342 = sbr.rel (%p340) target = $region16
      $region15: #{sa_layer.1} parent=11 // pred_region
        _
      $region16: #{sa_layer.1} parent=11 // pred_fallthru
        _
      // Predicated region
      $region17: #{sa_layer.1} parent=11 // pred_check
        %p343 = pneg %p89
      $region18: #{sa_layer.1} parent=11 // pred_check_branch
        %345 = sbr.rel (%p343) target = $region20
      $region19: #{sa_layer.1} parent=11 // pred_region
        _
      $region20: #{sa_layer.1} parent=11 // pred_fallthru
        _
      // Predicated region
      $region21: #{sa_layer.1} parent=11 // pred_check
        %p346 = pneg %p110
      $region22: #{sa_layer.1} parent=11 // pred_check_branch
        %348 = sbr.rel (%p346) target = $region24
      $region23: #{sa_layer.1} parent=11 // pred_region
        _
      $region24: #{sa_layer.1} parent=11 // pred_fallthru
        _
      // Predicated region
      $region25: #{sa_layer.1} parent=11 // pred_check
        %p349 = pneg %p131
      $region26: #{sa_layer.1} parent=11 // pred_check_branch
        %351 = sbr.rel (%p349) target = $region28
      $region27: #{sa_layer.1} parent=11 // pred_region
        _
      $region28: #{sa_layer.1} parent=11 // pred_fallthru
        _
      // Predicated region
      $region29: #{sa_layer.1} parent=11 // pred_check
        %p352 = pneg %p152
      $region30: #{sa_layer.1} parent=11 // pred_check_branch
        %354 = sbr.rel (%p352) target = $region32
      $region31: #{sa_layer.1} parent=11 // pred_region
        _
      $region32: #{sa_layer.1} parent=11 // pred_fallthru
        _
      // Predicated region
      $region33: #{sa_layer.1} parent=11 // pred_check
        %p355 = pneg %p173
      $region34: #{sa_layer.1} parent=11 // pred_check_branch
        %357 = sbr.rel (%p355) target = $region36
      $region35: #{sa_layer.1} parent=11 // pred_region
        _
      $region36: #{sa_layer.1} parent=11 // pred_fallthru
        _
      // Predicated region
      $region37: #{sa_layer.1} parent=11 // pred_check
        %p358 = pneg %p194
      $region38: #{sa_layer.1} parent=11 // pred_check_branch
        %360 = sbr.rel (%p358) target = $region40
      $region39: #{sa_layer.1} parent=11 // pred_region
        _
      $region40: #{sa_layer.1} parent=11 // pred_fallthru
        _
      // Predicated region
      $region41: #{sa_layer.1} parent=11 // pred_check
        %p361 = pneg %p215
      $region42: #{sa_layer.1} parent=11 // pred_check_branch
        %363 = sbr.rel (%p361) target = $region44
      $region43: #{sa_layer.1} parent=11 // pred_region
        _
      $region44: #{sa_layer.1} parent=11 // pred_fallthru
        _
      // Predicated region
      $region45: #{sa_layer.1} parent=11 // pred_check
        %p364 = pneg %p236
      $region46: #{sa_layer.1} parent=11 // pred_check_branch
        %366 = sbr.rel (%p364) target = $region48
      $region47: #{sa_layer.1} parent=11 // pred_region
        _
      $region48: #{sa_layer.1} parent=11 // pred_fallthru
        _
      // Predicated region
      $region49: #{sa_layer.1} parent=11 // pred_check
        %p367 = pneg %p257
      $region50: #{sa_layer.1} parent=11 // pred_check_branch
        %369 = sbr.rel (%p367) target = $region52
      $region51: #{sa_layer.1} parent=11 // pred_region
        _
      $region52: #{sa_layer.1} parent=11 // pred_fallthru
        _
      // Predicated region
      $region53: #{sa_layer.1} parent=11 // pred_check
        %p370 = pneg %p278
      $region54: #{sa_layer.1} parent=11 // pred_check_branch
        %372 = sbr.rel (%p370) target = $region56
      $region55: #{sa_layer.1} parent=11 // pred_region
        _
      $region56: #{sa_layer.1} parent=11 // pred_fallthru
        _
      // Predicated region
      $region57: #{sa_layer.1} parent=11 // pred_check
        %p373 = pneg %p299
      $region58: #{sa_layer.1} parent=11 // pred_check_branch
        %375 = sbr.rel (%p373) target = $region60
      $region59: #{sa_layer.1} parent=11 // pred_region
        _
      $region60: #{sa_layer.1} parent=11 // pred_fallthru
        _
    $region12: #{sa_layer.1} parent=5 // pred_fallthru
      _
    %p376 = scmp.lt.s32.totalorder %s21, 2
    // Predicated region
    $region61: #{sa_layer.1} parent=5 // pred_check
      %p377 = pneg %p376
    $region62: #{sa_layer.1} parent=5 // pred_check_branch
      %379 = sbr.rel (%p377) target = $region64
    $region63: #{sa_layer.1} parent=5 // pred_region
      // Predicated region
      $region65: #{sa_layer.1} parent=63 // pred_check
        %p380 = pneg %p41
      $region66: #{sa_layer.1} parent=63 // pred_check_branch
        %382 = sbr.rel (%p380) target = $region68
      $region67: #{sa_layer.1} parent=63 // pred_region
        %p383 = scmp.lt.s32.totalorder %s21, 1
        %s384 = scalar_select %p383, %s21, 1
        %s385 = smul.addr %s384, 2
        %s386 = smul.addr %s385, 8
        %s387 = scalar_lea.vmem %s0, %s386
      $region68: #{sa_layer.1} parent=63 // pred_fallthru
        _
    $region64: #{sa_layer.1} parent=5 // pred_fallthru
      _
    %p388 = scmp.le.s32.totalorder 1, %s21
    %p389 = scmp.lt.s32.totalorder %s21, 3
    %p390 = pnand %p388, %p389
    %p391 = pneg %p390
    // Predicated region
    $region69: #{sa_layer.1} parent=5 // pred_check
      _
    $region70: #{sa_layer.1} parent=5 // pred_check_branch
      %393 = sbr.rel (%p390) target = $region72
    $region71: #{sa_layer.1} parent=5 // pred_region
      %s394 = ssub.s32 %s21, 1
      %p395 = scmp.lt.s32.totalorder %s26, 1
      %s396 = scalar_select %p395, %s26, 1
      %s397 = smul.addr %s396, 2
      %s398 = smul.addr %s397, 8
      %s399 = scalar_lea.vmem %s0, %s398
      %p400 = pneg %p47
      %p401 = pneg %p44
      %p402 = pneg %p68
      %p403 = pneg %p65
      %p404 = pneg %p89
      %p405 = pneg %p86
      %p406 = pneg %p110
      %p407 = pneg %p107
      %p408 = pneg %p131
      %p409 = pneg %p128
      %p410 = pneg %p152
      %p411 = pneg %p149
      %p412 = pneg %p173
      %p413 = pneg %p170
      %p414 = pneg %p194
      %p415 = pneg %p191
      %p416 = pneg %p215
      %p417 = pneg %p212
      %p418 = pneg %p236
      %p419 = pneg %p233
      %p420 = pneg %p257
      %p421 = pneg %p254
      %p422 = pneg %p278
      %p423 = pneg %p275
      %p424 = pneg %p299
      %p425 = pneg %p296
      %p426 = pneg %p325
      %p427 = pneg %p322
      %p428 = scmp.lt.s32.totalorder %s26, 1
      %s429 = scalar_select %p428, %s26, 1
      %s430 = smul.addr %s429, 2
      %s431 = smul.addr %s430, 8
      %s432 = scalar_lea.vmem %s13, %s431
      %p433 = scmp.lt.s32.totalorder %s26, 1
      %s434 = scalar_select %p433, %s26, 1
      %s435 = smul.addr %s434, 2
      %s436 = smul.addr %s435, 8
      %s437 = scalar_lea.vmem %s0, %s436
      %p438 = scmp.lt.s32.totalorder %s26, 1
      %s439 = scalar_select %p438, %s26, 1
      %s440 = smul.addr %s439, 2
      %s441 = smul.addr %s440, 8
      %s442 = scalar_lea.vmem %s13, %s441
      %443 = vst [vmem:[#allocation2] sm:$0xff] 0.0
      %444 = vst [vmem:[#allocation2 + $0x8] sm:$0xff] 0.0
      %445 = vst [vmem:[#allocation2 + $0x10] sm:$0xff] 0.0
      %446 = vst [vmem:[#allocation2 + $0x18] sm:$0xff] 0.0
      %vm447 = vcmask 1031168
      %448 = vst.msk [vmem:[#allocation2 + $0x20] sm:$0xff] %vm447, 0.0
      %v449 = vld [vmem:[%s437] sm:$0xff]
      %451 = vrot.lane.b32.xlu0 %v449, 7
      %v452 = vpop.permute.xlu0 %451
      %vm454 = vcmask 187448
      %455 = vst.msk [vmem:[#allocation2 + $0x8] sm:$0xff] %vm454, %v452
      %v456 = vld [vmem:[%s437] sm:$0xff]
      %458 = vrot.lane.b32.xlu0 %v456, 13
      %v459 = vpop.permute.xlu0 %458
      %vm461 = vcmask 367848
      %462 = vst.msk [vmem:[#allocation2 + $0x8] sm:$0xff] %vm461, %v459
      %v463 = vld [vmem:[%s437] sm:$0xff]
      %465 = vrot.lane.b32.xlu0 %v463, 19
      %v466 = vpop.permute.xlu0 %465
      %vm468 = vcmask 548248
      %469 = vst.msk [vmem:[#allocation2 + $0x8] sm:$0xff] %vm468, %v466
      %v470 = vld [vmem:[%s437] sm:$0xff]
      %472 = vrot.lane.b32.xlu0 %v470, 25
      %v473 = vpop.permute.xlu0 %472
      %vm475 = vcmask 728648
      %476 = vst.msk [vmem:[#allocation2 + $0x8] sm:$0xff] %vm475, %v473
      %v477 = vld [vmem:[%s437] sm:$0xff]
      %479 = vrot.lane.b32.xlu0 %v477, 31
      %v480 = vpop.permute.xlu0 %479
      %vm482 = vcmask 909048
      %483 = vst.msk [vmem:[#allocation2 + $0x8] sm:$0xff] %vm482, %v480
      %v484 = vld [vmem:[%s437] sm:$0xff]
      %486 = vrot.lane.b32.xlu0 %v484, 37
      %v487 = vpop.permute.xlu0 %486
      %vm489 = vcmask 1048488
      %490 = vst.msk [vmem:[#allocation2 + $0x8] sm:$0xff] %vm489, %v487
      %vm491 = vcmask 39936
      %492 = vst.msk [vmem:[#allocation2 + $0x10] sm:$0xff] %vm491, %v487
      %v493 = vld [vmem:[%s437] sm:$0xff]
      %495 = vrot.lane.b32.xlu0 %v493, 43
      %v496 = vpop.permute.xlu0 %495
      %vm498 = vcmask 220248
      %499 = vst.msk [vmem:[#allocation2 + $0x10] sm:$0xff] %vm498, %v496
      %v500 = vld [vmem:[%s437] sm:$0xff]
      %502 = vrot.lane.b32.xlu0 %v500, 49
      %v503 = vpop.permute.xlu0 %502
      %vm505 = vcmask 400648
      %506 = vst.msk [vmem:[#allocation2 + $0x10] sm:$0xff] %vm505, %v503
      %v507 = vld [vmem:[%s437 + $0x8] sm:$0xff]
      %509 = vrot.lane.b32.xlu0 %v507, 55
      %v510 = vpop.permute.xlu0 %509
      %vm512 = vcmask 581048
      %513 = vst.msk [vmem:[#allocation2 + $0x10] sm:$0xff] %vm512, %v510
      %v514 = vld [vmem:[%s437 + $0x8] sm:$0xff]
      %516 = vrot.lane.b32.xlu0 %v514, 61
      %v517 = vpop.permute.xlu0 %516
      %vm519 = vcmask 761448
      %520 = vst.msk [vmem:[#allocation2 + $0x10] sm:$0xff] %vm519, %v517
      %v521 = vld [vmem:[%s437 + $0x8] sm:$0xff]
      %523 = vrot.lane.b32.xlu0 %v521, 67
      %v524 = vpop.permute.xlu0 %523
      %vm526 = vcmask 941848
      %527 = vst.msk [vmem:[#allocation2 + $0x10] sm:$0xff] %vm526, %v524
      %v528 = vld [vmem:[%s437 + $0x8] sm:$0xff]
      %530 = vrot.lane.b32.xlu0 %v528, 73
      %v531 = vpop.permute.xlu0 %530
      %vm533 = vcmask 1048520
      %534 = vst.msk [vmem:[#allocation2 + $0x10] sm:$0xff] %vm533, %v531
      %vm535 = vcmask 72704
      %536 = vst.msk [vmem:[#allocation2 + $0x18] sm:$0xff] %vm535, %v531
      %v537 = vld [vmem:[%s437 + $0x8] sm:$0xff]
      %539 = vrot.lane.b32.xlu0 %v537, 79
      %v540 = vpop.permute.xlu0 %539
      %vm542 = vcmask 253048
      %543 = vst.msk [vmem:[#allocation2 + $0x18] sm:$0xff] %vm542, %v540
      %v544 = vld [vmem:[%s437 + $0x8] sm:$0xff]
      %546 = vrot.lane.b32.xlu0 %v544, 85
      %v547 = vpop.permute.xlu0 %546
      %vm549 = vcmask 433448
      %550 = vst.msk [vmem:[#allocation2 + $0x18] sm:$0xff] %vm549, %v547
      %v551 = vld [vmem:[%s437 + $0x8] sm:$0xff]
      %553 = vrot.lane.b32.xlu0 %v551, 91
      %v554 = vpop.permute.xlu0 %553
      %vm556 = vcmask 613848
      %557 = vst.msk [vmem:[#allocation2 + $0x18] sm:$0xff] %vm556, %v554
      %v558 = vld [vmem:[%s437 + $0x8] sm:$0xff]
      %560 = vrot.lane.b32.xlu0 %v558, 97
      %v561 = vpop.permute.xlu0 %560
      %vm563 = vcmask 794248
      %564 = vst.msk [vmem:[#allocation2 + $0x18] sm:$0xff] %vm563, %v561
      %v565 = vld [vmem:[%s1] sm:$0xf]
      %v566 = vld [vmem:[%s2] sm:$0xf]
      %v567 = vld [vmem:[#allocation2] sm:$0xff]
      %v568 = vld [vmem:[#allocation2 + $0x8] sm:$0xff]
      %v569 = vld [vmem:[#allocation2 + $0x10] sm:$0xff]
      %v570 = vld [vmem:[#allocation2 + $0x18] sm:$0xff]
      %v571 = vld [vmem:[#allocation2 + $0x20] sm:$0xff]
      %577 = vrot.lane.b32.xlu0 %v567, 127
      %v578 = vpop.permute.xlu0 %577
      %579 = vrot.lane.b32.xlu0 %v568, 127
      %v580 = vpop.permute.xlu0 %579
      %581 = vrot.lane.b32.xlu0 %v569, 127
      %v582 = vpop.permute.xlu0 %581
      %583 = vrot.lane.b32.xlu0 %v570, 127
      %v584 = vpop.permute.xlu0 %583
      %585 = vrot.lane.b32.xlu0 %v571, 127
      %v586 = vpop.permute.xlu0 %585
      %vm587 = vcmask 1039360
      %v588 = vsel %vm587, %v578, %v580
      %v589 = vsel %vm587, %v580, %v582
      %v590 = vsel %vm587, %v582, %v584
      %v591 = vsel %vm587, %v584, %v586
      %592 = vrot.lane.b32.xlu0 %v567, 126
      %v593 = vpop.permute.xlu0 %592
      %594 = vrot.lane.b32.xlu0 %v568, 126
      %v595 = vpop.permute.xlu0 %594
      %596 = vrot.lane.b32.xlu0 %v569, 126
      %v597 = vpop.permute.xlu0 %596
      %598 = vrot.lane.b32.xlu0 %v570, 126
      %v599 = vpop.permute.xlu0 %598
      %600 = vrot.lane.b32.xlu0 %v571, 126
      %v601 = vpop.permute.xlu0 %600
      %v602 = vsel %vm447, %v593, %v595
      %v603 = vsel %vm447, %v595, %v597
      %v604 = vsel %vm447, %v597, %v599
      %v605 = vsel %vm447, %v599, %v601
      %606 = vrot.lane.b32.xlu0 %v567, 125
      %v607 = vpop.permute.xlu0 %606
      %608 = vrot.lane.b32.xlu0 %v568, 125
      %v609 = vpop.permute.xlu0 %608
      %610 = vrot.lane.b32.xlu0 %v569, 125
      %v611 = vpop.permute.xlu0 %610
      %612 = vrot.lane.b32.xlu0 %v570, 125
      %v613 = vpop.permute.xlu0 %612
      %614 = vrot.lane.b32.xlu0 %v571, 125
      %v615 = vpop.permute.xlu0 %614
      %vm616 = vcmask 1022976
      %v617 = vsel %vm616, %v607, %v609
      %v618 = vsel %vm616, %v609, %v611
      %v619 = vsel %vm616, %v611, %v613
      %v620 = vsel %vm616, %v613, %v615
      %621 = vrot.lane.b32.xlu0 %v567, 124
      %v622 = vpop.permute.xlu0 %621
      %623 = vrot.lane.b32.xlu0 %v568, 124
      %v624 = vpop.permute.xlu0 %623
      %625 = vrot.lane.b32.xlu0 %v569, 124
      %v626 = vpop.permute.xlu0 %625
      %627 = vrot.lane.b32.xlu0 %v570, 124
      %v628 = vpop.permute.xlu0 %627
      %629 = vrot.lane.b32.xlu0 %v571, 124
      %v630 = vpop.permute.xlu0 %629
      %vm631 = vcmask 1014784
      %v632 = vsel %vm631, %v622, %v624
      %v633 = vsel %vm631, %v624, %v626
      %v634 = vsel %vm631, %v626, %v628
      %v635 = vsel %vm631, %v628, %v630
      %636 = vrot.lane.b32.xlu0 %v567, 123
      %v637 = vpop.permute.xlu0 %636
      %638 = vrot.lane.b32.xlu0 %v568, 123
      %v639 = vpop.permute.xlu0 %638
      %640 = vrot.lane.b32.xlu0 %v569, 123
      %v641 = vpop.permute.xlu0 %640
      %642 = vrot.lane.b32.xlu0 %v570, 123
      %v643 = vpop.permute.xlu0 %642
      %644 = vrot.lane.b32.xlu0 %v571, 123
      %v645 = vpop.permute.xlu0 %644
      %vm646 = vcmask 1006592
      %v647 = vsel %vm646, %v637, %v639
      %v648 = vsel %vm646, %v639, %v641
      %v649 = vsel %vm646, %v641, %v643
      %v650 = vsel %vm646, %v643, %v645
      %651 = vrot.lane.b32.xlu0 %v567, 122
      %v652 = vpop.permute.xlu0 %651
      %653 = vrot.lane.b32.xlu0 %v568, 122
      %v654 = vpop.permute.xlu0 %653
      %655 = vrot.lane.b32.xlu0 %v569, 122
      %v656 = vpop.permute.xlu0 %655
      %657 = vrot.lane.b32.xlu0 %v570, 122
      %v658 = vpop.permute.xlu0 %657
      %659 = vrot.lane.b32.xlu0 %v571, 122
      %v660 = vpop.permute.xlu0 %659
      %vm661 = vcmask 998400
      %v662 = vsel %vm661, %v652, %v654
      %v663 = vsel %vm661, %v654, %v656
      %v664 = vsel %vm661, %v656, %v658
      %v665 = vsel %vm661, %v658, %v660
      %v666 = vld [vmem:[%s3] sm:$0xff]
      %v667 = vld [vmem:[%s4] sm:$0xff]
      %669 = vset.pattern.permute.xlu0 0
      %670 = vperm.xlu0 %669, %v667
      %v671 = vpop.permute.xlu0 %670
      %673 = vrot.lane.b32.xlu0 %v567, 65
      %v674 = vpop.permute.xlu0 %673
      %675 = vrot.lane.b32.xlu0 %v568, 65
      %v676 = vpop.permute.xlu0 %675
      %677 = vrot.lane.b32.xlu0 %v569, 65
      %v678 = vpop.permute.xlu0 %677
      %679 = vrot.lane.b32.xlu0 %v570, 65
      %v680 = vpop.permute.xlu0 %679
      %681 = vrot.lane.b32.xlu0 %v571, 65
      %v682 = vpop.permute.xlu0 %681
      %683 = vrot.lane.b32.xlu0 %v588, 65
      %v684 = vpop.permute.xlu0 %683
      %685 = vrot.lane.b32.xlu0 %v589, 65
      %v686 = vpop.permute.xlu0 %685
      %687 = vrot.lane.b32.xlu0 %v590, 65
      %v688 = vpop.permute.xlu0 %687
      %689 = vrot.lane.b32.xlu0 %v591, 65
      %v690 = vpop.permute.xlu0 %689
      %691 = vrot.lane.b32.xlu0 %v586, 65
      %v692 = vpop.permute.xlu0 %691
      %693 = vrot.lane.b32.xlu0 %v602, 65
      %v694 = vpop.permute.xlu0 %693
      %695 = vrot.lane.b32.xlu0 %v603, 65
      %v696 = vpop.permute.xlu0 %695
      %697 = vrot.lane.b32.xlu0 %v604, 65
      %v698 = vpop.permute.xlu0 %697
      %699 = vrot.lane.b32.xlu0 %v605, 65
      %v700 = vpop.permute.xlu0 %699
      %701 = vrot.lane.b32.xlu0 %v601, 65
      %v702 = vpop.permute.xlu0 %701
      %703 = vrot.lane.b32.xlu0 %v617, 65
      %v704 = vpop.permute.xlu0 %703
      %705 = vrot.lane.b32.xlu0 %v618, 65
      %v706 = vpop.permute.xlu0 %705
      %707 = vrot.lane.b32.xlu0 %v619, 65
      %v708 = vpop.permute.xlu0 %707
      %709 = vrot.lane.b32.xlu0 %v620, 65
      %v710 = vpop.permute.xlu0 %709
      %711 = vrot.lane.b32.xlu0 %v615, 65
      %v712 = vpop.permute.xlu0 %711
      %713 = vrot.lane.b32.xlu0 %v632, 65
      %v714 = vpop.permute.xlu0 %713
      %715 = vrot.lane.b32.xlu0 %v633, 65
      %v716 = vpop.permute.xlu0 %715
      %717 = vrot.lane.b32.xlu0 %v634, 65
      %v718 = vpop.permute.xlu0 %717
      %719 = vrot.lane.b32.xlu0 %v635, 65
      %v720 = vpop.permute.xlu0 %719
      %721 = vrot.lane.b32.xlu0 %v630, 65
      %v722 = vpop.permute.xlu0 %721
      %723 = vrot.lane.b32.xlu0 %v647, 65
      %v724 = vpop.permute.xlu0 %723
      %725 = vrot.lane.b32.xlu0 %v648, 65
      %v726 = vpop.permute.xlu0 %725
      %727 = vrot.lane.b32.xlu0 %v649, 65
      %v728 = vpop.permute.xlu0 %727
      %729 = vrot.lane.b32.xlu0 %v650, 65
      %v730 = vpop.permute.xlu0 %729
      %731 = vrot.lane.b32.xlu0 %v645, 65
      %v732 = vpop.permute.xlu0 %731
      %733 = vrot.lane.b32.xlu0 %v662, 65
      %v734 = vpop.permute.xlu0 %733
      %735 = vrot.lane.b32.xlu0 %v663, 65
      %v736 = vpop.permute.xlu0 %735
      %737 = vrot.lane.b32.xlu0 %v664, 65
      %v738 = vpop.permute.xlu0 %737
      %739 = vrot.lane.b32.xlu0 %v665, 65
      %v740 = vpop.permute.xlu0 %739
      %741 = vrot.lane.b32.xlu0 %v660, 65
      %v742 = vpop.permute.xlu0 %741
      %vm743 = vcmask 531456
      %v744 = vsel %vm743, %v674, %v676
      %v745 = vsel %vm743, %v676, %v678
      %v746 = vsel %vm743, %v678, %v680
      %v747 = vsel %vm743, %v680, %v682
      %v748 = vsel %vm743, %v684, %v686
      %v749 = vsel %vm743, %v686, %v688
      %v750 = vsel %vm743, %v688, %v690
      %v751 = vsel %vm743, %v690, %v692
      %v752 = vsel %vm743, %v694, %v696
      %v753 = vsel %vm743, %v696, %v698
      %v754 = vsel %vm743, %v698, %v700
      %v755 = vsel %vm743, %v700, %v702
      %v756 = vsel %vm743, %v704, %v706
      %v757 = vsel %vm743, %v706, %v708
      %v758 = vsel %vm743, %v708, %v710
      %v759 = vsel %vm743, %v710, %v712
      %v760 = vsel %vm743, %v714, %v716
      %v761 = vsel %vm743, %v716, %v718
      %v762 = vsel %vm743, %v718, %v720
      %v763 = vsel %vm743, %v720, %v722
      %v764 = vsel %vm743, %v724, %v726
      %v765 = vsel %vm743, %v726, %v728
      %v766 = vsel %vm743, %v728, %v730
      %v767 = vsel %vm743, %v730, %v732
      %v768 = vsel %vm743, %v734, %v736
      %v769 = vsel %vm743, %v736, %v738
      %v770 = vsel %vm743, %v738, %v740
      %v771 = vsel %vm743, %v740, %v742
      %vm800 = vcmask 457728
      %v802 = vsel %vm800, %v666, 0
      %804 = vmatpush.msra.mxu0 0.0
      %805 = vmatpush.msra.mxu0 0.0
      %806 = vmatpush.msra.mxu0 0.0
      %807 = vmatpush.msra.mxu0 0.0
      %808 = vmatpush.msra.mxu0 0.0
      %809 = vmatpush.msra.mxu0 0.0
      %810 = vmatpush.msra.mxu0 0.0
      %811 = vmatpush.msra.mxu0 0.0
      %812 = vmatpush.msra.mxu0 0.0
      %813 = vmatpush.msra.mxu0 %v768
      %814 = vmatpush.msra.mxu0 %v764
      %815 = vmatpush.msra.mxu0 %v760
      %816 = vmatpush.msra.mxu0 %v756
      %817 = vmatpush.msra.mxu0 %v752
      %818 = vmatpush.msra.mxu0 %v748
      %819 = vmatpush.msra.mxu0 %v744
      %820 = vmatmul.f32.gmra.mxu0 %v802
      %v821 = vpop.f32.mrf.mxu0
      %v822 = vadd.f32 %v671, %v821
      %823 = vdwg.mxu0
      %824 = vmatpush.msra.mxu0 0.0
      %825 = vmatpush.msra.mxu0 0.0
      %826 = vmatpush.msra.mxu0 0.0
      %827 = vmatpush.msra.mxu0 0.0
      %828 = vmatpush.msra.mxu0 0.0
      %829 = vmatpush.msra.mxu0 0.0
      %830 = vmatpush.msra.mxu0 0.0
      %831 = vmatpush.msra.mxu0 0.0
      %832 = vmatpush.msra.mxu0 0.0
      %833 = vmatpush.msra.mxu0 %v769
      %834 = vmatpush.msra.mxu0 %v765
      %835 = vmatpush.msra.mxu0 %v761
      %836 = vmatpush.msra.mxu0 %v757
      %837 = vmatpush.msra.mxu0 %v753
      %838 = vmatpush.msra.mxu0 %v749
      %839 = vmatpush.msra.mxu0 %v745
      %840 = vmatmul.f32.gmra.mxu0 %v802
      %v841 = vpop.f32.mrf.mxu0
      %v842 = vadd.f32 %v671, %v841
      %843 = vdwg.mxu0
      %844 = vmatpush.msra.mxu0 0.0
      %845 = vmatpush.msra.mxu0 0.0
      %846 = vmatpush.msra.mxu0 0.0
      %847 = vmatpush.msra.mxu0 0.0
      %848 = vmatpush.msra.mxu0 0.0
      %849 = vmatpush.msra.mxu0 0.0
      %850 = vmatpush.msra.mxu0 0.0
      %851 = vmatpush.msra.mxu0 0.0
      %852 = vmatpush.msra.mxu0 0.0
      %853 = vmatpush.msra.mxu0 %v770
      %854 = vmatpush.msra.mxu0 %v766
      %855 = vmatpush.msra.mxu0 %v762
      %856 = vmatpush.msra.mxu0 %v758
      %857 = vmatpush.msra.mxu0 %v754
      %858 = vmatpush.msra.mxu0 %v750
      %859 = vmatpush.msra.mxu0 %v746
      %860 = vmatmul.f32.gmra.mxu0 %v802
      %v861 = vpop.f32.mrf.mxu0
      %v862 = vadd.f32 %v671, %v861
      %863 = vdwg.mxu0
      %864 = vmatpush.msra.mxu0 0.0
      %865 = vmatpush.msra.mxu0 0.0
      %866 = vmatpush.msra.mxu0 0.0
      %867 = vmatpush.msra.mxu0 0.0
      %868 = vmatpush.msra.mxu0 0.0
      %869 = vmatpush.msra.mxu0 0.0
      %870 = vmatpush.msra.mxu0 0.0
      %871 = vmatpush.msra.mxu0 0.0
      %872 = vmatpush.msra.mxu0 0.0
      %873 = vmatpush.msra.mxu0 %v771
      %874 = vmatpush.msra.mxu0 %v767
      %875 = vmatpush.msra.mxu0 %v763
      %876 = vmatpush.msra.mxu0 %v759
      %877 = vmatpush.msra.mxu0 %v755
      %878 = vmatpush.msra.mxu0 %v751
      %879 = vmatpush.msra.mxu0 %v747
      %880 = vmatmul.f32.gmra.mxu0 %v802
      %v881 = vpop.f32.mrf.mxu0
      %v882 = vadd.f32 %v671, %v881
      %883 = vdwg.mxu0
      %v884 = vmax.f32 %v822, 0.0
      %v885 = vmax.f32 %v842, 0.0
      %v886 = vmax.f32 %v862, 0.0
      %v887 = vmax.f32 %v882, 0.0
      %v889 = vperm.slane %v565, 0
      %v890 = vperm.slane %v565, 1
      %v891 = vperm.slane %v565, 2
      %v892 = vperm.slane %v565, 3
      %v897 = vmul.f32 %v884, %v889
      %v898 = vmul.f32 %v885, %v890
      %v899 = vmul.f32 %v886, %v891
      %v900 = vmul.f32 %v887, %v892
      %904 = vrot.lane.b32.xlu0 %v897, 106
      %v905 = vpop.permute.xlu0 %904
      %906 = vrot.lane.b32.xlu0 %v898, 106
      %v907 = vpop.permute.xlu0 %906
      %908 = vrot.lane.b32.xlu0 %v899, 106
      %v909 = vpop.permute.xlu0 %908
      %vm910 = vcmask 867328
      %v911 = vsel %vm910, %v905, %v907
      %v912 = vsel %vm910, %v907, %v909
      %914 = vrot.lane.b32.xlu0 %v897, 84
      %v915 = vpop.permute.xlu0 %914
      %916 = vrot.lane.b32.xlu0 %v898, 84
      %v917 = vpop.permute.xlu0 %916
      %918 = vrot.lane.b32.xlu0 %v899, 84
      %v919 = vpop.permute.xlu0 %918
      %920 = vrot.lane.b32.xlu0 %v900, 84
      %v921 = vpop.permute.xlu0 %920
      %vm922 = vcmask 687104
      %v923 = vsel %vm922, %v915, %v917
      %v924 = vsel %vm922, %v917, %v919
      %v925 = vsel %vm922, %v919, %v921
      %926 = vrot.lane.b32.xlu0 %v897, 62
      %v927 = vpop.permute.xlu0 %926
      %928 = vrot.lane.b32.xlu0 %v898, 62
      %v929 = vpop.permute.xlu0 %928
      %930 = vrot.lane.b32.xlu0 %v899, 62
      %v931 = vpop.permute.xlu0 %930
      %932 = vrot.lane.b32.xlu0 %v900, 62
      %v933 = vpop.permute.xlu0 %932
      %vm934 = vcmask 506880
      %v935 = vsel %vm934, %v927, %v929
      %v936 = vsel %vm934, %v929, %v931
      %v937 = vsel %vm934, %v931, %v933
      %938 = vrot.lane.b32.xlu0 %v897, 40
      %v939 = vpop.permute.xlu0 %938
      %940 = vrot.lane.b32.xlu0 %v898, 40
      %v941 = vpop.permute.xlu0 %940
      %942 = vrot.lane.b32.xlu0 %v899, 40
      %v943 = vpop.permute.xlu0 %942
      %944 = vrot.lane.b32.xlu0 %v900, 40
      %v945 = vpop.permute.xlu0 %944
      %vm946 = vcmask 326656
      %v947 = vsel %vm946, %v939, %v941
      %v948 = vsel %vm946, %v941, %v943
      %v949 = vsel %vm946, %v943, %v945
      %950 = vrot.lane.b32.xlu0 %v897, 18
      %v951 = vpop.permute.xlu0 %950
      %952 = vrot.lane.b32.xlu0 %v898, 18
      %v953 = vpop.permute.xlu0 %952
      %954 = vrot.lane.b32.xlu0 %v899, 18
      %v955 = vpop.permute.xlu0 %954
      %956 = vrot.lane.b32.xlu0 %v900, 18
      %v957 = vpop.permute.xlu0 %956
      %vm958 = vcmask 146432
      %v959 = vsel %vm958, %v951, %v953
      %v960 = vsel %vm958, %v953, %v955
      %v961 = vsel %vm958, %v955, %v957
      %962 = vrot.lane.b32.xlu0 %v898, 124
      %v963 = vpop.permute.xlu0 %962
      %964 = vrot.lane.b32.xlu0 %v899, 124
      %v965 = vpop.permute.xlu0 %964
      %966 = vrot.lane.b32.xlu0 %v900, 124
      %v967 = vpop.permute.xlu0 %966
      %v968 = vsel %vm631, %v963, %v965
      %v969 = vsel %vm631, %v965, %v967
      %v970 = vld [vmem:[%s9] sm:$0x1]
      %v971 = vld [vmem:[#allocation2] sm:$0xff]
      %v972 = vld [vmem:[#allocation2 + $0x8] sm:$0xff]
      %v973 = vld [vmem:[#allocation2 + $0x10] sm:$0xff]
      %v974 = vld [vmem:[#allocation2 + $0x18] sm:$0xff]
      %975 = vrot.lane.b32.xlu0 %v567, 106
      %v976 = vpop.permute.xlu0 %975
      %977 = vrot.lane.b32.xlu0 %v568, 106
      %v978 = vpop.permute.xlu0 %977
      %979 = vrot.lane.b32.xlu0 %v569, 106
      %v980 = vpop.permute.xlu0 %979
      %981 = vrot.lane.b32.xlu0 %v570, 106
      %v982 = vpop.permute.xlu0 %981
      %983 = vrot.lane.b32.xlu0 %v571, 106
      %v984 = vpop.permute.xlu0 %983
      %v985 = vsel %vm910, %v976, %v978
      %v986 = vsel %vm910, %v978, %v980
      %v987 = vsel %vm910, %v980, %v982
      %v988 = vsel %vm910, %v982, %v984
      %993 = vrot.lane.b32.xlu0 %v567, 84
      %v994 = vpop.permute.xlu0 %993
      %995 = vrot.lane.b32.xlu0 %v568, 84
      %v996 = vpop.permute.xlu0 %995
      %997 = vrot.lane.b32.xlu0 %v569, 84
      %v998 = vpop.permute.xlu0 %997
      %999 = vrot.lane.b32.xlu0 %v570, 84
      %v1000 = vpop.permute.xlu0 %999
      %1001 = vrot.lane.b32.xlu0 %v571, 84
      %v1002 = vpop.permute.xlu0 %1001
      %v1003 = vsel %vm922, %v994, %v996
      %v1004 = vsel %vm922, %v996, %v998
      %v1005 = vsel %vm922, %v998, %v1000
      %v1006 = vsel %vm922, %v1000, %v1002
      %1011 = vrot.lane.b32.xlu0 %v567, 62
      %v1012 = vpop.permute.xlu0 %1011
      %1013 = vrot.lane.b32.xlu0 %v568, 62
      %v1014 = vpop.permute.xlu0 %1013
      %1015 = vrot.lane.b32.xlu0 %v569, 62
      %v1016 = vpop.permute.xlu0 %1015
      %1017 = vrot.lane.b32.xlu0 %v570, 62
      %v1018 = vpop.permute.xlu0 %1017
      %1019 = vrot.lane.b32.xlu0 %v571, 62
      %v1020 = vpop.permute.xlu0 %1019
      %v1021 = vsel %vm934, %v1012, %v1014
      %v1022 = vsel %vm934, %v1014, %v1016
      %v1023 = vsel %vm934, %v1016, %v1018
      %v1024 = vsel %vm934, %v1018, %v1020
      %1029 = vrot.lane.b32.xlu0 %v567, 40
      %v1030 = vpop.permute.xlu0 %1029
      %1031 = vrot.lane.b32.xlu0 %v568, 40
      %v1032 = vpop.permute.xlu0 %1031
      %1033 = vrot.lane.b32.xlu0 %v569, 40
      %v1034 = vpop.permute.xlu0 %1033
      %1035 = vrot.lane.b32.xlu0 %v570, 40
      %v1036 = vpop.permute.xlu0 %1035
      %1037 = vrot.lane.b32.xlu0 %v571, 40
      %v1038 = vpop.permute.xlu0 %1037
      %v1039 = vsel %vm946, %v1030, %v1032
      %v1040 = vsel %vm946, %v1032, %v1034
      %v1041 = vsel %vm946, %v1034, %v1036
      %v1042 = vsel %vm946, %v1036, %v1038
      %1047 = vrot.lane.b32.xlu0 %v567, 18
      %v1048 = vpop.permute.xlu0 %1047
      %1049 = vrot.lane.b32.xlu0 %v568, 18
      %v1050 = vpop.permute.xlu0 %1049
      %1051 = vrot.lane.b32.xlu0 %v569, 18
      %v1052 = vpop.permute.xlu0 %1051
      %1053 = vrot.lane.b32.xlu0 %v570, 18
      %v1054 = vpop.permute.xlu0 %1053
      %1055 = vrot.lane.b32.xlu0 %v571, 18
      %v1056 = vpop.permute.xlu0 %1055
      %v1057 = vsel %vm958, %v1048, %v1050
      %v1058 = vsel %vm958, %v1050, %v1052
      %v1059 = vsel %vm958, %v1052, %v1054
      %v1060 = vsel %vm958, %v1054, %v1056
      %v1069 = vld [vmem:[%s5] sm:$0xff]
      %v1070 = vld [vmem:[%s6] sm:$0xff]
      %1072 = vset.pattern.permute.xlu0 0
      %1073 = vperm.xlu0 %1072, %v1070
      %v1074 = vpop.permute.xlu0 %1073
      %v1077 = vsel %vm800, %v1069, 0
      %1079 = vmatpush.msra.mxu0 0.0
      %1080 = vmatpush.msra.mxu0 0.0
      %1081 = vmatpush.msra.mxu0 0.0
      %1082 = vmatpush.msra.mxu0 0.0
      %1083 = vmatpush.msra.mxu0 0.0
      %1084 = vmatpush.msra.mxu0 0.0
      %1085 = vmatpush.msra.mxu0 0.0
      %1086 = vmatpush.msra.mxu0 0.0
      %1087 = vmatpush.msra.mxu0 0.0
      %1088 = vmatpush.msra.mxu0 %v633
      %1089 = vmatpush.msra.mxu0 %v1057
      %1090 = vmatpush.msra.mxu0 %v1039
      %1091 = vmatpush.msra.mxu0 %v1021
      %1092 = vmatpush.msra.mxu0 %v1003
      %1093 = vmatpush.msra.mxu0 %v985
      %1094 = vmatpush.msra.mxu0 %v971
      %1095 = vmatmul.f32.gmra.mxu0 %v1077
      %v1096 = vpop.f32.mrf.mxu0
      %v1097 = vadd.f32 %v1074, %v1096
      %1098 = vdwg.mxu0
      %1099 = vmatpush.msra.mxu0 0.0
      %1100 = vmatpush.msra.mxu0 0.0
      %1101 = vmatpush.msra.mxu0 0.0
      %1102 = vmatpush.msra.mxu0 0.0
      %1103 = vmatpush.msra.mxu0 0.0
      %1104 = vmatpush.msra.mxu0 0.0
      %1105 = vmatpush.msra.mxu0 0.0
      %1106 = vmatpush.msra.mxu0 0.0
      %1107 = vmatpush.msra.mxu0 0.0
      %1108 = vmatpush.msra.mxu0 %v634
      %1109 = vmatpush.msra.mxu0 %v1058
      %1110 = vmatpush.msra.mxu0 %v1040
      %1111 = vmatpush.msra.mxu0 %v1022
      %1112 = vmatpush.msra.mxu0 %v1004
      %1113 = vmatpush.msra.mxu0 %v986
      %1114 = vmatpush.msra.mxu0 %v972
      %1115 = vmatmul.f32.gmra.mxu0 %v1077
      %v1116 = vpop.f32.mrf.mxu0
      %v1117 = vadd.f32 %v1074, %v1116
      %1118 = vdwg.mxu0
      %1119 = vmatpush.msra.mxu0 0.0
      %1120 = vmatpush.msra.mxu0 0.0
      %1121 = vmatpush.msra.mxu0 0.0
      %1122 = vmatpush.msra.mxu0 0.0
      %1123 = vmatpush.msra.mxu0 0.0
      %1124 = vmatpush.msra.mxu0 0.0
      %1125 = vmatpush.msra.mxu0 0.0
      %1126 = vmatpush.msra.mxu0 0.0
      %1127 = vmatpush.msra.mxu0 0.0
      %1128 = vmatpush.msra.mxu0 %v635
      %1129 = vmatpush.msra.mxu0 %v1059
      %1130 = vmatpush.msra.mxu0 %v1041
      %1131 = vmatpush.msra.mxu0 %v1023
      %1132 = vmatpush.msra.mxu0 %v1005
      %1133 = vmatpush.msra.mxu0 %v987
      %1134 = vmatpush.msra.mxu0 %v973
      %1135 = vmatmul.f32.gmra.mxu0 %v1077
      %v1136 = vpop.f32.mrf.mxu0
      %v1137 = vadd.f32 %v1074, %v1136
      %1138 = vdwg.mxu0
      %1139 = vmatpush.msra.mxu0 0.0
      %1140 = vmatpush.msra.mxu0 0.0
      %1141 = vmatpush.msra.mxu0 0.0
      %1142 = vmatpush.msra.mxu0 0.0
      %1143 = vmatpush.msra.mxu0 0.0
      %1144 = vmatpush.msra.mxu0 0.0
      %1145 = vmatpush.msra.mxu0 0.0
      %1146 = vmatpush.msra.mxu0 0.0
      %1147 = vmatpush.msra.mxu0 0.0
      %1148 = vmatpush.msra.mxu0 %v630
      %1149 = vmatpush.msra.mxu0 %v1060
      %1150 = vmatpush.msra.mxu0 %v1042
      %1151 = vmatpush.msra.mxu0 %v1024
      %1152 = vmatpush.msra.mxu0 %v1006
      %1153 = vmatpush.msra.mxu0 %v988
      %1154 = vmatpush.msra.mxu0 %v974
      %1155 = vmatmul.f32.gmra.mxu0 %v1077
      %v1156 = vpop.f32.mrf.mxu0
      %v1157 = vadd.f32 %v1074, %v1156
      %1158 = vdwg.mxu0
      %v1159 = vmax.f32 %v1097, 0.0
      %v1160 = vmax.f32 %v1117, 0.0
      %v1161 = vmax.f32 %v1137, 0.0
      %v1162 = vmax.f32 %v1157, 0.0
      %v1164 = vperm.slane %v566, 0
      %v1165 = vperm.slane %v566, 1
      %v1166 = vperm.slane %v566, 2
      %v1167 = vperm.slane %v566, 3
      %v1172 = vmul.f32 %v1159, %v1164
      %v1173 = vmul.f32 %v1160, %v1165
      %v1174 = vmul.f32 %v1161, %v1166
      %v1175 = vmul.f32 %v1162, %v1167
      %1180 = vrot.lane.b32.xlu0 %v1172, 127
      %v1181 = vpop.permute.xlu0 %1180
      %1182 = vrot.lane.b32.xlu0 %v1173, 127
      %v1183 = vpop.permute.xlu0 %1182
      %1184 = vrot.lane.b32.xlu0 %v1174, 127
      %v1185 = vpop.permute.xlu0 %1184
      %1186 = vrot.lane.b32.xlu0 %v1175, 127
      %v1187 = vpop.permute.xlu0 %1186
      %v1188 = vsel %vm587, %v1181, %v1183
      %v1189 = vsel %vm587, %v1183, %v1185
      %v1190 = vsel %vm587, %v1185, %v1187
      %1191 = vrot.lane.b32.xlu0 %v1172, 126
      %v1192 = vpop.permute.xlu0 %1191
      %1193 = vrot.lane.b32.xlu0 %v1173, 126
      %v1194 = vpop.permute.xlu0 %1193
      %1195 = vrot.lane.b32.xlu0 %v1174, 126
      %v1196 = vpop.permute.xlu0 %1195
      %1197 = vrot.lane.b32.xlu0 %v1175, 126
      %v1198 = vpop.permute.xlu0 %1197
      %v1199 = vsel %vm447, %v1192, %v1194
      %v1200 = vsel %vm447, %v1194, %v1196
      %v1201 = vsel %vm447, %v1196, %v1198
      %1202 = vrot.lane.b32.xlu0 %v1172, 125
      %v1203 = vpop.permute.xlu0 %1202
      %1204 = vrot.lane.b32.xlu0 %v1173, 125
      %v1205 = vpop.permute.xlu0 %1204
      %1206 = vrot.lane.b32.xlu0 %v1174, 125
      %v1207 = vpop.permute.xlu0 %1206
      %1208 = vrot.lane.b32.xlu0 %v1175, 125
      %v1209 = vpop.permute.xlu0 %1208
      %v1210 = vsel %vm616, %v1203, %v1205
      %v1211 = vsel %vm616, %v1205, %v1207
      %v1212 = vsel %vm616, %v1207, %v1209
      %1213 = vrot.lane.b32.xlu0 %v1172, 124
      %v1214 = vpop.permute.xlu0 %1213
      %1215 = vrot.lane.b32.xlu0 %v1173, 124
      %v1216 = vpop.permute.xlu0 %1215
      %1217 = vrot.lane.b32.xlu0 %v1174, 124
      %v1218 = vpop.permute.xlu0 %1217
      %1219 = vrot.lane.b32.xlu0 %v1175, 124
      %v1220 = vpop.permute.xlu0 %1219
      %v1221 = vsel %vm631, %v1214, %v1216
      %v1222 = vsel %vm631, %v1216, %v1218
      %v1223 = vsel %vm631, %v1218, %v1220
      %1224 = vrot.lane.b32.xlu0 %v1172, 123
      %v1225 = vpop.permute.xlu0 %1224
      %1226 = vrot.lane.b32.xlu0 %v1173, 123
      %v1227 = vpop.permute.xlu0 %1226
      %1228 = vrot.lane.b32.xlu0 %v1174, 123
      %v1229 = vpop.permute.xlu0 %1228
      %1230 = vrot.lane.b32.xlu0 %v1175, 123
      %v1231 = vpop.permute.xlu0 %1230
      %v1232 = vsel %vm646, %v1225, %v1227
      %v1233 = vsel %vm646, %v1227, %v1229
      %v1234 = vsel %vm646, %v1229, %v1231
      %1235 = vrot.lane.b32.xlu0 %v1172, 122
      %v1236 = vpop.permute.xlu0 %1235
      %1237 = vrot.lane.b32.xlu0 %v1173, 122
      %v1238 = vpop.permute.xlu0 %1237
      %1239 = vrot.lane.b32.xlu0 %v1174, 122
      %v1240 = vpop.permute.xlu0 %1239
      %1241 = vrot.lane.b32.xlu0 %v1175, 122
      %v1242 = vpop.permute.xlu0 %1241
      %v1243 = vsel %vm661, %v1236, %v1238
      %v1244 = vsel %vm661, %v1238, %v1240
      %v1245 = vsel %vm661, %v1240, %v1242
      %v1246 = vld [vmem:[%s10] sm:$0x1]
      %1247 = vrot.lane.b32.xlu0 %v1172, 62
      %v1248 = vpop.permute.xlu0 %1247
      %1249 = vrot.lane.b32.xlu0 %v1173, 62
      %v1250 = vpop.permute.xlu0 %1249
      %1251 = vrot.lane.b32.xlu0 %v1174, 62
      %v1252 = vpop.permute.xlu0 %1251
      %1253 = vrot.lane.b32.xlu0 %v1175, 62
      %v1254 = vpop.permute.xlu0 %1253
      %1255 = vrot.lane.b32.xlu0 %v1188, 62
      %v1256 = vpop.permute.xlu0 %1255
      %1257 = vrot.lane.b32.xlu0 %v1189, 62
      %v1258 = vpop.permute.xlu0 %1257
      %1259 = vrot.lane.b32.xlu0 %v1190, 62
      %v1260 = vpop.permute.xlu0 %1259
      %1261 = vrot.lane.b32.xlu0 %v1187, 62
      %v1262 = vpop.permute.xlu0 %1261
      %1263 = vrot.lane.b32.xlu0 %v1199, 62
      %v1264 = vpop.permute.xlu0 %1263
      %1265 = vrot.lane.b32.xlu0 %v1200, 62
      %v1266 = vpop.permute.xlu0 %1265
      %1267 = vrot.lane.b32.xlu0 %v1201, 62
      %v1268 = vpop.permute.xlu0 %1267
      %1269 = vrot.lane.b32.xlu0 %v1198, 62
      %v1270 = vpop.permute.xlu0 %1269
      %1271 = vrot.lane.b32.xlu0 %v1210, 62
      %v1272 = vpop.permute.xlu0 %1271
      %1273 = vrot.lane.b32.xlu0 %v1211, 62
      %v1274 = vpop.permute.xlu0 %1273
      %1275 = vrot.lane.b32.xlu0 %v1212, 62
      %v1276 = vpop.permute.xlu0 %1275
      %1277 = vrot.lane.b32.xlu0 %v1209, 62
      %v1278 = vpop.permute.xlu0 %1277
      %1279 = vrot.lane.b32.xlu0 %v1221, 62
      %v1280 = vpop.permute.xlu0 %1279
      %1281 = vrot.lane.b32.xlu0 %v1222, 62
      %v1282 = vpop.permute.xlu0 %1281
      %1283 = vrot.lane.b32.xlu0 %v1223, 62
      %v1284 = vpop.permute.xlu0 %1283
      %1285 = vrot.lane.b32.xlu0 %v1220, 62
      %v1286 = vpop.permute.xlu0 %1285
      %1287 = vrot.lane.b32.xlu0 %v1232, 62
      %v1288 = vpop.permute.xlu0 %1287
      %1289 = vrot.lane.b32.xlu0 %v1233, 62
      %v1290 = vpop.permute.xlu0 %1289
      %1291 = vrot.lane.b32.xlu0 %v1234, 62
      %v1292 = vpop.permute.xlu0 %1291
      %1293 = vrot.lane.b32.xlu0 %v1231, 62
      %v1294 = vpop.permute.xlu0 %1293
      %1295 = vrot.lane.b32.xlu0 %v1243, 62
      %v1296 = vpop.permute.xlu0 %1295
      %1297 = vrot.lane.b32.xlu0 %v1244, 62
      %v1298 = vpop.permute.xlu0 %1297
      %1299 = vrot.lane.b32.xlu0 %v1245, 62
      %v1300 = vpop.permute.xlu0 %1299
      %1301 = vrot.lane.b32.xlu0 %v1242, 62
      %v1302 = vpop.permute.xlu0 %1301
      %v1303 = vsel %vm934, %v1248, %v1250
      %v1304 = vsel %vm934, %v1250, %v1252
      %v1305 = vsel %vm934, %v1252, %v1254
      %v1306 = vsel %vm934, %v1256, %v1258
      %v1307 = vsel %vm934, %v1258, %v1260
      %v1308 = vsel %vm934, %v1260, %v1262
      %v1309 = vsel %vm934, %v1264, %v1266
      %v1310 = vsel %vm934, %v1266, %v1268
      %v1311 = vsel %vm934, %v1268, %v1270
      %v1312 = vsel %vm934, %v1272, %v1274
      %v1313 = vsel %vm934, %v1274, %v1276
      %v1314 = vsel %vm934, %v1276, %v1278
      %v1315 = vsel %vm934, %v1280, %v1282
      %v1316 = vsel %vm934, %v1282, %v1284
      %v1317 = vsel %vm934, %v1284, %v1286
      %v1318 = vsel %vm934, %v1288, %v1290
      %v1319 = vsel %vm934, %v1290, %v1292
      %v1320 = vsel %vm934, %v1292, %v1294
      %v1321 = vsel %vm934, %v1296, %v1298
      %v1322 = vsel %vm934, %v1298, %v1300
      %v1323 = vsel %vm934, %v1300, %v1302
      %v1346 = vsel %vm800, %v1246, 0
      %1348 = vmatpush.msra.mxu0 0.0
      %1349 = vmatpush.msra.mxu0 0.0
      %1350 = vmatpush.msra.mxu0 0.0
      %1351 = vmatpush.msra.mxu0 0.0
      %1352 = vmatpush.msra.mxu0 0.0
      %1353 = vmatpush.msra.mxu0 0.0
      %1354 = vmatpush.msra.mxu0 0.0
      %1355 = vmatpush.msra.mxu0 0.0
      %1356 = vmatpush.msra.mxu0 0.0
      %1357 = vmatpush.msra.mxu0 %v1321
      %1358 = vmatpush.msra.mxu0 %v1318
      %1359 = vmatpush.msra.mxu0 %v1315
      %1360 = vmatpush.msra.mxu0 %v1312
      %1361 = vmatpush.msra.mxu0 %v1309
      %1362 = vmatpush.msra.mxu0 %v1306
      %1363 = vmatpush.msra.mxu0 %v1303
      %1364 = vmatmul.f32.gmra.mxu0 %v1346
      %v1365 = vpop.f32.mrf.mxu0
      %v1366 = vadd.f32 0.0, %v1365
      %1367 = vdwg.mxu0
      %1368 = vmatpush.msra.mxu0 0.0
      %1369 = vmatpush.msra.mxu0 0.0
      %1370 = vmatpush.msra.mxu0 0.0
      %1371 = vmatpush.msra.mxu0 0.0
      %1372 = vmatpush.msra.mxu0 0.0
      %1373 = vmatpush.msra.mxu0 0.0
      %1374 = vmatpush.msra.mxu0 0.0
      %1375 = vmatpush.msra.mxu0 0.0
      %1376 = vmatpush.msra.mxu0 0.0
      %1377 = vmatpush.msra.mxu0 %v1322
      %1378 = vmatpush.msra.mxu0 %v1319
      %1379 = vmatpush.msra.mxu0 %v1316
      %1380 = vmatpush.msra.mxu0 %v1313
      %1381 = vmatpush.msra.mxu0 %v1310
      %1382 = vmatpush.msra.mxu0 %v1307
      %1383 = vmatpush.msra.mxu0 %v1304
      %1384 = vmatmul.f32.gmra.mxu0 %v1346
      %v1385 = vpop.f32.mrf.mxu0
      %v1386 = vadd.f32 0.0, %v1385
      %1387 = vdwg.mxu0
      %1388 = vmatpush.msra.mxu0 0.0
      %1389 = vmatpush.msra.mxu0 0.0
      %1390 = vmatpush.msra.mxu0 0.0
      %1391 = vmatpush.msra.mxu0 0.0
      %1392 = vmatpush.msra.mxu0 0.0
      %1393 = vmatpush.msra.mxu0 0.0
      %1394 = vmatpush.msra.mxu0 0.0
      %1395 = vmatpush.msra.mxu0 0.0
      %1396 = vmatpush.msra.mxu0 0.0
      %1397 = vmatpush.msra.mxu0 %v1323
      %1398 = vmatpush.msra.mxu0 %v1320
      %1399 = vmatpush.msra.mxu0 %v1317
      %1400 = vmatpush.msra.mxu0 %v1314
      %1401 = vmatpush.msra.mxu0 %v1311
      %1402 = vmatpush.msra.mxu0 %v1308
      %1403 = vmatpush.msra.mxu0 %v1305
      %1404 = vmatmul.f32.gmra.mxu0 %v1346
      %v1405 = vpop.f32.mrf.mxu0
      %v1406 = vadd.f32 0.0, %v1405
      %1407 = vdwg.mxu0
      %1408 = vrot.lane.b32.xlu0 %v897, 125
      %v1409 = vpop.permute.xlu0 %1408
      %1410 = vrot.lane.b32.xlu0 %v898, 125
      %v1411 = vpop.permute.xlu0 %1410
      %1412 = vrot.lane.b32.xlu0 %v899, 125
      %v1413 = vpop.permute.xlu0 %1412
      %1414 = vrot.lane.b32.xlu0 %v911, 125
      %v1415 = vpop.permute.xlu0 %1414
      %1416 = vrot.lane.b32.xlu0 %v912, 125
      %v1417 = vpop.permute.xlu0 %1416
      %1418 = vrot.lane.b32.xlu0 %v909, 125
      %v1419 = vpop.permute.xlu0 %1418
      %1420 = vrot.lane.b32.xlu0 %v923, 125
      %v1421 = vpop.permute.xlu0 %1420
      %1422 = vrot.lane.b32.xlu0 %v924, 125
      %v1423 = vpop.permute.xlu0 %1422
      %1424 = vrot.lane.b32.xlu0 %v925, 125
      %v1425 = vpop.permute.xlu0 %1424
      %1426 = vrot.lane.b32.xlu0 %v935, 125
      %v1427 = vpop.permute.xlu0 %1426
      %1428 = vrot.lane.b32.xlu0 %v936, 125
      %v1429 = vpop.permute.xlu0 %1428
      %1430 = vrot.lane.b32.xlu0 %v937, 125
      %v1431 = vpop.permute.xlu0 %1430
      %1432 = vrot.lane.b32.xlu0 %v947, 125
      %v1433 = vpop.permute.xlu0 %1432
      %1434 = vrot.lane.b32.xlu0 %v948, 125
      %v1435 = vpop.permute.xlu0 %1434
      %1436 = vrot.lane.b32.xlu0 %v949, 125
      %v1437 = vpop.permute.xlu0 %1436
      %1438 = vrot.lane.b32.xlu0 %v959, 125
      %v1439 = vpop.permute.xlu0 %1438
      %1440 = vrot.lane.b32.xlu0 %v960, 125
      %v1441 = vpop.permute.xlu0 %1440
      %1442 = vrot.lane.b32.xlu0 %v961, 125
      %v1443 = vpop.permute.xlu0 %1442
      %1444 = vrot.lane.b32.xlu0 %v968, 125
      %v1445 = vpop.permute.xlu0 %1444
      %1446 = vrot.lane.b32.xlu0 %v969, 125
      %v1447 = vpop.permute.xlu0 %1446
      %1448 = vrot.lane.b32.xlu0 %v967, 125
      %v1449 = vpop.permute.xlu0 %1448
      %v1450 = vsel %vm616, %v1409, %v1411
      %v1451 = vsel %vm616, %v1411, %v1413
      %v1452 = vsel %vm616, %v1415, %v1417
      %v1453 = vsel %vm616, %v1417, %v1419
      %v1454 = vsel %vm616, %v1421, %v1423
      %v1455 = vsel %vm616, %v1423, %v1425
      %v1456 = vsel %vm616, %v1427, %v1429
      %v1457 = vsel %vm616, %v1429, %v1431
      %v1458 = vsel %vm616, %v1433, %v1435
      %v1459 = vsel %vm616, %v1435, %v1437
      %v1460 = vsel %vm616, %v1439, %v1441
      %v1461 = vsel %vm616, %v1441, %v1443
      %v1462 = vsel %vm616, %v1445, %v1447
      %v1463 = vsel %vm616, %v1447, %v1449
      %v1486 = vsel %vm800, %v970, 0
      %1488 = vmatpush.msra.mxu0 0.0
      %1489 = vmatpush.msra.mxu0 0.0
      %1490 = vmatpush.msra.mxu0 0.0
      %1491 = vmatpush.msra.mxu0 0.0
      %1492 = vmatpush.msra.mxu0 0.0
      %1493 = vmatpush.msra.mxu0 0.0
      %1494 = vmatpush.msra.mxu0 0.0
      %1495 = vmatpush.msra.mxu0 0.0
      %1496 = vmatpush.msra.mxu0 0.0
      %1497 = vmatpush.msra.mxu0 %v1462
      %1498 = vmatpush.msra.mxu0 %v1460
      %1499 = vmatpush.msra.mxu0 %v1458
      %1500 = vmatpush.msra.mxu0 %v1456
      %1501 = vmatpush.msra.mxu0 %v1454
      %1502 = vmatpush.msra.mxu0 %v1452
      %1503 = vmatpush.msra.mxu0 %v1450
      %1504 = vmatmul.f32.gmra.mxu0 %v1486
      %v1505 = vpop.f32.mrf.mxu0
      %v1506 = vadd.f32 %v1366, %v1505
      %1507 = vdwg.mxu0
      %1508 = vmatpush.msra.mxu0 0.0
      %1509 = vmatpush.msra.mxu0 0.0
      %1510 = vmatpush.msra.mxu0 0.0
      %1511 = vmatpush.msra.mxu0 0.0
      %1512 = vmatpush.msra.mxu0 0.0
      %1513 = vmatpush.msra.mxu0 0.0
      %1514 = vmatpush.msra.mxu0 0.0
      %1515 = vmatpush.msra.mxu0 0.0
      %1516 = vmatpush.msra.mxu0 0.0
      %1517 = vmatpush.msra.mxu0 %v1463
      %1518 = vmatpush.msra.mxu0 %v1461
      %1519 = vmatpush.msra.mxu0 %v1459
      %1520 = vmatpush.msra.mxu0 %v1457
      %1521 = vmatpush.msra.mxu0 %v1455
      %1522 = vmatpush.msra.mxu0 %v1453
      %1523 = vmatpush.msra.mxu0 %v1451
      %1524 = vmatmul.f32.gmra.mxu0 %v1486
      %v1525 = vpop.f32.mrf.mxu0
      %v1526 = vadd.f32 %v1386, %v1525
      %1527 = vdwg.mxu0
      %1528 = vmatpush.msra.mxu0 0.0
      %1529 = vmatpush.msra.mxu0 0.0
      %1530 = vmatpush.msra.mxu0 0.0
      %1531 = vmatpush.msra.mxu0 0.0
      %1532 = vmatpush.msra.mxu0 0.0
      %1533 = vmatpush.msra.mxu0 0.0
      %1534 = vmatpush.msra.mxu0 0.0
      %1535 = vmatpush.msra.mxu0 0.0
      %1536 = vmatpush.msra.mxu0 0.0
      %1537 = vmatpush.msra.mxu0 %v1449
      %1538 = vmatpush.msra.mxu0 %v1443
      %1539 = vmatpush.msra.mxu0 %v1437
      %1540 = vmatpush.msra.mxu0 %v1431
      %1541 = vmatpush.msra.mxu0 %v1425
      %1542 = vmatpush.msra.mxu0 %v1419
      %1543 = vmatpush.msra.mxu0 %v1413
      %1544 = vmatmul.f32.gmra.mxu0 %v1486
      %v1545 = vpop.f32.mrf.mxu0
      %v1546 = vadd.f32 %v1406, %v1545
      %1547 = vdwg.mxu0
      %1548 = vrot.lane.b32.xlu0 %v567, 105
      %v1549 = vpop.permute.xlu0 %1548
      %1550 = vrot.lane.b32.xlu0 %v568, 105
      %v1551 = vpop.permute.xlu0 %1550
      %1552 = vrot.lane.b32.xlu0 %v569, 105
      %v1553 = vpop.permute.xlu0 %1552
      %1554 = vrot.lane.b32.xlu0 %v570, 105
      %v1555 = vpop.permute.xlu0 %1554
      %1556 = vrot.lane.b32.xlu0 %v571, 105
      %v1557 = vpop.permute.xlu0 %1556
      %vm1558 = vcmask 859136
      %v1559 = vsel %vm1558, %v1549, %v1551
      %v1560 = vsel %vm1558, %v1551, %v1553
      %v1561 = vsel %vm1558, %v1553, %v1555
      %v1562 = vsel %vm1558, %v1555, %v1557
      %1563 = vrot.lane.b32.xlu0 %v567, 104
      %v1564 = vpop.permute.xlu0 %1563
      %1565 = vrot.lane.b32.xlu0 %v568, 104
      %v1566 = vpop.permute.xlu0 %1565
      %1567 = vrot.lane.b32.xlu0 %v569, 104
      %v1568 = vpop.permute.xlu0 %1567
      %1569 = vrot.lane.b32.xlu0 %v570, 104
      %v1570 = vpop.permute.xlu0 %1569
      %1571 = vrot.lane.b32.xlu0 %v571, 104
      %v1572 = vpop.permute.xlu0 %1571
      %vm1573 = vcmask 850944
      %v1574 = vsel %vm1573, %v1564, %v1566
      %v1575 = vsel %vm1573, %v1566, %v1568
      %v1576 = vsel %vm1573, %v1568, %v1570
      %v1577 = vsel %vm1573, %v1570, %v1572
      %1578 = vrot.lane.b32.xlu0 %v567, 83
      %v1579 = vpop.permute.xlu0 %1578
      %1580 = vrot.lane.b32.xlu0 %v568, 83
      %v1581 = vpop.permute.xlu0 %1580
      %1582 = vrot.lane.b32.xlu0 %v569, 83
      %v1583 = vpop.permute.xlu0 %1582
      %1584 = vrot.lane.b32.xlu0 %v570, 83
      %v1585 = vpop.permute.xlu0 %1584
      %1586 = vrot.lane.b32.xlu0 %v571, 83
      %v1587 = vpop.permute.xlu0 %1586
      %vm1588 = vcmask 678912
      %v1589 = vsel %vm1588, %v1579, %v1581
      %v1590 = vsel %vm1588, %v1581, %v1583
      %v1591 = vsel %vm1588, %v1583, %v1585
      %v1592 = vsel %vm1588, %v1585, %v1587
      %1593 = vrot.lane.b32.xlu0 %v567, 82
      %v1594 = vpop.permute.xlu0 %1593
      %1595 = vrot.lane.b32.xlu0 %v568, 82
      %v1596 = vpop.permute.xlu0 %1595
      %1597 = vrot.lane.b32.xlu0 %v569, 82
      %v1598 = vpop.permute.xlu0 %1597
      %1599 = vrot.lane.b32.xlu0 %v570, 82
      %v1600 = vpop.permute.xlu0 %1599
      %1601 = vrot.lane.b32.xlu0 %v571, 82
      %v1602 = vpop.permute.xlu0 %1601
      %vm1603 = vcmask 670720
      %v1604 = vsel %vm1603, %v1594, %v1596
      %v1605 = vsel %vm1603, %v1596, %v1598
      %v1606 = vsel %vm1603, %v1598, %v1600
      %v1607 = vsel %vm1603, %v1600, %v1602
      %v1608 = vld [vmem:[%s7] sm:$0xff]
      %v1609 = vld [vmem:[%s8] sm:$0xff]
      %1611 = vset.pattern.permute.xlu0 0
      %1612 = vperm.xlu0 %1611, %v1609
      %v1613 = vpop.permute.xlu0 %1612
      %1615 = vrot.lane.b32.xlu0 %v567, 85
      %v1616 = vpop.permute.xlu0 %1615
      %1617 = vrot.lane.b32.xlu0 %v568, 85
      %v1618 = vpop.permute.xlu0 %1617
      %1619 = vrot.lane.b32.xlu0 %v569, 85
      %v1620 = vpop.permute.xlu0 %1619
      %1621 = vrot.lane.b32.xlu0 %v570, 85
      %v1622 = vpop.permute.xlu0 %1621
      %1623 = vrot.lane.b32.xlu0 %v571, 85
      %v1624 = vpop.permute.xlu0 %1623
      %1625 = vrot.lane.b32.xlu0 %v588, 85
      %v1626 = vpop.permute.xlu0 %1625
      %1627 = vrot.lane.b32.xlu0 %v589, 85
      %v1628 = vpop.permute.xlu0 %1627
      %1629 = vrot.lane.b32.xlu0 %v590, 85
      %v1630 = vpop.permute.xlu0 %1629
      %1631 = vrot.lane.b32.xlu0 %v591, 85
      %v1632 = vpop.permute.xlu0 %1631
      %1633 = vrot.lane.b32.xlu0 %v586, 85
      %v1634 = vpop.permute.xlu0 %1633
      %1635 = vrot.lane.b32.xlu0 %v602, 85
      %v1636 = vpop.permute.xlu0 %1635
      %1637 = vrot.lane.b32.xlu0 %v603, 85
      %v1638 = vpop.permute.xlu0 %1637
      %1639 = vrot.lane.b32.xlu0 %v604, 85
      %v1640 = vpop.permute.xlu0 %1639
      %1641 = vrot.lane.b32.xlu0 %v605, 85
      %v1642 = vpop.permute.xlu0 %1641
      %1643 = vrot.lane.b32.xlu0 %v601, 85
      %v1644 = vpop.permute.xlu0 %1643
      %1645 = vrot.lane.b32.xlu0 %v985, 85
      %v1646 = vpop.permute.xlu0 %1645
      %1647 = vrot.lane.b32.xlu0 %v986, 85
      %v1648 = vpop.permute.xlu0 %1647
      %1649 = vrot.lane.b32.xlu0 %v987, 85
      %v1650 = vpop.permute.xlu0 %1649
      %1651 = vrot.lane.b32.xlu0 %v988, 85
      %v1652 = vpop.permute.xlu0 %1651
      %1653 = vrot.lane.b32.xlu0 %v984, 85
      %v1654 = vpop.permute.xlu0 %1653
      %1655 = vrot.lane.b32.xlu0 %v1559, 85
      %v1656 = vpop.permute.xlu0 %1655
      %1657 = vrot.lane.b32.xlu0 %v1560, 85
      %v1658 = vpop.permute.xlu0 %1657
      %1659 = vrot.lane.b32.xlu0 %v1561, 85
      %v1660 = vpop.permute.xlu0 %1659
      %1661 = vrot.lane.b32.xlu0 %v1562, 85
      %v1662 = vpop.permute.xlu0 %1661
      %1663 = vrot.lane.b32.xlu0 %v1557, 85
      %v1664 = vpop.permute.xlu0 %1663
      %1665 = vrot.lane.b32.xlu0 %v1574, 85
      %v1666 = vpop.permute.xlu0 %1665
      %1667 = vrot.lane.b32.xlu0 %v1575, 85
      %v1668 = vpop.permute.xlu0 %1667
      %1669 = vrot.lane.b32.xlu0 %v1576, 85
      %v1670 = vpop.permute.xlu0 %1669
      %1671 = vrot.lane.b32.xlu0 %v1577, 85
      %v1672 = vpop.permute.xlu0 %1671
      %1673 = vrot.lane.b32.xlu0 %v1572, 85
      %v1674 = vpop.permute.xlu0 %1673
      %1675 = vrot.lane.b32.xlu0 %v1003, 85
      %v1676 = vpop.permute.xlu0 %1675
      %1677 = vrot.lane.b32.xlu0 %v1004, 85
      %v1678 = vpop.permute.xlu0 %1677
      %1679 = vrot.lane.b32.xlu0 %v1005, 85
      %v1680 = vpop.permute.xlu0 %1679
      %1681 = vrot.lane.b32.xlu0 %v1006, 85
      %v1682 = vpop.permute.xlu0 %1681
      %1683 = vrot.lane.b32.xlu0 %v1002, 85
      %v1684 = vpop.permute.xlu0 %1683
      %1685 = vrot.lane.b32.xlu0 %v1589, 85
      %v1686 = vpop.permute.xlu0 %1685
      %1687 = vrot.lane.b32.xlu0 %v1590, 85
      %v1688 = vpop.permute.xlu0 %1687
      %1689 = vrot.lane.b32.xlu0 %v1591, 85
      %v1690 = vpop.permute.xlu0 %1689
      %1691 = vrot.lane.b32.xlu0 %v1592, 85
      %v1692 = vpop.permute.xlu0 %1691
      %1693 = vrot.lane.b32.xlu0 %v1587, 85
      %v1694 = vpop.permute.xlu0 %1693
      %1695 = vrot.lane.b32.xlu0 %v1604, 85
      %v1696 = vpop.permute.xlu0 %1695
      %1697 = vrot.lane.b32.xlu0 %v1605, 85
      %v1698 = vpop.permute.xlu0 %1697
      %1699 = vrot.lane.b32.xlu0 %v1606, 85
      %v1700 = vpop.permute.xlu0 %1699
      %1701 = vrot.lane.b32.xlu0 %v1607, 85
      %v1702 = vpop.permute.xlu0 %1701
      %1703 = vrot.lane.b32.xlu0 %v1602, 85
      %v1704 = vpop.permute.xlu0 %1703
      %vm1705 = vcmask 695296
      %v1706 = vsel %vm1705, %v1616, %v1618
      %v1707 = vsel %vm1705, %v1618, %v1620
      %v1708 = vsel %vm1705, %v1620, %v1622
      %v1709 = vsel %vm1705, %v1622, %v1624
      %v1710 = vsel %vm1705, %v1626, %v1628
      %v1711 = vsel %vm1705, %v1628, %v1630
      %v1712 = vsel %vm1705, %v1630, %v1632
      %v1713 = vsel %vm1705, %v1632, %v1634
      %v1714 = vsel %vm1705, %v1636, %v1638
      %v1715 = vsel %vm1705, %v1638, %v1640
      %v1716 = vsel %vm1705, %v1640, %v1642
      %v1717 = vsel %vm1705, %v1642, %v1644
      %v1718 = vsel %vm1705, %v1646, %v1648
      %v1719 = vsel %vm1705, %v1648, %v1650
      %v1720 = vsel %vm1705, %v1650, %v1652
      %v1721 = vsel %vm1705, %v1652, %v1654
      %v1722 = vsel %vm1705, %v1656, %v1658
      %v1723 = vsel %vm1705, %v1658, %v1660
      %v1724 = vsel %vm1705, %v1660, %v1662
      %v1725 = vsel %vm1705, %v1662, %v1664
      %v1726 = vsel %vm1705, %v1666, %v1668
      %v1727 = vsel %vm1705, %v1668, %v1670
      %v1728 = vsel %vm1705, %v1670, %v1672
      %v1729 = vsel %vm1705, %v1672, %v1674
      %v1730 = vsel %vm1705, %v1676, %v1678
      %v1731 = vsel %vm1705, %v1678, %v1680
      %v1732 = vsel %vm1705, %v1680, %v1682
      %v1733 = vsel %vm1705, %v1682, %v1684
      %v1734 = vsel %vm1705, %v1686, %v1688
      %v1735 = vsel %vm1705, %v1688, %v1690
      %v1736 = vsel %vm1705, %v1690, %v1692
      %v1737 = vsel %vm1705, %v1692, %v1694
      %v1738 = vsel %vm1705, %v1696, %v1698
      %v1739 = vsel %vm1705, %v1698, %v1700
      %v1740 = vsel %vm1705, %v1700, %v1702
      %v1741 = vsel %vm1705, %v1702, %v1704
      %vm1778 = vcmask 588800
      %v1780 = vsel %vm1778, %v1608, 0
      %1782 = vmatpush.msra.mxu0 0.0
      %1783 = vmatpush.msra.mxu0 0.0
      %1784 = vmatpush.msra.mxu0 0.0
      %1785 = vmatpush.msra.mxu0 0.0
      %1786 = vmatpush.msra.mxu0 0.0
      %1787 = vmatpush.msra.mxu0 0.0
      %1788 = vmatpush.msra.mxu0 0.0
      %1789 = vmatpush.msra.mxu0 %v1738
      %1790 = vmatpush.msra.mxu0 %v1734
      %1791 = vmatpush.msra.mxu0 %v1730
      %1792 = vmatpush.msra.mxu0 %v1726
      %1793 = vmatpush.msra.mxu0 %v1722
      %1794 = vmatpush.msra.mxu0 %v1718
      %1795 = vmatpush.msra.mxu0 %v1714
      %1796 = vmatpush.msra.mxu0 %v1710
      %1797 = vmatpush.msra.mxu0 %v1706
      %1798 = vmatmul.f32.gmra.mxu0 %v1780
      %v1799 = vpop.f32.mrf.mxu0
      %v1800 = vadd.f32 %v1613, %v1799
      %1801 = vdwg.mxu0
      %1802 = vmatpush.msra.mxu0 0.0
      %1803 = vmatpush.msra.mxu0 0.0
      %1804 = vmatpush.msra.mxu0 0.0
      %1805 = vmatpush.msra.mxu0 0.0
      %1806 = vmatpush.msra.mxu0 0.0
      %1807 = vmatpush.msra.mxu0 0.0
      %1808 = vmatpush.msra.mxu0 0.0
      %1809 = vmatpush.msra.mxu0 %v1739
      %1810 = vmatpush.msra.mxu0 %v1735
      %1811 = vmatpush.msra.mxu0 %v1731
      %1812 = vmatpush.msra.mxu0 %v1727
      %1813 = vmatpush.msra.mxu0 %v1723
      %1814 = vmatpush.msra.mxu0 %v1719
      %1815 = vmatpush.msra.mxu0 %v1715
      %1816 = vmatpush.msra.mxu0 %v1711
      %1817 = vmatpush.msra.mxu0 %v1707
      %1818 = vmatmul.f32.gmra.mxu0 %v1780
      %v1819 = vpop.f32.mrf.mxu0
      %v1820 = vadd.f32 %v1613, %v1819
      %1821 = vdwg.mxu0
      %1822 = vmatpush.msra.mxu0 0.0
      %1823 = vmatpush.msra.mxu0 0.0
      %1824 = vmatpush.msra.mxu0 0.0
      %1825 = vmatpush.msra.mxu0 0.0
      %1826 = vmatpush.msra.mxu0 0.0
      %1827 = vmatpush.msra.mxu0 0.0
      %1828 = vmatpush.msra.mxu0 0.0
      %1829 = vmatpush.msra.mxu0 %v1740
      %1830 = vmatpush.msra.mxu0 %v1736
      %1831 = vmatpush.msra.mxu0 %v1732
      %1832 = vmatpush.msra.mxu0 %v1728
      %1833 = vmatpush.msra.mxu0 %v1724
      %1834 = vmatpush.msra.mxu0 %v1720
      %1835 = vmatpush.msra.mxu0 %v1716
      %1836 = vmatpush.msra.mxu0 %v1712
      %1837 = vmatpush.msra.mxu0 %v1708
      %1838 = vmatmul.f32.gmra.mxu0 %v1780
      %v1839 = vpop.f32.mrf.mxu0
      %v1840 = vadd.f32 %v1613, %v1839
      %1841 = vdwg.mxu0
      %1842 = vmatpush.msra.mxu0 0.0
      %1843 = vmatpush.msra.mxu0 0.0
      %1844 = vmatpush.msra.mxu0 0.0
      %1845 = vmatpush.msra.mxu0 0.0
      %1846 = vmatpush.msra.mxu0 0.0
      %1847 = vmatpush.msra.mxu0 0.0
      %1848 = vmatpush.msra.mxu0 0.0
      %1849 = vmatpush.msra.mxu0 %v1741
      %1850 = vmatpush.msra.mxu0 %v1737
      %1851 = vmatpush.msra.mxu0 %v1733
      %1852 = vmatpush.msra.mxu0 %v1729
      %1853 = vmatpush.msra.mxu0 %v1725
      %1854 = vmatpush.msra.mxu0 %v1721
      %1855 = vmatpush.msra.mxu0 %v1717
      %1856 = vmatpush.msra.mxu0 %v1713
      %1857 = vmatpush.msra.mxu0 %v1709
      %1858 = vmatmul.f32.gmra.mxu0 %v1780
      %v1859 = vpop.f32.mrf.mxu0
      %v1860 = vadd.f32 %v1613, %v1859
      %1861 = vdwg.mxu0
      %v1862 = vmax.f32 %v1800, 0.0
      %v1863 = vmax.f32 %v1820, 0.0
      %v1864 = vmax.f32 %v1840, 0.0
      %v1865 = vmax.f32 %v1860, 0.0
      %v1866 = vmul.f32 %v565, %v566
      %v1868 = vperm.slane %v1866, 0
      %v1869 = vperm.slane %v1866, 1
      %v1870 = vperm.slane %v1866, 2
      %v1871 = vperm.slane %v1866, 3
      %v1876 = vmul.f32 %v1862, %v1868
      %v1877 = vmul.f32 %v1863, %v1869
      %v1878 = vmul.f32 %v1864, %v1870
      %v1879 = vmul.f32 %v1865, %v1871
      %1883 = vrot.lane.b32.xlu0 %v1876, 126
      %v1884 = vpop.permute.xlu0 %1883
      %1885 = vrot.lane.b32.xlu0 %v1877, 126
      %v1886 = vpop.permute.xlu0 %1885
      %1887 = vrot.lane.b32.xlu0 %v1878, 126
      %v1888 = vpop.permute.xlu0 %1887
      %v1889 = vsel %vm447, %v1884, %v1886
      %v1890 = vsel %vm447, %v1886, %v1888
      %1891 = vrot.lane.b32.xlu0 %v1876, 124
      %v1892 = vpop.permute.xlu0 %1891
      %1893 = vrot.lane.b32.xlu0 %v1877, 124
      %v1894 = vpop.permute.xlu0 %1893
      %1895 = vrot.lane.b32.xlu0 %v1878, 124
      %v1896 = vpop.permute.xlu0 %1895
      %v1897 = vsel %vm631, %v1892, %v1894
      %v1898 = vsel %vm631, %v1894, %v1896
      %1900 = vrot.lane.b32.xlu0 %v1876, 84
      %v1901 = vpop.permute.xlu0 %1900
      %1902 = vrot.lane.b32.xlu0 %v1877, 84
      %v1903 = vpop.permute.xlu0 %1902
      %1904 = vrot.lane.b32.xlu0 %v1878, 84
      %v1905 = vpop.permute.xlu0 %1904
      %1906 = vrot.lane.b32.xlu0 %v1879, 84
      %v1907 = vpop.permute.xlu0 %1906
      %v1908 = vsel %vm922, %v1901, %v1903
      %v1909 = vsel %vm922, %v1903, %v1905
      %v1910 = vsel %vm922, %v1905, %v1907
      %1911 = vrot.lane.b32.xlu0 %v1876, 82
      %v1912 = vpop.permute.xlu0 %1911
      %1913 = vrot.lane.b32.xlu0 %v1877, 82
      %v1914 = vpop.permute.xlu0 %1913
      %1915 = vrot.lane.b32.xlu0 %v1878, 82
      %v1916 = vpop.permute.xlu0 %1915
      %1917 = vrot.lane.b32.xlu0 %v1879, 82
      %v1918 = vpop.permute.xlu0 %1917
      %v1919 = vsel %vm1603, %v1912, %v1914
      %v1920 = vsel %vm1603, %v1914, %v1916
      %v1921 = vsel %vm1603, %v1916, %v1918
      %1922 = vrot.lane.b32.xlu0 %v1876, 80
      %v1923 = vpop.permute.xlu0 %1922
      %1924 = vrot.lane.b32.xlu0 %v1877, 80
      %v1925 = vpop.permute.xlu0 %1924
      %1926 = vrot.lane.b32.xlu0 %v1878, 80
      %v1927 = vpop.permute.xlu0 %1926
      %1928 = vrot.lane.b32.xlu0 %v1879, 80
      %v1929 = vpop.permute.xlu0 %1928
      %vm1930 = vcmask 654336
      %v1931 = vsel %vm1930, %v1923, %v1925
      %v1932 = vsel %vm1930, %v1925, %v1927
      %v1933 = vsel %vm1930, %v1927, %v1929
      %1934 = vrot.lane.b32.xlu0 %v1876, 40
      %v1935 = vpop.permute.xlu0 %1934
      %1936 = vrot.lane.b32.xlu0 %v1877, 40
      %v1937 = vpop.permute.xlu0 %1936
      %1938 = vrot.lane.b32.xlu0 %v1878, 40
      %v1939 = vpop.permute.xlu0 %1938
      %1940 = vrot.lane.b32.xlu0 %v1879, 40
      %v1941 = vpop.permute.xlu0 %1940
      %v1942 = vsel %vm946, %v1935, %v1937
      %v1943 = vsel %vm946, %v1937, %v1939
      %v1944 = vsel %vm946, %v1939, %v1941
      %1945 = vrot.lane.b32.xlu0 %v1876, 38
      %v1946 = vpop.permute.xlu0 %1945
      %1947 = vrot.lane.b32.xlu0 %v1877, 38
      %v1948 = vpop.permute.xlu0 %1947
      %1949 = vrot.lane.b32.xlu0 %v1878, 38
      %v1950 = vpop.permute.xlu0 %1949
      %1951 = vrot.lane.b32.xlu0 %v1879, 38
      %v1952 = vpop.permute.xlu0 %1951
      %vm1953 = vcmask 310272
      %v1954 = vsel %vm1953, %v1946, %v1948
      %v1955 = vsel %vm1953, %v1948, %v1950
      %v1956 = vsel %vm1953, %v1950, %v1952
      %1957 = vrot.lane.b32.xlu0 %v1876, 36
      %v1958 = vpop.permute.xlu0 %1957
      %1959 = vrot.lane.b32.xlu0 %v1877, 36
      %v1960 = vpop.permute.xlu0 %1959
      %1961 = vrot.lane.b32.xlu0 %v1878, 36
      %v1962 = vpop.permute.xlu0 %1961
      %1963 = vrot.lane.b32.xlu0 %v1879, 36
      %v1964 = vpop.permute.xlu0 %1963
      %vm1965 = vcmask 293888
      %v1966 = vsel %vm1965, %v1958, %v1960
      %v1967 = vsel %vm1965, %v1960, %v1962
      %v1968 = vsel %vm1965, %v1962, %v1964
      %v1969 = vld [vmem:[%s11] sm:$0x1]
      %1970 = vrot.lane.b32.xlu0 %v1876, 105
      %v1971 = vpop.permute.xlu0 %1970
      %1972 = vrot.lane.b32.xlu0 %v1877, 105
      %v1973 = vpop.permute.xlu0 %1972
      %1974 = vrot.lane.b32.xlu0 %v1878, 105
      %v1975 = vpop.permute.xlu0 %1974
      %1976 = vrot.lane.b32.xlu0 %v1889, 105
      %v1977 = vpop.permute.xlu0 %1976
      %1978 = vrot.lane.b32.xlu0 %v1890, 105
      %v1979 = vpop.permute.xlu0 %1978
      %1980 = vrot.lane.b32.xlu0 %v1888, 105
      %v1981 = vpop.permute.xlu0 %1980
      %1982 = vrot.lane.b32.xlu0 %v1897, 105
      %v1983 = vpop.permute.xlu0 %1982
      %1984 = vrot.lane.b32.xlu0 %v1898, 105
      %v1985 = vpop.permute.xlu0 %1984
      %1986 = vrot.lane.b32.xlu0 %v1896, 105
      %v1987 = vpop.permute.xlu0 %1986
      %1988 = vrot.lane.b32.xlu0 %v1908, 105
      %v1989 = vpop.permute.xlu0 %1988
      %1990 = vrot.lane.b32.xlu0 %v1909, 105
      %v1991 = vpop.permute.xlu0 %1990
      %1992 = vrot.lane.b32.xlu0 %v1910, 105
      %v1993 = vpop.permute.xlu0 %1992
      %1994 = vrot.lane.b32.xlu0 %v1919, 105
      %v1995 = vpop.permute.xlu0 %1994
      %1996 = vrot.lane.b32.xlu0 %v1920, 105
      %v1997 = vpop.permute.xlu0 %1996
      %1998 = vrot.lane.b32.xlu0 %v1921, 105
      %v1999 = vpop.permute.xlu0 %1998
      %2000 = vrot.lane.b32.xlu0 %v1931, 105
      %v2001 = vpop.permute.xlu0 %2000
      %2002 = vrot.lane.b32.xlu0 %v1932, 105
      %v2003 = vpop.permute.xlu0 %2002
      %2004 = vrot.lane.b32.xlu0 %v1933, 105
      %v2005 = vpop.permute.xlu0 %2004
      %2006 = vrot.lane.b32.xlu0 %v1942, 105
      %v2007 = vpop.permute.xlu0 %2006
      %2008 = vrot.lane.b32.xlu0 %v1943, 105
      %v2009 = vpop.permute.xlu0 %2008
      %2010 = vrot.lane.b32.xlu0 %v1944, 105
      %v2011 = vpop.permute.xlu0 %2010
      %2012 = vrot.lane.b32.xlu0 %v1954, 105
      %v2013 = vpop.permute.xlu0 %2012
      %2014 = vrot.lane.b32.xlu0 %v1955, 105
      %v2015 = vpop.permute.xlu0 %2014
      %2016 = vrot.lane.b32.xlu0 %v1956, 105
      %v2017 = vpop.permute.xlu0 %2016
      %2018 = vrot.lane.b32.xlu0 %v1966, 105
      %v2019 = vpop.permute.xlu0 %2018
      %2020 = vrot.lane.b32.xlu0 %v1967, 105
      %v2021 = vpop.permute.xlu0 %2020
      %2022 = vrot.lane.b32.xlu0 %v1968, 105
      %v2023 = vpop.permute.xlu0 %2022
      %v2024 = vsel %vm1558, %v1971, %v1973
      %v2025 = vsel %vm1558, %v1973, %v1975
      %v2026 = vsel %vm1558, %v1977, %v1979
      %v2027 = vsel %vm1558, %v1979, %v1981
      %v2028 = vsel %vm1558, %v1983, %v1985
      %v2029 = vsel %vm1558, %v1985, %v1987
      %v2030 = vsel %vm1558, %v1989, %v1991
      %v2031 = vsel %vm1558, %v1991, %v1993
      %v2032 = vsel %vm1558, %v1995, %v1997
      %v2033 = vsel %vm1558, %v1997, %v1999
      %v2034 = vsel %vm1558, %v2001, %v2003
      %v2035 = vsel %vm1558, %v2003, %v2005
      %v2036 = vsel %vm1558, %v2007, %v2009
      %v2037 = vsel %vm1558, %v2009, %v2011
      %v2038 = vsel %vm1558, %v2013, %v2015
      %v2039 = vsel %vm1558, %v2015, %v2017
      %v2040 = vsel %vm1558, %v2019, %v2021
      %v2041 = vsel %vm1558, %v2021, %v2023
      %v2070 = vsel %vm1778, %v1969, 0
      %2072 = vmatpush.msra.mxu0 0.0
      %2073 = vmatpush.msra.mxu0 0.0
      %2074 = vmatpush.msra.mxu0 0.0
      %2075 = vmatpush.msra.mxu0 0.0
      %2076 = vmatpush.msra.mxu0 0.0
      %2077 = vmatpush.msra.mxu0 0.0
      %2078 = vmatpush.msra.mxu0 0.0
      %2079 = vmatpush.msra.mxu0 %v2040
      %2080 = vmatpush.msra.mxu0 %v2038
      %2081 = vmatpush.msra.mxu0 %v2036
      %2082 = vmatpush.msra.mxu0 %v2034
      %2083 = vmatpush.msra.mxu0 %v2032
      %2084 = vmatpush.msra.mxu0 %v2030
      %2085 = vmatpush.msra.mxu0 %v2028
      %2086 = vmatpush.msra.mxu0 %v2026
      %2087 = vmatpush.msra.mxu0 %v2024
      %2088 = vmatmul.f32.gmra.mxu0 %v2070
      %v2089 = vpop.f32.mrf.mxu0
      %v2090 = vadd.f32 0.0, %v2089
      %2091 = vdwg.mxu0
      %2092 = vmatpush.msra.mxu0 0.0
      %2093 = vmatpush.msra.mxu0 0.0
      %2094 = vmatpush.msra.mxu0 0.0
      %2095 = vmatpush.msra.mxu0 0.0
      %2096 = vmatpush.msra.mxu0 0.0
      %2097 = vmatpush.msra.mxu0 0.0
      %2098 = vmatpush.msra.mxu0 0.0
      %2099 = vmatpush.msra.mxu0 %v2041
      %2100 = vmatpush.msra.mxu0 %v2039
      %2101 = vmatpush.msra.mxu0 %v2037
      %2102 = vmatpush.msra.mxu0 %v2035
      %2103 = vmatpush.msra.mxu0 %v2033
      %2104 = vmatpush.msra.mxu0 %v2031
      %2105 = vmatpush.msra.mxu0 %v2029
      %2106 = vmatpush.msra.mxu0 %v2027
      %2107 = vmatpush.msra.mxu0 %v2025
      %2108 = vmatmul.f32.gmra.mxu0 %v2070
      %v2109 = vpop.f32.mrf.mxu0
      %v2110 = vadd.f32 0.0, %v2109
      %2111 = vdwg.mxu0
      %2112 = vmatpush.msra.mxu0 0.0
      %2113 = vmatpush.msra.mxu0 0.0
      %2114 = vmatpush.msra.mxu0 0.0
      %2115 = vmatpush.msra.mxu0 0.0
      %2116 = vmatpush.msra.mxu0 0.0
      %2117 = vmatpush.msra.mxu0 0.0
      %2118 = vmatpush.msra.mxu0 0.0
      %2119 = vmatpush.msra.mxu0 %v2023
      %2120 = vmatpush.msra.mxu0 %v2017
      %2121 = vmatpush.msra.mxu0 %v2011
      %2122 = vmatpush.msra.mxu0 %v2005
      %2123 = vmatpush.msra.mxu0 %v1999
      %2124 = vmatpush.msra.mxu0 %v1993
      %2125 = vmatpush.msra.mxu0 %v1987
      %2126 = vmatpush.msra.mxu0 %v1981
      %2127 = vmatpush.msra.mxu0 %v1975
      %2128 = vmatmul.f32.gmra.mxu0 %v2070
      %v2129 = vpop.f32.mrf.mxu0
      %v2130 = vadd.f32 0.0, %v2129
      %2131 = vdwg.mxu0
      %v2132 = vadd.f32 %v1506, %v2090
      %v2133 = vadd.f32 %v1526, %v2110
      %v2134 = vadd.f32 %v1546, %v2130
      %v2135 = vld [vmem:[#allocation3] sm:$0x1]
      %2137 = vset.pattern.permute.xlu0 0
      %2138 = vperm.xlu0 %2137, %v2135
      %v2139 = vpop.permute.xlu0 %2138
      %v2141 = vperm.slane %v2139, 0
      %v2142 = vadd.f32 %v2132, %v2141
      %v2143 = vadd.f32 %v2133, %v2141
      %v2144 = vadd.f32 %v2134, %v2141
      %v2145 = vxor.u32 %v2142, 2147483648
      %v2146 = vxor.u32 %v2143, 2147483648
      %v2147 = vxor.u32 %v2144, 2147483648
      %v2148 = vmul.f32 %v2145, 1.442695
      %v2149 = vpow.pop %v2148
      %v2150 = vmul.f32 %v2146, 1.442695
      %v2151 = vpow.pop %v2150
      %v2152 = vmul.f32 %v2147, 1.442695
      %v2153 = vpow.pop %v2152
      %v2154 = vadd.f32 %v2149, 1.0
      %v2155 = vadd.f32 %v2151, 1.0
      %v2156 = vadd.f32 %v2153, 1.0
      %v2157 = vrcp.pop %v2154
      %v2158 = vmul.f32 %v2154, %v2157
      %v2159 = vsub.f32 1.0, %v2158
      %v2160 = vmul.f32 %v2157, %v2159
      %v2161 = vadd.f32 %v2157, %v2160
      %vm2162 = vweird.f32 %v2154
      %vm2163 = vweird.f32 %v2157
      %vm2164 = vmor %vm2162, %vm2163
      %v2165 = vsel %vm2164, %v2157, %v2161
      %v2166 = vand.u32 2147483647, %v2154
      %vm2167 = vcmp.eq.f32.partialorder %v2166, 8.507059e+37
      %v2168 = vand.u32 %v2154, 2147483648
      %v2169 = vor.u32 1.1754944e-38, %v2168
      %v2170 = vsel %vm2167, %v2169, %v2165
      %v2171 = vmul.f32 1.0, %v2170
      %v2172 = vrcp.pop %v2155
      %v2173 = vmul.f32 %v2155, %v2172
      %v2174 = vsub.f32 1.0, %v2173
      %v2175 = vmul.f32 %v2172, %v2174
      %v2176 = vadd.f32 %v2172, %v2175
      %vm2177 = vweird.f32 %v2155
      %vm2178 = vweird.f32 %v2172
      %vm2179 = vmor %vm2177, %vm2178
      %v2180 = vsel %vm2179, %v2172, %v2176
      %v2181 = vand.u32 2147483647, %v2155
      %vm2182 = vcmp.eq.f32.partialorder %v2181, 8.507059e+37
      %v2183 = vand.u32 %v2155, 2147483648
      %v2184 = vor.u32 1.1754944e-38, %v2183
      %v2185 = vsel %vm2182, %v2184, %v2180
      %v2186 = vmul.f32 1.0, %v2185
      %v2187 = vrcp.pop %v2156
      %v2188 = vmul.f32 %v2156, %v2187
      %v2189 = vsub.f32 1.0, %v2188
      %v2190 = vmul.f32 %v2187, %v2189
      %v2191 = vadd.f32 %v2187, %v2190
      %vm2192 = vweird.f32 %v2156
      %vm2193 = vweird.f32 %v2187
      %vm2194 = vmor %vm2192, %vm2193
      %v2195 = vsel %vm2194, %v2187, %v2191
      %v2196 = vand.u32 2147483647, %v2156
      %vm2197 = vcmp.eq.f32.partialorder %v2196, 8.507059e+37
      %v2198 = vand.u32 %v2156, 2147483648
      %v2199 = vor.u32 1.1754944e-38, %v2198
      %v2200 = vsel %vm2197, %v2199, %v2195
      %v2201 = vmul.f32 1.0, %v2200
      %v2202 = vld [vmem:[%s437] sm:$0xff]
      %v2203 = vperm.slane %v2171, 0
      %v2204 = vmul.f32 %v2202, %v2203
      %vm2205 = vcmask 130048
      %2206 = vst.msk [vmem:[%s442] sm:$0xff] %vm2205, %v2204
      %v2207 = vld [vmem:[%s437] sm:$0xff]
      %2209 = vrot.lane.b32.xlu0 %v2203, 122
      %v2210 = vpop.permute.xlu0 %2209
      %v2212 = vmul.f32 %v2207, %v2210
      %vm2213 = vcmask 261248
      %2214 = vst.msk [vmem:[%s442] sm:$0xff] %vm2213, %v2212
      %v2215 = vld [vmem:[%s437] sm:$0xff]
      %2216 = vrot.lane.b32.xlu0 %v2203, 116
      %v2217 = vpop.permute.xlu0 %2216
      %v2219 = vmul.f32 %v2215, %v2217
      %vm2220 = vcmask 392448
      %2221 = vst.msk [vmem:[%s442] sm:$0xff] %vm2220, %v2219
      %v2222 = vld [vmem:[%s437] sm:$0xff]
      %2223 = vrot.lane.b32.xlu0 %v2203, 110
      %v2224 = vpop.permute.xlu0 %2223
      %v2226 = vmul.f32 %v2222, %v2224
      %vm2227 = vcmask 523648
      %2228 = vst.msk [vmem:[%s442] sm:$0xff] %vm2227, %v2226
      %v2229 = vld [vmem:[%s437] sm:$0xff]
      %2230 = vrot.lane.b32.xlu0 %v2203, 104
      %v2231 = vpop.permute.xlu0 %2230
      %v2233 = vmul.f32 %v2229, %v2231
      %vm2234 = vcmask 654848
      %2235 = vst.msk [vmem:[%s442] sm:$0xff] %vm2234, %v2233
      %v2236 = vld [vmem:[%s437] sm:$0xff]
      %2237 = vrot.lane.b32.xlu0 %v2203, 98
      %v2238 = vpop.permute.xlu0 %2237
      %v2240 = vmul.f32 %v2236, %v2238
      %vm2241 = vcmask 786048
      %2242 = vst.msk [vmem:[%s442] sm:$0xff] %vm2241, %v2240
      %v2243 = vld [vmem:[%s437] sm:$0xff]
      %v2244 = vperm.slane %v2186, 0
      %2246 = vrot.lane.b32.xlu0 %v2244, 92
      %v2247 = vpop.permute.xlu0 %2246
      %v2249 = vmul.f32 %v2243, %v2247
      %vm2250 = vcmask 917248
      %2251 = vst.msk [vmem:[%s442] sm:$0xff] %vm2250, %v2249
      %v2252 = vld [vmem:[%s437] sm:$0xff]
      %2253 = vrot.lane.b32.xlu0 %v2244, 86
      %v2254 = vpop.permute.xlu0 %2253
      %v2256 = vmul.f32 %v2252, %v2254
      %vm2257 = vcmask 1048448
      %2258 = vst.msk [vmem:[%s442] sm:$0xff] %vm2257, %v2256
      %v2259 = vld [vmem:[%s437 + $0x8] sm:$0xff]
      %2260 = vrot.lane.b32.xlu0 %v2244, 80
      %v2261 = vpop.permute.xlu0 %2260
      %v2263 = vmul.f32 %v2259, %v2261
      %2264 = vst.msk [vmem:[%s442 + $0x8] sm:$0xff] %vm2205, %v2263
      %v2265 = vld [vmem:[%s437 + $0x8] sm:$0xff]
      %2266 = vrot.lane.b32.xlu0 %v2244, 74
      %v2267 = vpop.permute.xlu0 %2266
      %v2269 = vmul.f32 %v2265, %v2267
      %2270 = vst.msk [vmem:[%s442 + $0x8] sm:$0xff] %vm2213, %v2269
      %v2271 = vld [vmem:[%s437 + $0x8] sm:$0xff]
      %2272 = vrot.lane.b32.xlu0 %v2244, 68
      %v2273 = vpop.permute.xlu0 %2272
      %v2275 = vmul.f32 %v2271, %v2273
      %2276 = vst.msk [vmem:[%s442 + $0x8] sm:$0xff] %vm2220, %v2275
      %v2277 = vld [vmem:[%s437 + $0x8] sm:$0xff]
      %v2278 = vperm.slane %v2201, 0
      %2280 = vrot.lane.b32.xlu0 %v2244, 62
      %v2281 = vpop.permute.xlu0 %2280
      %2282 = vrot.lane.b32.xlu0 %v2278, 62
      %v2283 = vpop.permute.xlu0 %2282
      %v2284 = vsel %vm934, %v2281, %v2283
      %v2286 = vmul.f32 %v2277, %v2284
      %2287 = vst.msk [vmem:[%s442 + $0x8] sm:$0xff] %vm2227, %v2286
      %v2288 = vld [vmem:[%s437 + $0x8] sm:$0xff]
      %2289 = vrot.lane.b32.xlu0 %v2278, 56
      %v2290 = vpop.permute.xlu0 %2289
      %v2292 = vmul.f32 %v2288, %v2290
      %2293 = vst.msk [vmem:[%s442 + $0x8] sm:$0xff] %vm2234, %v2292
      %v2294 = vld [vmem:[%s437 + $0x8] sm:$0xff]
      %2295 = vrot.lane.b32.xlu0 %v2278, 50
      %v2296 = vpop.permute.xlu0 %2295
      %v2298 = vmul.f32 %v2294, %v2296
      %2299 = vst.msk [vmem:[%s442 + $0x8] sm:$0xff] %vm2241, %v2298
      %v2300 = vld [vmem:[%s437 + $0x8] sm:$0xff]
      %2301 = vrot.lane.b32.xlu0 %v2278, 44
      %v2302 = vpop.permute.xlu0 %2301
      %v2304 = vmul.f32 %v2300, %v2302
      %2305 = vst.msk [vmem:[%s442 + $0x8] sm:$0xff] %vm2250, %v2304
      %v2306 = vld [vmem:[%s437 + $0x8] sm:$0xff]
      %2307 = vrot.lane.b32.xlu0 %v2278, 38
      %v2308 = vpop.permute.xlu0 %2307
      %v2310 = vmul.f32 %v2306, %v2308
      %2311 = vst.msk [vmem:[%s442 + $0x8] sm:$0xff] %vm2257, %v2310
      %p2312 = scmp.lt.s32.totalorder %s26, 1
      %s2313 = scalar_select %p2312, %s26, 1
      %s2314 = smul.addr %s2313, 2
      %s2315 = smul.addr %s2314, 8
      %s2316 = scalar_lea.vmem %s13, %s2315
      // Predicated region
      $region73: #{sa_layer.1} parent=71 // pred_check
        %p2317 = pneg %p322
      $region74: #{sa_layer.1} parent=71 // pred_check_branch
        %2319 = sbr.rel (%p2317) target = $region76
      $region75: #{sa_layer.1} parent=71 // pred_region
        _
      $region76: #{sa_layer.1} parent=71 // pred_fallthru
        _
    $region72: #{sa_layer.1} parent=5 // pred_fallthru
      _
    %p2320 = scmp.le.s32.totalorder 2, %s21
    // Predicated region
    $region77: #{sa_layer.1} parent=5 // pred_check
      %p2321 = pneg %p2320
    $region78: #{sa_layer.1} parent=5 // pred_check_branch
      %2323 = sbr.rel (%p2321) target = $region80
    $region79: #{sa_layer.1} parent=5 // pred_region
      %s2324 = ssub.s32 %s21, 2
      // Predicated region
      $region81: #{sa_layer.1} parent=79 // pred_check
        %p2325 = pneg %p328
      $region82: #{sa_layer.1} parent=79 // pred_check_branch
        %2327 = sbr.rel (%p2325) target = $region84
      $region83: #{sa_layer.1} parent=79 // pred_region
        %p2328 = scmp.lt.s32.totalorder %s27, 1
        %s2329 = scalar_select %p2328, %s27, 1
        %s2330 = smul.addr %s2329, 2
        %s2331 = smul.addr %s2330, 8
        %s2332 = scalar_lea.vmem %s13, %s2331
      $region84: #{sa_layer.1} parent=79 // pred_fallthru
        _
    $region80: #{sa_layer.1} parent=5 // pred_fallthru
      _
  $region6: #{sa_layer.1} parent=0 // loop_footer
    %s25 = sadd.s32 1, %s21
  $region7: #{sa_layer.1} parent=0 // loop_footer_branch
    %20 = sbr.rel target = $region3
  $region8: #{sa_layer.1} parent=0 // loop_exit
    _

</llo_original>
